<compile_context>
chip_gen: v5e
topology: v5e:2x2
jax: 0.10.0
libtpu: 0.0.40
codegen_flags: <defaults>
</compile_context>

<pallas_src>
import functools

import jax
import jax.numpy as jnp
from jax.experimental import pallas as pl
from jax.experimental.pallas import tpu as pltpu


# ----------------------------- Pallas kernel -------------------------------
def _alphanet_kernel(rr_ref,                 # (1, BLp, C) f32: batch tile, channels-last,
                                             #   each sample = [0,0, x_0..x_{L-1}, 0,0]
                     wconv_ref,              # (2, 5C, C) bf16: fused conv1/conv2 weights
                     wsq_ref,                # (2, C, C)  bf16: [wa1, wb1]
                     gP_ref,                 # (C, C) f32: group-average matrix (incl 1/(L*pg))
                     rows_ref,               # (9, C) f32: b1,gn_w,gn_b,b2,ba1,wa2,bb1,wb2,
                                             #             [ba2, bb2, 0...]
                     alpha_ref,              # (1, 1, BLp) f32 out (lane-dense)
                     beta_ref,               # (1, 1, B)   f32 out
                     *, L, B):
    eps = 1e-5
    x = rr_ref[0]                            # (BLp, C) f32
    BLp, C = x.shape
    Lp = BLp // B                            # L + 4 (padded per-sample length)
    inv_L = 1.0 / L

    rowsv = rows_ref[...]                    # (9, C)
    gP = gP_ref[...]                         # (C, C)
    b1, gn_w, gn_b, b2 = rowsv[0], rowsv[1], rowsv[2], rowsv[3]
    ba1, wa2, bb1, wb2 = rowsv[4], rowsv[5], rowsv[6], rowsv[7]
    ba2 = rowsv[8:9, 0:1]                    # (1, 1) scalar-ish
    bb2 = rowsv[8:9, 1:2]                    # (1, 1)

    # Sample-selection one-hots from iota (no DMA): seg picks only the L real rows of each
    # sample, so every statistic / pooling ignores the per-sample pad rows.
    r_bl = jax.lax.broadcasted_iota(jnp.int32, (B, BLp), 1)
    b_bl = jax.lax.broadcasted_iota(jnp.int32, (B, BLp), 0)
    lo = b_bl * Lp + 2
    seg = jnp.logical_and(r_bl >= lo, r_bl < lo + L).astype(jnp.float32)      # (B, BLp)
    r_lb = jax.lax.broadcasted_iota(jnp.int32, (BLp, B), 0)
    b_lb = jax.lax.broadcasted_iota(jnp.int32, (BLp, B), 1)
    loT = b_lb * Lp + 2
    segT = jnp.logical_and(r_lb >= loT, r_lb < loT + L).astype(jnp.float32)   # (BLp, B)

    def shift_rows(h, d):
        # out[r] = h[r + d].  Wrapped rows only ever land on per-sample pad rows, which are
        # never consumed downstream.  Pure sublane slice+concat (XLU/VPU) -- no MXU, no masks.
        return jnp.concatenate([h[d:], h[:d]], axis=0)

    def conv5(h, w_bf):
        # fused 5-tap conv: lane-concat the shifted slabs -> one (BLp,5C)@(5C,C) bf16 matmul.
        win = jnp.concatenate([shift_rows(h, -2), shift_rows(h, -1), h,
                               shift_rows(h, 1), shift_rows(h, 2)], axis=1)   # (BLp, 5C)
        return jnp.dot(win.astype(jnp.bfloat16), w_bf,
                       preferred_element_type=jnp.float32)                    # (BLp, C) f32

    # ---- conv1 -> GroupNorm(5, C) -> ReLU ----
    h1 = conv5(x, wconv_ref[0]) + b1                                          # (BLp, C)
    stats = jnp.dot(seg, jnp.concatenate([h1, h1 * h1], axis=1),
                    preferred_element_type=jnp.float32)                       # (B, 2C)
    mean_c = jnp.dot(stats[:, :C], gP, preferred_element_type=jnp.float32)    # group mean
    ex2_c = jnp.dot(stats[:, C:], gP, preferred_element_type=jnp.float32)     # group E[x^2]
    var_c = ex2_c - mean_c * mean_c
    scale_c = jax.lax.rsqrt(var_c + eps) * gn_w                               # (B, C)
    bias_c = gn_b - mean_c * scale_c                                          # (B, C)
    sb = jnp.dot(segT, jnp.concatenate([scale_c, bias_c], axis=1),
                 preferred_element_type=jnp.float32)                          # (BLp, 2C)
    # pad rows get scale=bias=0 -> hr is exactly 0 there (== conv2's "same" zero padding).
    hr = jnp.maximum(h1 * sb[:, :C] + sb[:, C:], 0.0)                         # (BLp, C)

    # ---- conv2 + residual (with RR) ----
    raw_ab = conv5(hr, wconv_ref[1]) + b2 + x                                 # (BLp, C)

    # ---- beta head: per-sample avg pool over L -> Linear -> ReLU -> <., wb2> ----
    pooled = jnp.dot(seg, raw_ab, preferred_element_type=jnp.float32) * inv_L   # (B, C)
    bh = jnp.maximum(jnp.dot(pooled.astype(jnp.bfloat16), wsq_ref[1],
                             preferred_element_type=jnp.float32) + bb1, 0.0)    # (B, C)
    beta = jax.lax.dot_general(wb2[None, :], bh, (((1,), (1,)), ((), ())),
                               preferred_element_type=jnp.float32) + bb2        # (1, B)
    beta_ref[0] = beta

    # ---- alpha head: per-position Linear -> ReLU -> <., wa2>, then renormalize ----
    ah = jnp.maximum(jnp.dot(raw_ab.astype(jnp.bfloat16), wsq_ref[0],
                             preferred_element_type=jnp.float32) + ba1, 0.0)    # (BLp, C)
    rs = jax.lax.dot_general(wa2[None, :], ah, (((1,), (1,)), ((), ())),
                             preferred_element_type=jnp.float32)                # (1, BLp)
    raw_alpha = rs + ba2                                                        # lane-major
    s_b = jnp.dot(raw_alpha, segT, preferred_element_type=jnp.float32)          # (1, B)
    corr = (1.0 - s_b) * inv_L                                                  # (1, B)
    alpha_ref[0] = raw_alpha + jnp.dot(corr, seg, preferred_element_type=jnp.float32)


# ------------------------------ Wrapper ------------------------------------
@functools.partial(jax.jit, static_argnames=("n", "b_tile"))
def alphanet_forward(RR, params, n, b_tile=16):
    """AlphaNet.forward (training mode) for alpha_model='alpha_tcn', learn_beta=True.

    RR: (bsz, n, ninner) float32.  Returns (alpha (bsz, n), beta (bsz, 1)).
    """
    bsz, L, C = RR.shape
    assert L == n

    B_TILE = min(b_tile, bsz)
    pad = (-bsz) % B_TILE
    bsz_p = bsz + pad
    nblk = bsz_p // B_TILE
    Lp = L + 4                                   # 2 zero rows each side per sample
    BLp = B_TILE * Lp

    RRf = RR.astype(jnp.float32)
    if pad:
        RRf = jnp.concatenate([RRf, jnp.zeros((pad, L, C), jnp.float32)], axis=0)
    # Per-sample zero padding folds the conv "same" padding AND cross-sample isolation into
    # the flattened layout -> no boundary masks / shift matrices in-kernel.
    RRp = jnp.pad(RRf, ((0, 0), (2, 2), (0, 0))).reshape(nblk, BLp, C)

    gmat = params["gmat"]                        # (C, G) channel->group one-hot
    pg = C // gmat.shape[1]
    gP = (gmat @ gmat.T) / float(L * pg)         # (C, C) group-average matrix

    # Fused / packed constants (bf16 for the MXU operands, f32 accumulation in-kernel).
    wconv = jnp.stack([params["w1"].reshape(5 * C, C),
                       params["w2"].reshape(5 * C, C)]).astype(jnp.bfloat16)   # (2, 5C, C)
    wsq = jnp.stack([params["wa1"], params["wb1"]]).astype(jnp.bfloat16)       # (2, C, C)
    scal_row = jnp.zeros((1, C), jnp.float32)
    scal_row = scal_row.at[0, 0].set(params["ba2"][0, 0])
    scal_row = scal_row.at[0, 1].set(params["bb2"][0, 0])
    rows = jnp.concatenate([params["b1"], params["gn_w"], params["gn_b"], params["b2"],
                            params["ba1"], params["wa2"], params["bb1"], params["wb2"],
                            scal_row], axis=0).astype(jnp.float32)             # (9, C)

    # Advisory cost hint for XLA's scheduler.
    conv_flops = 2 * BLp * (5 * C) * C
    head_flops = 2 * BLp * C * C
    stat_flops = 2 * B_TILE * BLp * 2 * C + 2 * BLp * B_TILE * 2 * C
    cost = pl.CostEstimate(
        flops=int(nblk * (2 * conv_flops + head_flops + stat_flops
                          + 4 * 2 * B_TILE * C * C)),
        transcendentals=int(nblk * B_TILE * C),
        bytes_accessed=int(RRp.size * 4 + bsz_p * (L + 1) * 4
                           + wconv.size * 2 + wsq.size * 2 + gP.size * 4 + rows.size * 4),
    )

    alpha_p, beta_p = pl.pallas_call(
        functools.partial(_alphanet_kernel, L=L, B=B_TILE),
        out_shape=(
            jax.ShapeDtypeStruct((nblk, 1, BLp), jnp.float32),      # lane-dense alpha
            jax.ShapeDtypeStruct((nblk, 1, B_TILE), jnp.float32),   # beta
        ),
        grid_spec=pltpu.PrefetchScalarGridSpec(
            num_scalar_prefetch=0,
            grid=(nblk,),
            in_specs=[
                pl.BlockSpec((1, BLp, C), lambda b: (b, 0, 0)),
                pl.BlockSpec((2, 5 * C, C), lambda b: (0, 0, 0)),
                pl.BlockSpec((2, C, C), lambda b: (0, 0, 0)),
                pl.BlockSpec((C, C), lambda b: (0, 0)),
                pl.BlockSpec((9, C), lambda b: (0, 0)),
            ],
            out_specs=[
                pl.BlockSpec((1, 1, BLp), lambda b: (b, 0, 0)),
                pl.BlockSpec((1, 1, B_TILE), lambda b: (b, 0, 0)),
            ],
        ),
        compiler_params=pltpu.CompilerParams(dimension_semantics=("parallel",)),
        cost_estimate=cost,
    )(RRp, wconv, wsq, gP, rows)

    alpha = alpha_p.reshape(bsz_p, Lp)[:bsz, 2:2 + L]     # drop pad positions / pad samples
    beta = beta_p.reshape(bsz_p, 1)[:bsz]
    return alpha, beta


# --------------------------- Parameter setup --------------------------------
def init_params(key, ninner, n_groups=5):
    C = ninner
    keys = jax.random.split(key, 12)
    u = lambda k, shape, s: jax.random.uniform(k, shape, jnp.float32, -s, s)
    conv_s = 1.0 / (C * 5) ** 0.5
    lin_s = 1.0 / C ** 0.5
    gmat = (jnp.arange(C)[:, None] // (C // n_groups)
            == jnp.arange(n_groups)[None, :]).astype(jnp.float32)
    return {
        # conv weights stored as (tap, in_ch, out_ch)
        "w1": u(keys[0], (5, C, C), conv_s), "b1": u(keys[1], (1, C), conv_s),
        "gn_w": jnp.ones((1, C), jnp.float32), "gn_b": jnp.zeros((1, C), jnp.float32),
        "gmat": gmat,
        "w2": u(keys[2], (5, C, C), conv_s), "b2": u(keys[3], (1, C), conv_s),
        "wa1": u(keys[4], (C, C), lin_s), "ba1": u(keys[5], (1, C), lin_s),
        "wa2": u(keys[6], (1, C), lin_s), "ba2": u(keys[7], (1, 1), lin_s),
        "wb1": u(keys[8], (C, C), lin_s), "bb1": u(keys[9], (1, C), lin_s),
        "wb2": u(keys[10], (1, C), lin_s), "bb2": u(keys[11], (1, 1), lin_s),
    }


# --------------------------- Pure-JAX reference ------------------------------
def alphanet_reference(RR, params, n_groups=5):
    B, L, C = RR.shape
    x = RR

    def conv(inp, W, b):
        xp = jnp.pad(inp, ((0, 0), (2, 2), (0, 0)))
        out = sum(jnp.einsum("blc,cd->bld", xp[:, t:t + L], W[t]) for t in range(5))
        return out + b

    h1 = conv(x, params["w1"], params["b1"])
    hg = h1.reshape(B, L, n_groups, C // n_groups)
    mean = hg.mean(axis=(1, 3), keepdims=True)
    var = ((hg - mean) ** 2).mean(axis=(1, 3), keepdims=True)
    hn = ((hg - mean) / jnp.sqrt(var + 1e-5)).reshape(B, L, C)
    hn = hn * params["gn_w"] + params["gn_b"]
    hr = jnp.maximum(hn, 0.0)
    raw_ab = conv(hr, params["w2"], params["b2"]) + x
    pooled = raw_ab.mean(axis=1)
    beta = jnp.maximum(pooled @ params["wb1"] + params["bb1"], 0.0) @ params["wb2"].T \
        + params["bb2"]
    ah = jnp.maximum(raw_ab @ params["wa1"] + params["ba1"], 0.0)
    ra = (ah @ params["wa2"].T + params["ba2"])[..., 0]
    alpha = ra + (1.0 - ra.sum(1, keepdims=True)) / L
    return alpha, beta


if __name__ == "__main__":
    # Small but MXU-meaningful shapes: B_TILE=16 -> M = 16*(16+4) = 320 rows per grid step,
    # 2 parallel grid steps (keeps both v7x TensorCores busy).  ninner divisible by 5.
    bsz, n, ninner = 32, 16, 20
    key = jax.random.PRNGKey(0)
    k_rr, k_p = jax.random.split(key)
    RR = jax.random.normal(k_rr, (bsz, n, ninner), jnp.float32)
    params = init_params(k_p, ninner)

    # forward(RR, n, k, m, up, A): training mode -> k/m/up/A unused (no eval roll).
    alpha, beta = alphanet_forward(RR, params, n=n)
    jax.block_until_ready((alpha, beta))

    alpha_ref, beta_ref = alphanet_reference(RR, params)
    assert alpha.shape == (bsz, n) and beta.shape == (bsz, 1)
    # bf16 MXU operands with f32 accumulation -> tolerance loosened vs the f32 reference.
    assert jnp.allclose(alpha, alpha_ref, rtol=2e-2, atol=2e-2)
    assert jnp.allclose(beta, beta_ref, rtol=2e-2, atol=2e-2)
    print("KERNEL_OK")
</pallas_src>

<mosaic_0001>
module attributes {stable_mosaic.version = 11 : i64} {
  func.func @_alphanet_kernel(%arg0: i32, %arg1: memref<1x320x20xf32, #tpu.memory_space<vmem>>, %arg2: memref<2x100x20xbf16, #tpu.memory_space<vmem>>, %arg3: memref<2x20x20xbf16, #tpu.memory_space<vmem>>, %arg4: memref<20x20xf32, #tpu.memory_space<vmem>>, %arg5: memref<9x20xf32, #tpu.memory_space<vmem>>, %arg6: memref<1x1x320xf32, #tpu.memory_space<vmem>>, %arg7: memref<1x1x16xf32, #tpu.memory_space<vmem>>) attributes {dimension_semantics = [#tpu.dimension_semantics<parallel>], iteration_bounds = array<i64: 2>, scalar_prefetch = 0 : i64, scratch_operands = 0 : i64, tpu.core_type = #tpu.core_type<tc>, window_params = [{transform_indices = @transform_0, window_bounds = array<i64: 1, 320, 20>}, {pipeline_mode = #tpu.pipeline_mode<synchronous>, transform_indices = @transform_1, window_bounds = array<i64: 2, 100, 20>}, {pipeline_mode = #tpu.pipeline_mode<synchronous>, transform_indices = @transform_2, window_bounds = array<i64: 2, 20, 20>}, {pipeline_mode = #tpu.pipeline_mode<synchronous>, transform_indices = @transform_3, window_bounds = array<i64: 20, 20>}, {pipeline_mode = #tpu.pipeline_mode<synchronous>, transform_indices = @transform_4, window_bounds = array<i64: 9, 20>}, {transform_indices = @transform_5, window_bounds = array<i64: 1, 1, 320>}, {transform_indices = @transform_6, window_bounds = array<i64: 1, 1, 16>}]} {
    %c0 = arith.constant 0 : index
    %c0_0 = arith.constant 0 : index
    %c0_1 = arith.constant 0 : index
    %0 = vector.load %arg1[%c0, %c0_0, %c0_1] : memref<1x320x20xf32, #tpu.memory_space<vmem>>, vector<1x320x20xf32>
    %1 = vector.shape_cast %0 : vector<1x320x20xf32> to vector<320x20xf32>
    %c0_2 = arith.constant 0 : index
    %c0_3 = arith.constant 0 : index
    %2 = vector.load %arg5[%c0_2, %c0_3] : memref<9x20xf32, #tpu.memory_space<vmem>>, vector<9x20xf32>
    %c0_4 = arith.constant 0 : index
    %c0_5 = arith.constant 0 : index
    %3 = vector.load %arg4[%c0_4, %c0_5] : memref<20x20xf32, #tpu.memory_space<vmem>>, vector<20x20xf32>
    %4 = vector.extract_strided_slice %2 {offsets = [0, 0], sizes = [1, 20], strides = [1, 1]} : vector<9x20xf32> to vector<1x20xf32>
    %5 = vector.shape_cast %4 : vector<1x20xf32> to vector<20xf32>
    %6 = vector.extract_strided_slice %2 {offsets = [1, 0], sizes = [1, 20], strides = [1, 1]} : vector<9x20xf32> to vector<1x20xf32>
    %7 = vector.shape_cast %6 : vector<1x20xf32> to vector<20xf32>
    %8 = vector.extract_strided_slice %2 {offsets = [2, 0], sizes = [1, 20], strides = [1, 1]} : vector<9x20xf32> to vector<1x20xf32>
    %9 = vector.shape_cast %8 : vector<1x20xf32> to vector<20xf32>
    %10 = vector.extract_strided_slice %2 {offsets = [3, 0], sizes = [1, 20], strides = [1, 1]} : vector<9x20xf32> to vector<1x20xf32>
    %11 = vector.shape_cast %10 : vector<1x20xf32> to vector<20xf32>
    %12 = vector.extract_strided_slice %2 {offsets = [4, 0], sizes = [1, 20], strides = [1, 1]} : vector<9x20xf32> to vector<1x20xf32>
    %13 = vector.shape_cast %12 : vector<1x20xf32> to vector<20xf32>
    %14 = vector.extract_strided_slice %2 {offsets = [5, 0], sizes = [1, 20], strides = [1, 1]} : vector<9x20xf32> to vector<1x20xf32>
    %15 = vector.shape_cast %14 : vector<1x20xf32> to vector<20xf32>
    %16 = vector.extract_strided_slice %2 {offsets = [6, 0], sizes = [1, 20], strides = [1, 1]} : vector<9x20xf32> to vector<1x20xf32>
    %17 = vector.shape_cast %16 : vector<1x20xf32> to vector<20xf32>
    %18 = vector.extract_strided_slice %2 {offsets = [7, 0], sizes = [1, 20], strides = [1, 1]} : vector<9x20xf32> to vector<1x20xf32>
    %19 = vector.shape_cast %18 : vector<1x20xf32> to vector<20xf32>
    %20 = vector.extract_strided_slice %2 {offsets = [8, 0], sizes = [1, 1], strides = [1, 1]} : vector<9x20xf32> to vector<1x1xf32>
    %21 = vector.extract_strided_slice %2 {offsets = [8, 1], sizes = [1, 1], strides = [1, 1]} : vector<9x20xf32> to vector<1x1xf32>
    %22 = tpu.iota {dimensions = array<i32: 1>} : vector<16x320xi32>
    %23 = tpu.iota {dimensions = array<i32: 0>} : vector<16x320xi32>
    %c20_i32 = arith.constant 20 : i32
    %24 = vector.broadcast %c20_i32 : i32 to vector<16x320xi32>
    %25 = arith.muli %23, %24 : vector<16x320xi32>
    %c2_i32 = arith.constant 2 : i32
    %26 = vector.broadcast %c2_i32 : i32 to vector<16x320xi32>
    %27 = arith.addi %25, %26 : vector<16x320xi32>
    %28 = arith.cmpi sge, %22, %27 : vector<16x320xi32>
    %c16_i32 = arith.constant 16 : i32
    %29 = vector.broadcast %c16_i32 : i32 to vector<16x320xi32>
    %30 = arith.addi %27, %29 : vector<16x320xi32>
    %31 = arith.cmpi slt, %22, %30 : vector<16x320xi32>
    %32 = arith.andi %28, %31 : vector<16x320xi1>
    %33 = arith.extui %32 : vector<16x320xi1> to vector<16x320xi32>
    %34 = arith.sitofp %33 : vector<16x320xi32> to vector<16x320xf32>
    %35 = tpu.iota {dimensions = array<i32: 0>} : vector<320x16xi32>
    %36 = tpu.iota {dimensions = array<i32: 1>} : vector<320x16xi32>
    %c20_i32_6 = arith.constant 20 : i32
    %37 = vector.broadcast %c20_i32_6 : i32 to vector<320x16xi32>
    %38 = arith.muli %36, %37 : vector<320x16xi32>
    %c2_i32_7 = arith.constant 2 : i32
    %39 = vector.broadcast %c2_i32_7 : i32 to vector<320x16xi32>
    %40 = arith.addi %38, %39 : vector<320x16xi32>
    %41 = arith.cmpi sge, %35, %40 : vector<320x16xi32>
    %c16_i32_8 = arith.constant 16 : i32
    %42 = vector.broadcast %c16_i32_8 : i32 to vector<320x16xi32>
    %43 = arith.addi %40, %42 : vector<320x16xi32>
    %44 = arith.cmpi slt, %35, %43 : vector<320x16xi32>
    %45 = arith.andi %41, %44 : vector<320x16xi1>
    %46 = arith.extui %45 : vector<320x16xi1> to vector<320x16xi32>
    %47 = arith.sitofp %46 : vector<320x16xi32> to vector<320x16xf32>
    %c0_9 = arith.constant 0 : index
    %c0_10 = arith.constant 0 : index
    %c0_11 = arith.constant 0 : index
    %48 = vector.load %arg2[%c0_9, %c0_10, %c0_11] : memref<2x100x20xbf16, #tpu.memory_space<vmem>>, vector<1x100x20xbf16>
    %49 = vector.shape_cast %48 : vector<1x100x20xbf16> to vector<100x20xbf16>
    %50 = vector.extract_strided_slice %1 {offsets = [318, 0], sizes = [2, 20], strides = [1, 1]} : vector<320x20xf32> to vector<2x20xf32>
    %51 = vector.extract_strided_slice %1 {offsets = [0, 0], sizes = [318, 20], strides = [1, 1]} : vector<320x20xf32> to vector<318x20xf32>
    %52 = tpu.concatenate %50, %51 in 0 : vector<2x20xf32>, vector<318x20xf32> -> vector<320x20xf32>
    %53 = vector.extract_strided_slice %1 {offsets = [319, 0], sizes = [1, 20], strides = [1, 1]} : vector<320x20xf32> to vector<1x20xf32>
    %54 = vector.extract_strided_slice %1 {offsets = [0, 0], sizes = [319, 20], strides = [1, 1]} : vector<320x20xf32> to vector<319x20xf32>
    %55 = tpu.concatenate %53, %54 in 0 : vector<1x20xf32>, vector<319x20xf32> -> vector<320x20xf32>
    %56 = vector.extract_strided_slice %1 {offsets = [1, 0], sizes = [319, 20], strides = [1, 1]} : vector<320x20xf32> to vector<319x20xf32>
    %57 = vector.extract_strided_slice %1 {offsets = [0, 0], sizes = [1, 20], strides = [1, 1]} : vector<320x20xf32> to vector<1x20xf32>
    %58 = tpu.concatenate %56, %57 in 0 : vector<319x20xf32>, vector<1x20xf32> -> vector<320x20xf32>
    %59 = vector.extract_strided_slice %1 {offsets = [2, 0], sizes = [318, 20], strides = [1, 1]} : vector<320x20xf32> to vector<318x20xf32>
    %60 = vector.extract_strided_slice %1 {offsets = [0, 0], sizes = [2, 20], strides = [1, 1]} : vector<320x20xf32> to vector<2x20xf32>
    %61 = tpu.concatenate %59, %60 in 0 : vector<318x20xf32>, vector<2x20xf32> -> vector<320x20xf32>
    %62 = tpu.concatenate %52, %55, %1, %58, %61 in 1 : vector<320x20xf32>, vector<320x20xf32>, vector<320x20xf32>, vector<320x20xf32>, vector<320x20xf32> -> vector<320x100xf32>
    %63 = arith.truncf %62 : vector<320x100xf32> to vector<320x100xbf16>
    %cst = arith.constant dense<0.000000e+00> : vector<320x20xf32>
    %64 = tpu.matmul %63, %49, %cst {dimension_numbers = #tpu.dot_dimension_numbers<[1], [0], [0], [1], [0, 0, 1, 1], [], []>} : vector<320x100xbf16>, vector<100x20xbf16>, vector<320x20xf32> -> vector<320x20xf32>
    %65 = vector.shape_cast %5 : vector<20xf32> to vector<1x20xf32>
    %66 = vector.broadcast %65 : vector<1x20xf32> to vector<320x20xf32>
    %67 = arith.addf %64, %66 : vector<320x20xf32>
    %68 = arith.mulf %67, %67 : vector<320x20xf32>
    %69 = tpu.concatenate %67, %68 in 1 : vector<320x20xf32>, vector<320x20xf32> -> vector<320x40xf32>
    %cst_12 = arith.constant dense<0.000000e+00> : vector<16x40xf32>
    %70 = tpu.matmul %34, %69, %cst_12 {dimension_numbers = #tpu.dot_dimension_numbers<[1], [0], [0], [1], [0, 0, 1, 1], [], []>} : vector<16x320xf32>, vector<320x40xf32>, vector<16x40xf32> -> vector<16x40xf32>
    %71 = vector.extract_strided_slice %70 {offsets = [0, 0], sizes = [16, 20], strides = [1, 1]} : vector<16x40xf32> to vector<16x20xf32>
    %cst_13 = arith.constant dense<0.000000e+00> : vector<16x20xf32>
    %72 = tpu.matmul %71, %3, %cst_13 {dimension_numbers = #tpu.dot_dimension_numbers<[1], [0], [0], [1], [0, 0, 1, 1], [], []>} : vector<16x20xf32>, vector<20x20xf32>, vector<16x20xf32> -> vector<16x20xf32>
    %73 = vector.extract_strided_slice %70 {offsets = [0, 20], sizes = [16, 20], strides = [1, 1]} : vector<16x40xf32> to vector<16x20xf32>
    %cst_14 = arith.constant dense<0.000000e+00> : vector<16x20xf32>
    %74 = tpu.matmul %73, %3, %cst_14 {dimension_numbers = #tpu.dot_dimension_numbers<[1], [0], [0], [1], [0, 0, 1, 1], [], []>} : vector<16x20xf32>, vector<20x20xf32>, vector<16x20xf32> -> vector<16x20xf32>
    %75 = arith.mulf %72, %72 : vector<16x20xf32>
    %76 = arith.subf %74, %75 : vector<16x20xf32>
    %cst_15 = arith.constant 9.99999974E-6 : f32
    %77 = vector.broadcast %cst_15 : f32 to vector<16x20xf32>
    %78 = arith.addf %76, %77 : vector<16x20xf32>
    %79 = math.rsqrt %78 : vector<16x20xf32>
    %80 = vector.shape_cast %7 : vector<20xf32> to vector<1x20xf32>
    %81 = vector.broadcast %80 : vector<1x20xf32> to vector<16x20xf32>
    %82 = arith.mulf %79, %81 : vector<16x20xf32>
    %83 = arith.mulf %72, %82 : vector<16x20xf32>
    %84 = vector.shape_cast %9 : vector<20xf32> to vector<1x20xf32>
    %85 = vector.broadcast %84 : vector<1x20xf32> to vector<16x20xf32>
    %86 = arith.subf %85, %83 : vector<16x20xf32>
    %87 = tpu.concatenate %82, %86 in 1 : vector<16x20xf32>, vector<16x20xf32> -> vector<16x40xf32>
    %cst_16 = arith.constant dense<0.000000e+00> : vector<320x40xf32>
    %88 = tpu.matmul %47, %87, %cst_16 {dimension_numbers = #tpu.dot_dimension_numbers<[1], [0], [0], [1], [0, 0, 1, 1], [], []>} : vector<320x16xf32>, vector<16x40xf32>, vector<320x40xf32> -> vector<320x40xf32>
    %89 = vector.extract_strided_slice %88 {offsets = [0, 0], sizes = [320, 20], strides = [1, 1]} : vector<320x40xf32> to vector<320x20xf32>
    %90 = arith.mulf %67, %89 : vector<320x20xf32>
    %91 = vector.extract_strided_slice %88 {offsets = [0, 20], sizes = [320, 20], strides = [1, 1]} : vector<320x40xf32> to vector<320x20xf32>
    %92 = arith.addf %90, %91 : vector<320x20xf32>
    %cst_17 = arith.constant 0.000000e+00 : f32
    %93 = vector.broadcast %cst_17 : f32 to vector<320x20xf32>
    %94 = arith.maximumf %92, %93 : vector<320x20xf32>
    %c1 = arith.constant 1 : index
    %c0_18 = arith.constant 0 : index
    %c0_19 = arith.constant 0 : index
    %95 = vector.load %arg2[%c1, %c0_18, %c0_19] : memref<2x100x20xbf16, #tpu.memory_space<vmem>>, vector<1x100x20xbf16>
    %96 = vector.shape_cast %95 : vector<1x100x20xbf16> to vector<100x20xbf16>
    %97 = vector.extract_strided_slice %94 {offsets = [318, 0], sizes = [2, 20], strides = [1, 1]} : vector<320x20xf32> to vector<2x20xf32>
    %98 = vector.extract_strided_slice %94 {offsets = [0, 0], sizes = [318, 20], strides = [1, 1]} : vector<320x20xf32> to vector<318x20xf32>
    %99 = tpu.concatenate %97, %98 in 0 : vector<2x20xf32>, vector<318x20xf32> -> vector<320x20xf32>
    %100 = vector.extract_strided_slice %94 {offsets = [319, 0], sizes = [1, 20], strides = [1, 1]} : vector<320x20xf32> to vector<1x20xf32>
    %101 = vector.extract_strided_slice %94 {offsets = [0, 0], sizes = [319, 20], strides = [1, 1]} : vector<320x20xf32> to vector<319x20xf32>
    %102 = tpu.concatenate %100, %101 in 0 : vector<1x20xf32>, vector<319x20xf32> -> vector<320x20xf32>
    %103 = vector.extract_strided_slice %94 {offsets = [1, 0], sizes = [319, 20], strides = [1, 1]} : vector<320x20xf32> to vector<319x20xf32>
    %104 = vector.extract_strided_slice %94 {offsets = [0, 0], sizes = [1, 20], strides = [1, 1]} : vector<320x20xf32> to vector<1x20xf32>
    %105 = tpu.concatenate %103, %104 in 0 : vector<319x20xf32>, vector<1x20xf32> -> vector<320x20xf32>
    %106 = vector.extract_strided_slice %94 {offsets = [2, 0], sizes = [318, 20], strides = [1, 1]} : vector<320x20xf32> to vector<318x20xf32>
    %107 = vector.extract_strided_slice %94 {offsets = [0, 0], sizes = [2, 20], strides = [1, 1]} : vector<320x20xf32> to vector<2x20xf32>
    %108 = tpu.concatenate %106, %107 in 0 : vector<318x20xf32>, vector<2x20xf32> -> vector<320x20xf32>
    %109 = tpu.concatenate %99, %102, %94, %105, %108 in 1 : vector<320x20xf32>, vector<320x20xf32>, vector<320x20xf32>, vector<320x20xf32>, vector<320x20xf32> -> vector<320x100xf32>
    %110 = arith.truncf %109 : vector<320x100xf32> to vector<320x100xbf16>
    %cst_20 = arith.constant dense<0.000000e+00> : vector<320x20xf32>
    %111 = tpu.matmul %110, %96, %cst_20 {dimension_numbers = #tpu.dot_dimension_numbers<[1], [0], [0], [1], [0, 0, 1, 1], [], []>} : vector<320x100xbf16>, vector<100x20xbf16>, vector<320x20xf32> -> vector<320x20xf32>
    %112 = vector.shape_cast %11 : vector<20xf32> to vector<1x20xf32>
    %113 = vector.broadcast %112 : vector<1x20xf32> to vector<320x20xf32>
    %114 = arith.addf %111, %113 : vector<320x20xf32>
    %115 = arith.addf %114, %1 : vector<320x20xf32>
    %cst_21 = arith.constant dense<0.000000e+00> : vector<16x20xf32>
    %116 = tpu.matmul %34, %115, %cst_21 {dimension_numbers = #tpu.dot_dimension_numbers<[1], [0], [0], [1], [0, 0, 1, 1], [], []>} : vector<16x320xf32>, vector<320x20xf32>, vector<16x20xf32> -> vector<16x20xf32>
    %cst_22 = arith.constant 6.250000e-02 : f32
    %117 = vector.broadcast %cst_22 : f32 to vector<16x20xf32>
    %118 = arith.mulf %116, %117 : vector<16x20xf32>
    %119 = arith.truncf %118 : vector<16x20xf32> to vector<16x20xbf16>
    %c1_23 = arith.constant 1 : index
    %c0_24 = arith.constant 0 : index
    %c0_25 = arith.constant 0 : index
    %120 = vector.load %arg3[%c1_23, %c0_24, %c0_25] : memref<2x20x20xbf16, #tpu.memory_space<vmem>>, vector<1x20x20xbf16>
    %121 = vector.shape_cast %120 : vector<1x20x20xbf16> to vector<20x20xbf16>
    %cst_26 = arith.constant dense<0.000000e+00> : vector<16x20xf32>
    %122 = tpu.matmul %119, %121, %cst_26 {dimension_numbers = #tpu.dot_dimension_numbers<[1], [0], [0], [1], [0, 0, 1, 1], [], []>} : vector<16x20xbf16>, vector<20x20xbf16>, vector<16x20xf32> -> vector<16x20xf32>
    %123 = vector.shape_cast %17 : vector<20xf32> to vector<1x20xf32>
    %124 = vector.broadcast %123 : vector<1x20xf32> to vector<16x20xf32>
    %125 = arith.addf %122, %124 : vector<16x20xf32>
    %cst_27 = arith.constant 0.000000e+00 : f32
    %126 = vector.broadcast %cst_27 : f32 to vector<16x20xf32>
    %127 = arith.maximumf %125, %126 : vector<16x20xf32>
    %128 = vector.shape_cast %19 : vector<20xf32> to vector<1x20xf32>
    %cst_28 = arith.constant dense<0.000000e+00> : vector<1x16xf32>
    %129 = tpu.matmul %128, %127, %cst_28 {dimension_numbers = #tpu.dot_dimension_numbers<[1], [1], [0], [0], [0, 0, 1, 0], [], []>} : vector<1x20xf32>, vector<16x20xf32>, vector<1x16xf32> -> vector<1x16xf32>
    %130 = vector.broadcast %21 : vector<1x1xf32> to vector<1x16xf32>
    %131 = arith.addf %129, %130 : vector<1x16xf32>
    %c0_29 = arith.constant 0 : index
    %c0_30 = arith.constant 0 : index
    %c0_31 = arith.constant 0 : index
    %132 = vector.load %arg7[%c0_29, %c0_30, %c0_31] : memref<1x1x16xf32, #tpu.memory_space<vmem>>, vector<1x1x16xf32>
    %133 = vector.shape_cast %132 : vector<1x1x16xf32> to vector<1x16xf32>
    %134 = vector.shape_cast %131 : vector<1x16xf32> to vector<1x1x16xf32>
    tpu.vector_store %arg7[%c0_29, %c0_30, %c0_31], %134 {strides = array<i32>} : memref<1x1x16xf32, #tpu.memory_space<vmem>>, vector<1x1x16xf32>,
    %135 = arith.truncf %115 : vector<320x20xf32> to vector<320x20xbf16>
    %c0_32 = arith.constant 0 : index
    %c0_33 = arith.constant 0 : index
    %c0_34 = arith.constant 0 : index
    %136 = vector.load %arg3[%c0_32, %c0_33, %c0_34] : memref<2x20x20xbf16, #tpu.memory_space<vmem>>, vector<1x20x20xbf16>
    %137 = vector.shape_cast %136 : vector<1x20x20xbf16> to vector<20x20xbf16>
    %cst_35 = arith.constant dense<0.000000e+00> : vector<320x20xf32>
    %138 = tpu.matmul %135, %137, %cst_35 {dimension_numbers = #tpu.dot_dimension_numbers<[1], [0], [0], [1], [0, 0, 1, 1], [], []>} : vector<320x20xbf16>, vector<20x20xbf16>, vector<320x20xf32> -> vector<320x20xf32>
    %139 = vector.shape_cast %13 : vector<20xf32> to vector<1x20xf32>
    %140 = vector.broadcast %139 : vector<1x20xf32> to vector<320x20xf32>
    %141 = arith.addf %138, %140 : vector<320x20xf32>
    %cst_36 = arith.constant 0.000000e+00 : f32
    %142 = vector.broadcast %cst_36 : f32 to vector<320x20xf32>
    %143 = arith.maximumf %141, %142 : vector<320x20xf32>
    %144 = vector.shape_cast %15 : vector<20xf32> to vector<1x20xf32>
    %cst_37 = arith.constant dense<0.000000e+00> : vector<1x320xf32>
    %145 = tpu.matmul %144, %143, %cst_37 {dimension_numbers = #tpu.dot_dimension_numbers<[1], [1], [0], [0], [0, 0, 1, 0], [], []>} : vector<1x20xf32>, vector<320x20xf32>, vector<1x320xf32> -> vector<1x320xf32>
    %146 = vector.broadcast %20 : vector<1x1xf32> to vector<1x320xf32>
    %147 = arith.addf %145, %146 : vector<1x320xf32>
    %cst_38 = arith.constant dense<0.000000e+00> : vector<1x16xf32>
    %148 = tpu.matmul %147, %47, %cst_38 {dimension_numbers = #tpu.dot_dimension_numbers<[1], [0], [0], [1], [0, 0, 1, 1], [], []>} : vector<1x320xf32>, vector<320x16xf32>, vector<1x16xf32> -> vector<1x16xf32>
    %cst_39 = arith.constant 1.000000e+00 : f32
    %149 = vector.broadcast %cst_39 : f32 to vector<1x16xf32>
    %150 = arith.subf %149, %148 : vector<1x16xf32>
    %cst_40 = arith.constant 6.250000e-02 : f32
    %151 = vector.broadcast %cst_40 : f32 to vector<1x16xf32>
    %152 = arith.mulf %150, %151 : vector<1x16xf32>
    %cst_41 = arith.constant dense<0.000000e+00> : vector<1x320xf32>
    %153 = tpu.matmul %152, %34, %cst_41 {dimension_numbers = #tpu.dot_dimension_numbers<[1], [0], [0], [1], [0, 0, 1, 1], [], []>} : vector<1x16xf32>, vector<16x320xf32>, vector<1x320xf32> -> vector<1x320xf32>
    %154 = arith.addf %147, %153 : vector<1x320xf32>
    %c0_42 = arith.constant 0 : index
    %c0_43 = arith.constant 0 : index
    %c0_44 = arith.constant 0 : index
    %155 = vector.load %arg6[%c0_42, %c0_43, %c0_44] : memref<1x1x320xf32, #tpu.memory_space<vmem>>, vector<1x1x320xf32>
    %156 = vector.shape_cast %155 : vector<1x1x320xf32> to vector<1x320xf32>
    %157 = vector.shape_cast %154 : vector<1x320xf32> to vector<1x1x320xf32>
    tpu.vector_store %arg6[%c0_42, %c0_43, %c0_44], %157 {strides = array<i32>} : memref<1x1x320xf32, #tpu.memory_space<vmem>>, vector<1x1x320xf32>,
    return
  }
  func.func @transform_0(%arg0: i32) -> (i32, i32, i32) {
    %c0_i32 = arith.constant 0 : i32
    %c0_i32_0 = arith.constant 0 : i32
    %c0_i32_1 = arith.constant 0 : i32
    return %arg0, %c0_i32, %c0_i32_0 : i32, i32, i32
  }
  func.func @transform_1(%arg0: i32) -> (i32, i32, i32) {
    %c0_i32 = arith.constant 0 : i32
    %c0_i32_0 = arith.constant 0 : i32
    %c0_i32_1 = arith.constant 0 : i32
    %c0_i32_2 = arith.constant 0 : i32
    return %c0_i32, %c0_i32_0, %c0_i32_1 : i32, i32, i32
  }
  func.func @transform_2(%arg0: i32) -> (i32, i32, i32) {
    %c0_i32 = arith.constant 0 : i32
    %c0_i32_0 = arith.constant 0 : i32
    %c0_i32_1 = arith.constant 0 : i32
    %c0_i32_2 = arith.constant 0 : i32
    return %c0_i32, %c0_i32_0, %c0_i32_1 : i32, i32, i32
  }
  func.func @transform_3(%arg0: i32) -> (i32, i32) {
    %c0_i32 = arith.constant 0 : i32
    %c0_i32_0 = arith.constant 0 : i32
    %c0_i32_1 = arith.constant 0 : i32
    return %c0_i32, %c0_i32_0 : i32, i32
  }
  func.func @transform_4(%arg0: i32) -> (i32, i32) {
    %c0_i32 = arith.constant 0 : i32
    %c0_i32_0 = arith.constant 0 : i32
    %c0_i32_1 = arith.constant 0 : i32
    return %c0_i32, %c0_i32_0 : i32, i32
  }
  func.func @transform_5(%arg0: i32) -> (i32, i32, i32) {
    %c0_i32 = arith.constant 0 : i32
    %c0_i32_0 = arith.constant 0 : i32
    %c0_i32_1 = arith.constant 0 : i32
    return %arg0, %c0_i32, %c0_i32_0 : i32, i32, i32
  }
  func.func @transform_6(%arg0: i32) -> (i32, i32, i32) {
    %c0_i32 = arith.constant 0 : i32
    %c0_i32_0 = arith.constant 0 : i32
    %c0_i32_1 = arith.constant 0 : i32
    return %arg0, %c0_i32, %c0_i32_0 : i32, i32, i32
  }
}

</mosaic_0001>

<llo_original>
// kernel: alphanet_forward.1
$region0: #{alphanet_forward.1}
  #allocation0 [shape = 'u32[]', space=smem, size = 0x4, offset = 0x4, fixed_abs, tag = 'smem constant byte address 0x4 - core index']
  #allocation1 [shape = 'u32[72,128]{1,0:T(1,128)}', space=vmem, size = 0x9000, scoped, tag = 'internal scratch']
  %s0 = inlined_call_operand.vmem [shape: f32[2,320,20], index: 0, kind: input, shape index: {}]
  %s1 = inlined_call_operand.vmem [shape: bf16[2,100,20], index: 1, kind: input, shape index: {}]
  %s2 = inlined_call_operand.vmem [shape: bf16[2,20,20], index: 2, kind: input, shape index: {}]
  %s3 = inlined_call_operand.vmem [shape: f32[20,20], index: 3, kind: input, shape index: {}]
  %s4 = inlined_call_operand.vmem [shape: f32[9,20], index: 4, kind: input, shape index: {}]
  %s5 = inlined_call_operand.vmem [shape: f32[2,1,320], index: 5, kind: output, shape index: {0}]
  %s6 = inlined_call_operand.vmem [shape: f32[2,1,16], index: 6, kind: output, shape index: {1}]
  %7 = xla_tuple %s5, %s6
  %s8 = sld [smem:[#allocation0]]
  $region61: #{alphanet_forward.1} parent=0
    _
  %s10 = ssub.s32 1, %s8
  %s11 = scalar_select 0, %s10, %s8
  loop: start=0, step=1, limit=4
  $region2: #{alphanet_forward.1} parent=0 // loop_pre_header
    _
  $region3: #{alphanet_forward.1} parent=0 // loop_header
    %s13 = sphi 0, %s17
    %p14 = scmp.ge.s32.totalorder %s13, 4
    %s23 = sphi 0, %s25
    %s26 = sphi 0, %s23
    %s27 = sphi 0, %s26
    %s43 = sphi 0, %s27
    %s47 = sphi 0, %s47
    %s49 = sphi 0, %s47
    %s50 = sphi 0, %s49
    %s64 = sphi 0, %s50
    %s68 = sphi 0, %s68
    %s70 = sphi 0, %s68
    %s71 = sphi 0, %s70
    %s85 = sphi 0, %s71
    %s89 = sphi 0, %s89
    %s91 = sphi 0, %s89
    %s92 = sphi 0, %s91
    %s106 = sphi 0, %s92
    %s110 = sphi 0, %s110
    %s112 = sphi 0, %s110
    %s113 = sphi 0, %s112
    %s127 = sphi 0, %s113
    %s133 = sphi 0, %s135
    %s136 = sphi 0, %s133
    %s137 = sphi 0, %s136
    %s153 = sphi 0, %s137
    %s159 = sphi 0, %s161
    %s162 = sphi 0, %s159
    %s163 = sphi 0, %s162
    %s179 = sphi 0, %s163
  $region4: #{alphanet_forward.1} parent=0 // loop_header_branch
    %16 = sbr.rel (%p14) target = $region8
  $region5: #{alphanet_forward.1} parent=0 // loop_body
    %s18 = ssub.s32 %s13, 1
    %s19 = ssub.s32 %s13, 2
    %s20 = sadd.s32 %s13, 1
    %s21 = ssub.s32 %s13, %s20
    %p22 = scmp.eq.s32.totalorder %s21, 0
    %s24 = sadd.s32 %s23, 1
    %s25 = scalar_select %p22, %s23, %s24
    %p28 = pneg %p22
    %p29 = scmp.eq.s32.totalorder %s13, 1
    %p30 = por %p28, %p29
    %p31 = scmp.ne.s32.totalorder %s23, %s26
    %p32 = scmp.eq.s32.totalorder %s13, 0
    %p33 = por %p31, %p32
    %p34 = scmp.ne.s32.totalorder %s23, %s26
    %p35 = scmp.eq.s32.totalorder %s18, 1
    %p36 = por %p34, %p35
    %p37 = scmp.ne.s32.totalorder %s26, %s27
    %p38 = scmp.eq.s32.totalorder %s18, 0
    %p39 = por %p37, %p38
    %p40 = scmp.ne.s32.totalorder %s26, %s27
    %p41 = scmp.eq.s32.totalorder %s19, 1
    %p42 = por %p40, %p41
    %p44 = scmp.ne.s32.totalorder %s27, %s43
    %p45 = scmp.eq.s32.totalorder %s19, 0
    %p46 = por %p44, %p45
    %s48 = sadd.s32 %s47, 1
    %p51 = scmp.eq.s32.totalorder %s13, 1
    %p52 = scmp.ne.s32.totalorder %s47, %s49
    %p53 = scmp.eq.s32.totalorder %s13, 0
    %p54 = por %p52, %p53
    %p55 = scmp.ne.s32.totalorder %s47, %s49
    %p56 = scmp.eq.s32.totalorder %s18, 1
    %p57 = por %p55, %p56
    %p58 = scmp.ne.s32.totalorder %s49, %s50
    %p59 = scmp.eq.s32.totalorder %s18, 0
    %p60 = por %p58, %p59
    %p61 = scmp.ne.s32.totalorder %s49, %s50
    %p62 = scmp.eq.s32.totalorder %s19, 1
    %p63 = por %p61, %p62
    %p65 = scmp.ne.s32.totalorder %s50, %s64
    %p66 = scmp.eq.s32.totalorder %s19, 0
    %p67 = por %p65, %p66
    %s69 = sadd.s32 %s68, 1
    %p72 = scmp.eq.s32.totalorder %s13, 1
    %p73 = scmp.ne.s32.totalorder %s68, %s70
    %p74 = scmp.eq.s32.totalorder %s13, 0
    %p75 = por %p73, %p74
    %p76 = scmp.ne.s32.totalorder %s68, %s70
    %p77 = scmp.eq.s32.totalorder %s18, 1
    %p78 = por %p76, %p77
    %p79 = scmp.ne.s32.totalorder %s70, %s71
    %p80 = scmp.eq.s32.totalorder %s18, 0
    %p81 = por %p79, %p80
    %p82 = scmp.ne.s32.totalorder %s70, %s71
    %p83 = scmp.eq.s32.totalorder %s19, 1
    %p84 = por %p82, %p83
    %p86 = scmp.ne.s32.totalorder %s71, %s85
    %p87 = scmp.eq.s32.totalorder %s19, 0
    %p88 = por %p86, %p87
    %s90 = sadd.s32 %s89, 1
    %p93 = scmp.eq.s32.totalorder %s13, 1
    %p94 = scmp.ne.s32.totalorder %s89, %s91
    %p95 = scmp.eq.s32.totalorder %s13, 0
    %p96 = por %p94, %p95
    %p97 = scmp.ne.s32.totalorder %s89, %s91
    %p98 = scmp.eq.s32.totalorder %s18, 1
    %p99 = por %p97, %p98
    %p100 = scmp.ne.s32.totalorder %s91, %s92
    %p101 = scmp.eq.s32.totalorder %s18, 0
    %p102 = por %p100, %p101
    %p103 = scmp.ne.s32.totalorder %s91, %s92
    %p104 = scmp.eq.s32.totalorder %s19, 1
    %p105 = por %p103, %p104
    %p107 = scmp.ne.s32.totalorder %s92, %s106
    %p108 = scmp.eq.s32.totalorder %s19, 0
    %p109 = por %p107, %p108
    %s111 = sadd.s32 %s110, 1
    %p114 = scmp.eq.s32.totalorder %s13, 1
    %p115 = scmp.ne.s32.totalorder %s110, %s112
    %p116 = scmp.eq.s32.totalorder %s13, 0
    %p117 = por %p115, %p116
    %p118 = scmp.ne.s32.totalorder %s110, %s112
    %p119 = scmp.eq.s32.totalorder %s18, 1
    %p120 = por %p118, %p119
    %p121 = scmp.ne.s32.totalorder %s112, %s113
    %p122 = scmp.eq.s32.totalorder %s18, 0
    %p123 = por %p121, %p122
    %p124 = scmp.ne.s32.totalorder %s112, %s113
    %p125 = scmp.eq.s32.totalorder %s19, 1
    %p126 = por %p124, %p125
    %p128 = scmp.ne.s32.totalorder %s113, %s127
    %p129 = scmp.eq.s32.totalorder %s19, 0
    %p130 = por %p128, %p129
    %s131 = ssub.s32 %s13, %s20
    %p132 = scmp.eq.s32.totalorder %s131, 0
    %s134 = sadd.s32 %s133, 1
    %s135 = scalar_select %p132, %s133, %s134
    %p138 = pneg %p132
    %p139 = scmp.eq.s32.totalorder %s13, 1
    %p140 = por %p138, %p139
    %p141 = scmp.ne.s32.totalorder %s133, %s136
    %p142 = scmp.eq.s32.totalorder %s13, 0
    %p143 = por %p141, %p142
    %p144 = scmp.ne.s32.totalorder %s133, %s136
    %p145 = scmp.eq.s32.totalorder %s18, 1
    %p146 = por %p144, %p145
    %p147 = scmp.ne.s32.totalorder %s136, %s137
    %p148 = scmp.eq.s32.totalorder %s18, 0
    %p149 = por %p147, %p148
    %p150 = scmp.ne.s32.totalorder %s136, %s137
    %p151 = scmp.eq.s32.totalorder %s19, 1
    %p152 = por %p150, %p151
    %p154 = scmp.ne.s32.totalorder %s137, %s153
    %p155 = scmp.eq.s32.totalorder %s19, 0
    %p156 = por %p154, %p155
    %s157 = ssub.s32 %s13, %s20
    %p158 = scmp.eq.s32.totalorder %s157, 0
    %s160 = sadd.s32 %s159, 1
    %s161 = scalar_select %p158, %s159, %s160
    %p164 = pneg %p158
    %p165 = scmp.eq.s32.totalorder %s13, 1
    %p166 = por %p164, %p165
    %p167 = scmp.ne.s32.totalorder %s159, %s162
    %p168 = scmp.eq.s32.totalorder %s13, 0
    %p169 = por %p167, %p168
    %p170 = scmp.ne.s32.totalorder %s159, %s162
    %p171 = scmp.eq.s32.totalorder %s18, 1
    %p172 = por %p170, %p171
    %p173 = scmp.ne.s32.totalorder %s162, %s163
    %p174 = scmp.eq.s32.totalorder %s18, 0
    %p175 = por %p173, %p174
    %p176 = scmp.ne.s32.totalorder %s162, %s163
    %p177 = scmp.eq.s32.totalorder %s19, 1
    %p178 = por %p176, %p177
    %p180 = scmp.ne.s32.totalorder %s163, %s179
    %p181 = scmp.eq.s32.totalorder %s19, 0
    %p182 = por %p180, %p181
    %p183 = scmp.le.s32.totalorder 1, %s13
    %p184 = scmp.lt.s32.totalorder %s13, 3
    %p185 = pnand %p183, %p184
    %p186 = pneg %p185
    // Predicated region
    $region9: #{alphanet_forward.1} parent=5 // pred_check
      _
    $region10: #{alphanet_forward.1} parent=5 // pred_check_branch
      %188 = sbr.rel (%p185) target = $region12
    $region11: #{alphanet_forward.1} parent=5 // pred_region
      %s189 = ssub.s32 %s13, 1
      // Predicated region
      $region13: #{alphanet_forward.1} parent=11 // pred_check
        %p190 = pneg %p60
      $region14: #{alphanet_forward.1} parent=11 // pred_check_branch
        %192 = sbr.rel (%p190) target = $region16
      $region15: #{alphanet_forward.1} parent=11 // pred_region
        _
      $region16: #{alphanet_forward.1} parent=11 // pred_fallthru
        _
      // Predicated region
      $region17: #{alphanet_forward.1} parent=11 // pred_check
        %p193 = pneg %p81
      $region18: #{alphanet_forward.1} parent=11 // pred_check_branch
        %195 = sbr.rel (%p193) target = $region20
      $region19: #{alphanet_forward.1} parent=11 // pred_region
        _
      $region20: #{alphanet_forward.1} parent=11 // pred_fallthru
        _
      // Predicated region
      $region21: #{alphanet_forward.1} parent=11 // pred_check
        %p196 = pneg %p102
      $region22: #{alphanet_forward.1} parent=11 // pred_check_branch
        %198 = sbr.rel (%p196) target = $region24
      $region23: #{alphanet_forward.1} parent=11 // pred_region
        _
      $region24: #{alphanet_forward.1} parent=11 // pred_fallthru
        _
      // Predicated region
      $region25: #{alphanet_forward.1} parent=11 // pred_check
        %p199 = pneg %p123
      $region26: #{alphanet_forward.1} parent=11 // pred_check_branch
        %201 = sbr.rel (%p199) target = $region28
      $region27: #{alphanet_forward.1} parent=11 // pred_region
        _
      $region28: #{alphanet_forward.1} parent=11 // pred_fallthru
        _
    $region12: #{alphanet_forward.1} parent=5 // pred_fallthru
      _
    %p202 = scmp.lt.s32.totalorder %s13, 2
    // Predicated region
    $region29: #{alphanet_forward.1} parent=5 // pred_check
      %p203 = pneg %p202
    $region30: #{alphanet_forward.1} parent=5 // pred_check_branch
      %205 = sbr.rel (%p203) target = $region32
    $region31: #{alphanet_forward.1} parent=5 // pred_region
      // Predicated region
      $region33: #{alphanet_forward.1} parent=31 // pred_check
        %p206 = pneg %p33
      $region34: #{alphanet_forward.1} parent=31 // pred_check_branch
        %208 = sbr.rel (%p206) target = $region36
      $region35: #{alphanet_forward.1} parent=31 // pred_region
        %p209 = scmp.lt.s32.totalorder %s13, 1
        %s210 = scalar_select %p209, %s13, 1
        %s211 = smul.addr %s210, 40
        %s212 = smul.addr %s211, 8
        %s213 = scalar_lea.vmem %s0, %s212
      $region36: #{alphanet_forward.1} parent=31 // pred_fallthru
        _
    $region32: #{alphanet_forward.1} parent=5 // pred_fallthru
      _
    %p214 = scmp.le.s32.totalorder 1, %s13
    %p215 = scmp.lt.s32.totalorder %s13, 3
    %p216 = pnand %p214, %p215
    %p217 = pneg %p216
    // Predicated region
    $region37: #{alphanet_forward.1} parent=5 // pred_check
      _
    $region38: #{alphanet_forward.1} parent=5 // pred_check_branch
      %219 = sbr.rel (%p216) target = $region40
    $region39: #{alphanet_forward.1} parent=5 // pred_region
      %s220 = ssub.s32 %s13, 1
      %p221 = scmp.lt.s32.totalorder %s18, 1
      %s222 = scalar_select %p221, %s18, 1
      %s223 = smul.addr %s222, 40
      %s224 = smul.addr %s223, 8
      %s225 = scalar_lea.vmem %s0, %s224
      %p226 = pneg %p39
      %p227 = pneg %p36
      %p228 = pneg %p60
      %p229 = pneg %p57
      %p230 = pneg %p81
      %p231 = pneg %p78
      %p232 = pneg %p102
      %p233 = pneg %p99
      %p234 = pneg %p123
      %p235 = pneg %p120
      %p236 = pneg %p149
      %p237 = pneg %p146
      %p238 = scmp.lt.s32.totalorder %s18, 1
      %s239 = scalar_select %p238, %s18, 1
      %s240 = smul.addr %s239, 3
      %s241 = scalar_lea.vmem %s5, %s240
      %p242 = pneg %p175
      %p243 = pneg %p172
      %p244 = scmp.lt.s32.totalorder %s18, 1
      %s245 = scalar_select %p244, %s18, 1
      %s246 = scalar_lea.vmem %s6, %s245
      %p247 = scmp.lt.s32.totalorder %s18, 1
      %s248 = scalar_select %p247, %s18, 1
      %s249 = smul.addr %s248, 40
      %s250 = smul.addr %s249, 8
      %s251 = scalar_lea.vmem %s0, %s250
      %p252 = scmp.lt.s32.totalorder %s18, 1
      %s253 = scalar_select %p252, %s18, 1
      %s254 = smul.addr %s253, 3
      %s255 = scalar_lea.vmem %s5, %s254
      %p256 = scmp.lt.s32.totalorder %s18, 1
      %s257 = scalar_select %p256, %s18, 1
      %s258 = scalar_lea.vmem %s6, %s257
      %v260 = vld [vmem:[%s251] sm:$0xff]
      %v261 = vld [vmem:[%s251 + $0x8] sm:$0xff]
      %v262 = vld [vmem:[%s251 + $0x10] sm:$0xff]
      %v263 = vld [vmem:[%s251 + $0x18] sm:$0xff]
      %v264 = vld [vmem:[%s251 + $0x20] sm:$0xff]
      %v265 = vld [vmem:[%s251 + $0x28] sm:$0xff]
      %v266 = vld [vmem:[%s251 + $0x30] sm:$0xff]
      %v267 = vld [vmem:[%s251 + $0x38] sm:$0xff]
      %v268 = vld [vmem:[%s251 + $0x40] sm:$0xff]
      %v269 = vld [vmem:[%s251 + $0x48] sm:$0xff]
      %v270 = vld [vmem:[%s251 + $0x50] sm:$0xff]
      %v271 = vld [vmem:[%s251 + $0x58] sm:$0xff]
      %v272 = vld [vmem:[%s251 + $0x60] sm:$0xff]
      %v273 = vld [vmem:[%s251 + $0x68] sm:$0xff]
      %v274 = vld [vmem:[%s251 + $0x70] sm:$0xff]
      %v275 = vld [vmem:[%s251 + $0x78] sm:$0xff]
      %v276 = vld [vmem:[%s251 + $0x80] sm:$0xff]
      %v277 = vld [vmem:[%s251 + $0x88] sm:$0xff]
      %v278 = vld [vmem:[%s251 + $0x90] sm:$0xff]
      %v279 = vld [vmem:[%s251 + $0x98] sm:$0xff]
      %v280 = vld [vmem:[%s251 + $0xa0] sm:$0xff]
      %v281 = vld [vmem:[%s251 + $0xa8] sm:$0xff]
      %v282 = vld [vmem:[%s251 + $0xb0] sm:$0xff]
      %v283 = vld [vmem:[%s251 + $0xb8] sm:$0xff]
      %v284 = vld [vmem:[%s251 + $0xc0] sm:$0xff]
      %v285 = vld [vmem:[%s251 + $0xc8] sm:$0xff]
      %v286 = vld [vmem:[%s251 + $0xd0] sm:$0xff]
      %v287 = vld [vmem:[%s251 + $0xd8] sm:$0xff]
      %v288 = vld [vmem:[%s251 + $0xe0] sm:$0xff]
      %v289 = vld [vmem:[%s251 + $0xe8] sm:$0xff]
      %v290 = vld [vmem:[%s251 + $0xf0] sm:$0xff]
      %v291 = vld [vmem:[%s251 + $0xf8] sm:$0xff]
      %v292 = vld [vmem:[%s251 + $0x100] sm:$0xff]
      %v293 = vld [vmem:[%s251 + $0x108] sm:$0xff]
      %v294 = vld [vmem:[%s251 + $0x110] sm:$0xff]
      %v295 = vld [vmem:[%s251 + $0x118] sm:$0xff]
      %v296 = vld [vmem:[%s251 + $0x120] sm:$0xff]
      %v297 = vld [vmem:[%s251 + $0x128] sm:$0xff]
      %v298 = vld [vmem:[%s251 + $0x130] sm:$0xff]
      %v299 = vld [vmem:[%s251 + $0x138] sm:$0xff]
      %v300 = vld [vmem:[%s4] sm:$0xff]
      %v301 = vld [vmem:[%s4 + $0x8] sm:$0x1]
      %v302 = vld [vmem:[%s3] sm:$0xff]
      %v303 = vld [vmem:[%s3 + $0x8] sm:$0xff]
      %v304 = vld [vmem:[%s3 + $0x10] sm:$0xf]
      %v305 = vlaneseq
      %v306 = vand.u32 %v305, 127
      %v307 = vadd.s32 %v306, 128
      %v308 = vadd.s32 %v306, 256
      %v309 = vlaneseq
      %v310 = vshrl.u32 %v309, 7
      %v311 = vadd.s32 %v310, 8
      %v312 = vmul.u32 %v310, 20
      %v313 = vmul.u32 %v311, 20
      %v314 = vadd.s32 %v312, 2
      %v315 = vadd.s32 %v313, 2
      %vm316 = vcmp.ge.s32.totalorder %v306, %v314
      %vm317 = vcmp.ge.s32.totalorder %v307, %v314
      %vm318 = vcmp.ge.s32.totalorder %v308, %v314
      %vm319 = vcmp.ge.s32.totalorder %v306, %v315
      %vm320 = vcmp.ge.s32.totalorder %v307, %v315
      %vm321 = vcmp.ge.s32.totalorder %v308, %v315
      %v322 = vadd.s32 %v314, 16
      %v323 = vadd.s32 %v315, 16
      %vm324 = vcmp.lt.s32.totalorder %v306, %v322
      %vm325 = vcmp.lt.s32.totalorder %v307, %v322
      %vm326 = vcmp.lt.s32.totalorder %v308, %v322
      %vm327 = vcmp.lt.s32.totalorder %v306, %v323
      %vm328 = vcmp.lt.s32.totalorder %v307, %v323
      %vm329 = vcmp.lt.s32.totalorder %v308, %v323
      %vm330 = vmand %vm316, %vm324
      %vm331 = vmand %vm317, %vm325
      %vm332 = vmand %vm318, %vm326
      %vm333 = vmand %vm319, %vm327
      %vm334 = vmand %vm320, %vm328
      %vm335 = vmand %vm321, %vm329
      %v336 = vsel %vm330, 1, 0
      %v337 = vsel %vm331, 1, 0
      %v338 = vsel %vm332, 1, 0
      %v339 = vsel %vm333, 1, 0
      %v340 = vsel %vm334, 1, 0
      %v341 = vsel %vm335, 1, 0
      %v342 = vcvt.s32.f32 %v336
      %v343 = vcvt.s32.f32 %v337
      %v344 = vcvt.s32.f32 %v338
      %v345 = vcvt.s32.f32 %v339
      %v346 = vcvt.s32.f32 %v340
      %v347 = vcvt.s32.f32 %v341
      %v348 = vadd.s32 %v310, 16
      %v349 = vadd.s32 %v310, 24
      %v350 = vadd.s32 %v310, 32
      %v351 = vadd.s32 %v310, 40
      %v352 = vadd.s32 %v310, 48
      %v353 = vadd.s32 %v310, 56
      %v354 = vadd.s32 %v310, 64
      %v355 = vadd.s32 %v310, 72
      %v356 = vadd.s32 %v310, 80
      %v357 = vadd.s32 %v310, 88
      %v358 = vadd.s32 %v310, 96
      %v359 = vadd.s32 %v310, 104
      %v360 = vadd.s32 %v310, 112
      %v361 = vadd.s32 %v310, 120
      %v362 = vadd.s32 %v310, 128
      %v363 = vadd.s32 %v310, 136
      %v364 = vadd.s32 %v310, 144
      %v365 = vadd.s32 %v310, 152
      %v366 = vadd.s32 %v310, 160
      %v367 = vadd.s32 %v310, 168
      %v368 = vadd.s32 %v310, 176
      %v369 = vadd.s32 %v310, 184
      %v370 = vadd.s32 %v310, 192
      %v371 = vadd.s32 %v310, 200
      %v372 = vadd.s32 %v310, 208
      %v373 = vadd.s32 %v310, 216
      %v374 = vadd.s32 %v310, 224
      %v375 = vadd.s32 %v310, 232
      %v376 = vadd.s32 %v310, 240
      %v377 = vadd.s32 %v310, 248
      %v378 = vadd.s32 %v310, 256
      %v379 = vadd.s32 %v310, 264
      %v380 = vadd.s32 %v310, 272
      %v381 = vadd.s32 %v310, 280
      %v382 = vadd.s32 %v310, 288
      %v383 = vadd.s32 %v310, 296
      %v384 = vadd.s32 %v310, 304
      %v385 = vadd.s32 %v310, 312
      %v386 = vmul.u32 %v306, 20
      %v387 = vadd.s32 %v386, 2
      %vm388 = vcmp.ge.s32.totalorder %v310, %v387
      %vm389 = vcmp.ge.s32.totalorder %v311, %v387
      %vm390 = vcmp.ge.s32.totalorder %v348, %v387
      %vm391 = vcmp.ge.s32.totalorder %v349, %v387
      %vm392 = vcmp.ge.s32.totalorder %v350, %v387
      %vm393 = vcmp.ge.s32.totalorder %v351, %v387
      %vm394 = vcmp.ge.s32.totalorder %v352, %v387
      %vm395 = vcmp.ge.s32.totalorder %v353, %v387
      %vm396 = vcmp.ge.s32.totalorder %v354, %v387
      %vm397 = vcmp.ge.s32.totalorder %v355, %v387
      %vm398 = vcmp.ge.s32.totalorder %v356, %v387
      %vm399 = vcmp.ge.s32.totalorder %v357, %v387
      %vm400 = vcmp.ge.s32.totalorder %v358, %v387
      %vm401 = vcmp.ge.s32.totalorder %v359, %v387
      %vm402 = vcmp.ge.s32.totalorder %v360, %v387
      %vm403 = vcmp.ge.s32.totalorder %v361, %v387
      %vm404 = vcmp.ge.s32.totalorder %v362, %v387
      %vm405 = vcmp.ge.s32.totalorder %v363, %v387
      %vm406 = vcmp.ge.s32.totalorder %v364, %v387
      %vm407 = vcmp.ge.s32.totalorder %v365, %v387
      %vm408 = vcmp.ge.s32.totalorder %v366, %v387
      %vm409 = vcmp.ge.s32.totalorder %v367, %v387
      %vm410 = vcmp.ge.s32.totalorder %v368, %v387
      %vm411 = vcmp.ge.s32.totalorder %v369, %v387
      %vm412 = vcmp.ge.s32.totalorder %v370, %v387
      %vm413 = vcmp.ge.s32.totalorder %v371, %v387
      %vm414 = vcmp.ge.s32.totalorder %v372, %v387
      %vm415 = vcmp.ge.s32.totalorder %v373, %v387
      %vm416 = vcmp.ge.s32.totalorder %v374, %v387
      %vm417 = vcmp.ge.s32.totalorder %v375, %v387
      %vm418 = vcmp.ge.s32.totalorder %v376, %v387
      %vm419 = vcmp.ge.s32.totalorder %v377, %v387
      %vm420 = vcmp.ge.s32.totalorder %v378, %v387
      %vm421 = vcmp.ge.s32.totalorder %v379, %v387
      %vm422 = vcmp.ge.s32.totalorder %v380, %v387
      %vm423 = vcmp.ge.s32.totalorder %v381, %v387
      %vm424 = vcmp.ge.s32.totalorder %v382, %v387
      %vm425 = vcmp.ge.s32.totalorder %v383, %v387
      %vm426 = vcmp.ge.s32.totalorder %v384, %v387
      %vm427 = vcmp.ge.s32.totalorder %v385, %v387
      %v428 = vadd.s32 %v387, 16
      %vm429 = vcmp.lt.s32.totalorder %v310, %v428
      %vm430 = vcmp.lt.s32.totalorder %v311, %v428
      %vm431 = vcmp.lt.s32.totalorder %v348, %v428
      %vm432 = vcmp.lt.s32.totalorder %v349, %v428
      %vm433 = vcmp.lt.s32.totalorder %v350, %v428
      %vm434 = vcmp.lt.s32.totalorder %v351, %v428
      %vm435 = vcmp.lt.s32.totalorder %v352, %v428
      %vm436 = vcmp.lt.s32.totalorder %v353, %v428
      %vm437 = vcmp.lt.s32.totalorder %v354, %v428
      %vm438 = vcmp.lt.s32.totalorder %v355, %v428
      %vm439 = vcmp.lt.s32.totalorder %v356, %v428
      %vm440 = vcmp.lt.s32.totalorder %v357, %v428
      %vm441 = vcmp.lt.s32.totalorder %v358, %v428
      %vm442 = vcmp.lt.s32.totalorder %v359, %v428
      %vm443 = vcmp.lt.s32.totalorder %v360, %v428
      %vm444 = vcmp.lt.s32.totalorder %v361, %v428
      %vm445 = vcmp.lt.s32.totalorder %v362, %v428
      %vm446 = vcmp.lt.s32.totalorder %v363, %v428
      %vm447 = vcmp.lt.s32.totalorder %v364, %v428
      %vm448 = vcmp.lt.s32.totalorder %v365, %v428
      %vm449 = vcmp.lt.s32.totalorder %v366, %v428
      %vm450 = vcmp.lt.s32.totalorder %v367, %v428
      %vm451 = vcmp.lt.s32.totalorder %v368, %v428
      %vm452 = vcmp.lt.s32.totalorder %v369, %v428
      %vm453 = vcmp.lt.s32.totalorder %v370, %v428
      %vm454 = vcmp.lt.s32.totalorder %v371, %v428
      %vm455 = vcmp.lt.s32.totalorder %v372, %v428
      %vm456 = vcmp.lt.s32.totalorder %v373, %v428
      %vm457 = vcmp.lt.s32.totalorder %v374, %v428
      %vm458 = vcmp.lt.s32.totalorder %v375, %v428
      %vm459 = vcmp.lt.s32.totalorder %v376, %v428
      %vm460 = vcmp.lt.s32.totalorder %v377, %v428
      %vm461 = vcmp.lt.s32.totalorder %v378, %v428
      %vm462 = vcmp.lt.s32.totalorder %v379, %v428
      %vm463 = vcmp.lt.s32.totalorder %v380, %v428
      %vm464 = vcmp.lt.s32.totalorder %v381, %v428
      %vm465 = vcmp.lt.s32.totalorder %v382, %v428
      %vm466 = vcmp.lt.s32.totalorder %v383, %v428
      %vm467 = vcmp.lt.s32.totalorder %v384, %v428
      %vm468 = vcmp.lt.s32.totalorder %v385, %v428
      %vm469 = vmand %vm388, %vm429
      %vm470 = vmand %vm389, %vm430
      %vm471 = vmand %vm390, %vm431
      %vm472 = vmand %vm391, %vm432
      %vm473 = vmand %vm392, %vm433
      %vm474 = vmand %vm393, %vm434
      %vm475 = vmand %vm394, %vm435
      %vm476 = vmand %vm395, %vm436
      %vm477 = vmand %vm396, %vm437
      %vm478 = vmand %vm397, %vm438
      %vm479 = vmand %vm398, %vm439
      %vm480 = vmand %vm399, %vm440
      %vm481 = vmand %vm400, %vm441
      %vm482 = vmand %vm401, %vm442
      %vm483 = vmand %vm402, %vm443
      %vm484 = vmand %vm403, %vm444
      %vm485 = vmand %vm404, %vm445
      %vm486 = vmand %vm405, %vm446
      %vm487 = vmand %vm406, %vm447
      %vm488 = vmand %vm407, %vm448
      %vm489 = vmand %vm408, %vm449
      %vm490 = vmand %vm409, %vm450
      %vm491 = vmand %vm410, %vm451
      %vm492 = vmand %vm411, %vm452
      %vm493 = vmand %vm412, %vm453
      %vm494 = vmand %vm413, %vm454
      %vm495 = vmand %vm414, %vm455
      %vm496 = vmand %vm415, %vm456
      %vm497 = vmand %vm416, %vm457
      %vm498 = vmand %vm417, %vm458
      %vm499 = vmand %vm418, %vm459
      %vm500 = vmand %vm419, %vm460
      %vm501 = vmand %vm420, %vm461
      %vm502 = vmand %vm421, %vm462
      %vm503 = vmand %vm422, %vm463
      %vm504 = vmand %vm423, %vm464
      %vm505 = vmand %vm424, %vm465
      %vm506 = vmand %vm425, %vm466
      %vm507 = vmand %vm426, %vm467
      %vm508 = vmand %vm427, %vm468
      %v509 = vsel %vm469, 1, 0
      %v510 = vsel %vm470, 1, 0
      %v511 = vsel %vm471, 1, 0
      %v512 = vsel %vm472, 1, 0
      %v513 = vsel %vm473, 1, 0
      %v514 = vsel %vm474, 1, 0
      %v515 = vsel %vm475, 1, 0
      %v516 = vsel %vm476, 1, 0
      %v517 = vsel %vm477, 1, 0
      %v518 = vsel %vm478, 1, 0
      %v519 = vsel %vm479, 1, 0
      %v520 = vsel %vm480, 1, 0
      %v521 = vsel %vm481, 1, 0
      %v522 = vsel %vm482, 1, 0
      %v523 = vsel %vm483, 1, 0
      %v524 = vsel %vm484, 1, 0
      %v525 = vsel %vm485, 1, 0
      %v526 = vsel %vm486, 1, 0
      %v527 = vsel %vm487, 1, 0
      %v528 = vsel %vm488, 1, 0
      %v529 = vsel %vm489, 1, 0
      %v530 = vsel %vm490, 1, 0
      %v531 = vsel %vm491, 1, 0
      %v532 = vsel %vm492, 1, 0
      %v533 = vsel %vm493, 1, 0
      %v534 = vsel %vm494, 1, 0
      %v535 = vsel %vm495, 1, 0
      %v536 = vsel %vm496, 1, 0
      %v537 = vsel %vm497, 1, 0
      %v538 = vsel %vm498, 1, 0
      %v539 = vsel %vm499, 1, 0
      %v540 = vsel %vm500, 1, 0
      %v541 = vsel %vm501, 1, 0
      %v542 = vsel %vm502, 1, 0
      %v543 = vsel %vm503, 1, 0
      %v544 = vsel %vm504, 1, 0
      %v545 = vsel %vm505, 1, 0
      %v546 = vsel %vm506, 1, 0
      %v547 = vsel %vm507, 1, 0
      %v548 = vsel %vm508, 1, 0
      %v549 = vcvt.s32.f32 %v509
      %v550 = vcvt.s32.f32 %v510
      %v551 = vcvt.s32.f32 %v511
      %v552 = vcvt.s32.f32 %v512
      %v553 = vcvt.s32.f32 %v513
      %v554 = vcvt.s32.f32 %v514
      %v555 = vcvt.s32.f32 %v515
      %v556 = vcvt.s32.f32 %v516
      %v557 = vcvt.s32.f32 %v517
      %v558 = vcvt.s32.f32 %v518
      %v559 = vcvt.s32.f32 %v519
      %v560 = vcvt.s32.f32 %v520
      %v561 = vcvt.s32.f32 %v521
      %v562 = vcvt.s32.f32 %v522
      %v563 = vcvt.s32.f32 %v523
      %v564 = vcvt.s32.f32 %v524
      %v565 = vcvt.s32.f32 %v525
      %v566 = vcvt.s32.f32 %v526
      %v567 = vcvt.s32.f32 %v527
      %v568 = vcvt.s32.f32 %v528
      %v569 = vcvt.s32.f32 %v529
      %v570 = vcvt.s32.f32 %v530
      %v571 = vcvt.s32.f32 %v531
      %v572 = vcvt.s32.f32 %v532
      %v573 = vcvt.s32.f32 %v533
      %v574 = vcvt.s32.f32 %v534
      %v575 = vcvt.s32.f32 %v535
      %v576 = vcvt.s32.f32 %v536
      %v577 = vcvt.s32.f32 %v537
      %v578 = vcvt.s32.f32 %v538
      %v579 = vcvt.s32.f32 %v539
      %v580 = vcvt.s32.f32 %v540
      %v581 = vcvt.s32.f32 %v541
      %v582 = vcvt.s32.f32 %v542
      %v583 = vcvt.s32.f32 %v543
      %v584 = vcvt.s32.f32 %v544
      %v585 = vcvt.s32.f32 %v545
      %v586 = vcvt.s32.f32 %v546
      %v587 = vcvt.s32.f32 %v547
      %v588 = vcvt.s32.f32 %v548
      %v589 = vld [vmem:[%s1] sm:$0xf]
      %v590 = vld [vmem:[%s1 + $0x4] sm:$0xf]
      %v591 = vld [vmem:[%s1 + $0x8] sm:$0xf]
      %v592 = vld [vmem:[%s1 + $0xc] sm:$0xf]
      %v593 = vld [vmem:[%s1 + $0x10] sm:$0xf]
      %v594 = vld [vmem:[%s1 + $0x14] sm:$0xf]
      %v595 = vld [vmem:[%s1 + $0x18] sm:$0xf]
      %v596 = vld [vmem:[%s1 + $0x1c] sm:$0xf]
      %v597 = vld [vmem:[%s1 + $0x20] sm:$0xf]
      %v598 = vld [vmem:[%s1 + $0x24] sm:$0xf]
      %v599 = vld [vmem:[%s1 + $0x28] sm:$0xf]
      %v600 = vld [vmem:[%s1 + $0x2c] sm:$0xf]
      %v601 = vld [vmem:[%s1 + $0x30] sm:$0x3]
      %v603 = vrot.slane %v299, 6
      %vm644 = vcmask 1041408
      %v645 = vrot.slane %v260, 6
      %v646 = vrot.slane %v261, 6
      %v647 = vsel %vm644, %v645, %v646
      %v648 = vrot.slane %v262, 6
      %v649 = vsel %vm644, %v646, %v648
      %v650 = vrot.slane %v263, 6
      %v651 = vsel %vm644, %v648, %v650
      %v652 = vrot.slane %v264, 6
      %v653 = vsel %vm644, %v650, %v652
      %v654 = vrot.slane %v265, 6
      %v655 = vsel %vm644, %v652, %v654
      %v656 = vrot.slane %v266, 6
      %v657 = vsel %vm644, %v654, %v656
      %v658 = vrot.slane %v267, 6
      %v659 = vsel %vm644, %v656, %v658
      %v660 = vrot.slane %v268, 6
      %v661 = vsel %vm644, %v658, %v660
      %v662 = vrot.slane %v269, 6
      %v663 = vsel %vm644, %v660, %v662
      %v664 = vrot.slane %v270, 6
      %v665 = vsel %vm644, %v662, %v664
      %v666 = vrot.slane %v271, 6
      %v667 = vsel %vm644, %v664, %v666
      %v668 = vrot.slane %v272, 6
      %v669 = vsel %vm644, %v666, %v668
      %v670 = vrot.slane %v273, 6
      %v671 = vsel %vm644, %v668, %v670
      %v672 = vrot.slane %v274, 6
      %v673 = vsel %vm644, %v670, %v672
      %v674 = vrot.slane %v275, 6
      %v675 = vsel %vm644, %v672, %v674
      %v676 = vrot.slane %v276, 6
      %v677 = vsel %vm644, %v674, %v676
      %v678 = vrot.slane %v277, 6
      %v679 = vsel %vm644, %v676, %v678
      %v680 = vrot.slane %v278, 6
      %v681 = vsel %vm644, %v678, %v680
      %v682 = vrot.slane %v279, 6
      %v683 = vsel %vm644, %v680, %v682
      %v684 = vrot.slane %v280, 6
      %v685 = vsel %vm644, %v682, %v684
      %v686 = vrot.slane %v281, 6
      %v687 = vsel %vm644, %v684, %v686
      %v688 = vrot.slane %v282, 6
      %v689 = vsel %vm644, %v686, %v688
      %v690 = vrot.slane %v283, 6
      %v691 = vsel %vm644, %v688, %v690
      %v692 = vrot.slane %v284, 6
      %v693 = vsel %vm644, %v690, %v692
      %v694 = vrot.slane %v285, 6
      %v695 = vsel %vm644, %v692, %v694
      %v696 = vrot.slane %v286, 6
      %v697 = vsel %vm644, %v694, %v696
      %v698 = vrot.slane %v287, 6
      %v699 = vsel %vm644, %v696, %v698
      %v700 = vrot.slane %v288, 6
      %v701 = vsel %vm644, %v698, %v700
      %v702 = vrot.slane %v289, 6
      %v703 = vsel %vm644, %v700, %v702
      %v704 = vrot.slane %v290, 6
      %v705 = vsel %vm644, %v702, %v704
      %v706 = vrot.slane %v291, 6
      %v707 = vsel %vm644, %v704, %v706
      %v708 = vrot.slane %v292, 6
      %v709 = vsel %vm644, %v706, %v708
      %v710 = vrot.slane %v293, 6
      %v711 = vsel %vm644, %v708, %v710
      %v712 = vrot.slane %v294, 6
      %v713 = vsel %vm644, %v710, %v712
      %v714 = vrot.slane %v295, 6
      %v715 = vsel %vm644, %v712, %v714
      %v716 = vrot.slane %v296, 6
      %v717 = vsel %vm644, %v714, %v716
      %v718 = vrot.slane %v297, 6
      %v719 = vsel %vm644, %v716, %v718
      %v720 = vrot.slane %v298, 6
      %v721 = vsel %vm644, %v718, %v720
      %v722 = vsel %vm644, %v720, %v603
      %v763 = vsel %vm644, %v603, %v645
      %v764 = vrot.slane %v299, 7
      %vm766 = vcmask 1040384
      %v767 = vrot.slane %v260, 7
      %v768 = vrot.slane %v261, 7
      %v769 = vsel %vm766, %v767, %v768
      %v770 = vrot.slane %v262, 7
      %v771 = vsel %vm766, %v768, %v770
      %v772 = vrot.slane %v263, 7
      %v773 = vsel %vm766, %v770, %v772
      %v774 = vrot.slane %v264, 7
      %v775 = vsel %vm766, %v772, %v774
      %v776 = vrot.slane %v265, 7
      %v777 = vsel %vm766, %v774, %v776
      %v778 = vrot.slane %v266, 7
      %v779 = vsel %vm766, %v776, %v778
      %v780 = vrot.slane %v267, 7
      %v781 = vsel %vm766, %v778, %v780
      %v782 = vrot.slane %v268, 7
      %v783 = vsel %vm766, %v780, %v782
      %v784 = vrot.slane %v269, 7
      %v785 = vsel %vm766, %v782, %v784
      %v786 = vrot.slane %v270, 7
      %v787 = vsel %vm766, %v784, %v786
      %v788 = vrot.slane %v271, 7
      %v789 = vsel %vm766, %v786, %v788
      %v790 = vrot.slane %v272, 7
      %v791 = vsel %vm766, %v788, %v790
      %v792 = vrot.slane %v273, 7
      %v793 = vsel %vm766, %v790, %v792
      %v794 = vrot.slane %v274, 7
      %v795 = vsel %vm766, %v792, %v794
      %v796 = vrot.slane %v275, 7
      %v797 = vsel %vm766, %v794, %v796
      %v798 = vrot.slane %v276, 7
      %v799 = vsel %vm766, %v796, %v798
      %v800 = vrot.slane %v277, 7
      %v801 = vsel %vm766, %v798, %v800
      %v802 = vrot.slane %v278, 7
      %v803 = vsel %vm766, %v800, %v802
      %v804 = vrot.slane %v279, 7
      %v805 = vsel %vm766, %v802, %v804
      %v806 = vrot.slane %v280, 7
      %v807 = vsel %vm766, %v804, %v806
      %v808 = vrot.slane %v281, 7
      %v809 = vsel %vm766, %v806, %v808
      %v810 = vrot.slane %v282, 7
      %v811 = vsel %vm766, %v808, %v810
      %v812 = vrot.slane %v283, 7
      %v813 = vsel %vm766, %v810, %v812
      %v814 = vrot.slane %v284, 7
      %v815 = vsel %vm766, %v812, %v814
      %v816 = vrot.slane %v285, 7
      %v817 = vsel %vm766, %v814, %v816
      %v818 = vrot.slane %v286, 7
      %v819 = vsel %vm766, %v816, %v818
      %v820 = vrot.slane %v287, 7
      %v821 = vsel %vm766, %v818, %v820
      %v822 = vrot.slane %v288, 7
      %v823 = vsel %vm766, %v820, %v822
      %v824 = vrot.slane %v289, 7
      %v825 = vsel %vm766, %v822, %v824
      %v826 = vrot.slane %v290, 7
      %v827 = vsel %vm766, %v824, %v826
      %v828 = vrot.slane %v291, 7
      %v829 = vsel %vm766, %v826, %v828
      %v830 = vrot.slane %v292, 7
      %v831 = vsel %vm766, %v828, %v830
      %v832 = vrot.slane %v293, 7
      %v833 = vsel %vm766, %v830, %v832
      %v834 = vrot.slane %v294, 7
      %v835 = vsel %vm766, %v832, %v834
      %v836 = vrot.slane %v295, 7
      %v837 = vsel %vm766, %v834, %v836
      %v838 = vrot.slane %v296, 7
      %v839 = vsel %vm766, %v836, %v838
      %v840 = vrot.slane %v297, 7
      %v841 = vsel %vm766, %v838, %v840
      %v842 = vrot.slane %v298, 7
      %v843 = vsel %vm766, %v840, %v842
      %v844 = vsel %vm766, %v842, %v764
      %v846 = vsel %vm766, %v764, %v767
      %vm847 = vcmask 1046528
      %v848 = vrot.slane %v260, 1
      %v849 = vrot.slane %v261, 1
      %v850 = vsel %vm847, %v848, %v849
      %v851 = vrot.slane %v262, 1
      %v852 = vsel %vm847, %v849, %v851
      %v853 = vrot.slane %v263, 1
      %v854 = vsel %vm847, %v851, %v853
      %v855 = vrot.slane %v264, 1
      %v856 = vsel %vm847, %v853, %v855
      %v857 = vrot.slane %v265, 1
      %v858 = vsel %vm847, %v855, %v857
      %v859 = vrot.slane %v266, 1
      %v860 = vsel %vm847, %v857, %v859
      %v861 = vrot.slane %v267, 1
      %v862 = vsel %vm847, %v859, %v861
      %v863 = vrot.slane %v268, 1
      %v864 = vsel %vm847, %v861, %v863
      %v865 = vrot.slane %v269, 1
      %v866 = vsel %vm847, %v863, %v865
      %v867 = vrot.slane %v270, 1
      %v868 = vsel %vm847, %v865, %v867
      %v869 = vrot.slane %v271, 1
      %v870 = vsel %vm847, %v867, %v869
      %v871 = vrot.slane %v272, 1
      %v872 = vsel %vm847, %v869, %v871
      %v873 = vrot.slane %v273, 1
      %v874 = vsel %vm847, %v871, %v873
      %v875 = vrot.slane %v274, 1
      %v876 = vsel %vm847, %v873, %v875
      %v877 = vrot.slane %v275, 1
      %v878 = vsel %vm847, %v875, %v877
      %v879 = vrot.slane %v276, 1
      %v880 = vsel %vm847, %v877, %v879
      %v881 = vrot.slane %v277, 1
      %v882 = vsel %vm847, %v879, %v881
      %v883 = vrot.slane %v278, 1
      %v884 = vsel %vm847, %v881, %v883
      %v885 = vrot.slane %v279, 1
      %v886 = vsel %vm847, %v883, %v885
      %v887 = vrot.slane %v280, 1
      %v888 = vsel %vm847, %v885, %v887
      %v889 = vrot.slane %v281, 1
      %v890 = vsel %vm847, %v887, %v889
      %v891 = vrot.slane %v282, 1
      %v892 = vsel %vm847, %v889, %v891
      %v893 = vrot.slane %v283, 1
      %v894 = vsel %vm847, %v891, %v893
      %v895 = vrot.slane %v284, 1
      %v896 = vsel %vm847, %v893, %v895
      %v897 = vrot.slane %v285, 1
      %v898 = vsel %vm847, %v895, %v897
      %v899 = vrot.slane %v286, 1
      %v900 = vsel %vm847, %v897, %v899
      %v901 = vrot.slane %v287, 1
      %v902 = vsel %vm847, %v899, %v901
      %v903 = vrot.slane %v288, 1
      %v904 = vsel %vm847, %v901, %v903
      %v905 = vrot.slane %v289, 1
      %v906 = vsel %vm847, %v903, %v905
      %v907 = vrot.slane %v290, 1
      %v908 = vsel %vm847, %v905, %v907
      %v909 = vrot.slane %v291, 1
      %v910 = vsel %vm847, %v907, %v909
      %v911 = vrot.slane %v292, 1
      %v912 = vsel %vm847, %v909, %v911
      %v913 = vrot.slane %v293, 1
      %v914 = vsel %vm847, %v911, %v913
      %v915 = vrot.slane %v294, 1
      %v916 = vsel %vm847, %v913, %v915
      %v917 = vrot.slane %v295, 1
      %v918 = vsel %vm847, %v915, %v917
      %v919 = vrot.slane %v296, 1
      %v920 = vsel %vm847, %v917, %v919
      %v921 = vrot.slane %v297, 1
      %v922 = vsel %vm847, %v919, %v921
      %v923 = vrot.slane %v298, 1
      %v924 = vsel %vm847, %v921, %v923
      %v925 = vrot.slane %v299, 1
      %v926 = vsel %vm847, %v923, %v925
      %v929 = vsel %vm847, %v925, %v848
      %vm930 = vcmask 1045504
      %v931 = vrot.slane %v260, 2
      %v932 = vrot.slane %v261, 2
      %v933 = vsel %vm930, %v931, %v932
      %v934 = vrot.slane %v262, 2
      %v935 = vsel %vm930, %v932, %v934
      %v936 = vrot.slane %v263, 2
      %v937 = vsel %vm930, %v934, %v936
      %v938 = vrot.slane %v264, 2
      %v939 = vsel %vm930, %v936, %v938
      %v940 = vrot.slane %v265, 2
      %v941 = vsel %vm930, %v938, %v940
      %v942 = vrot.slane %v266, 2
      %v943 = vsel %vm930, %v940, %v942
      %v944 = vrot.slane %v267, 2
      %v945 = vsel %vm930, %v942, %v944
      %v946 = vrot.slane %v268, 2
      %v947 = vsel %vm930, %v944, %v946
      %v948 = vrot.slane %v269, 2
      %v949 = vsel %vm930, %v946, %v948
      %v950 = vrot.slane %v270, 2
      %v951 = vsel %vm930, %v948, %v950
      %v952 = vrot.slane %v271, 2
      %v953 = vsel %vm930, %v950, %v952
      %v954 = vrot.slane %v272, 2
      %v955 = vsel %vm930, %v952, %v954
      %v956 = vrot.slane %v273, 2
      %v957 = vsel %vm930, %v954, %v956
      %v958 = vrot.slane %v274, 2
      %v959 = vsel %vm930, %v956, %v958
      %v960 = vrot.slane %v275, 2
      %v961 = vsel %vm930, %v958, %v960
      %v962 = vrot.slane %v276, 2
      %v963 = vsel %vm930, %v960, %v962
      %v964 = vrot.slane %v277, 2
      %v965 = vsel %vm930, %v962, %v964
      %v966 = vrot.slane %v278, 2
      %v967 = vsel %vm930, %v964, %v966
      %v968 = vrot.slane %v279, 2
      %v969 = vsel %vm930, %v966, %v968
      %v970 = vrot.slane %v280, 2
      %v971 = vsel %vm930, %v968, %v970
      %v972 = vrot.slane %v281, 2
      %v973 = vsel %vm930, %v970, %v972
      %v974 = vrot.slane %v282, 2
      %v975 = vsel %vm930, %v972, %v974
      %v976 = vrot.slane %v283, 2
      %v977 = vsel %vm930, %v974, %v976
      %v978 = vrot.slane %v284, 2
      %v979 = vsel %vm930, %v976, %v978
      %v980 = vrot.slane %v285, 2
      %v981 = vsel %vm930, %v978, %v980
      %v982 = vrot.slane %v286, 2
      %v983 = vsel %vm930, %v980, %v982
      %v984 = vrot.slane %v287, 2
      %v985 = vsel %vm930, %v982, %v984
      %v986 = vrot.slane %v288, 2
      %v987 = vsel %vm930, %v984, %v986
      %v988 = vrot.slane %v289, 2
      %v989 = vsel %vm930, %v986, %v988
      %v990 = vrot.slane %v290, 2
      %v991 = vsel %vm930, %v988, %v990
      %v992 = vrot.slane %v291, 2
      %v993 = vsel %vm930, %v990, %v992
      %v994 = vrot.slane %v292, 2
      %v995 = vsel %vm930, %v992, %v994
      %v996 = vrot.slane %v293, 2
      %v997 = vsel %vm930, %v994, %v996
      %v998 = vrot.slane %v294, 2
      %v999 = vsel %vm930, %v996, %v998
      %v1000 = vrot.slane %v295, 2
      %v1001 = vsel %vm930, %v998, %v1000
      %v1002 = vrot.slane %v296, 2
      %v1003 = vsel %vm930, %v1000, %v1002
      %v1004 = vrot.slane %v297, 2
      %v1005 = vsel %vm930, %v1002, %v1004
      %v1006 = vrot.slane %v298, 2
      %v1007 = vsel %vm930, %v1004, %v1006
      %v1008 = vrot.slane %v299, 2
      %v1009 = vsel %vm930, %v1006, %v1008
      %v1012 = vsel %vm930, %v1008, %v931
      %1014 = vrot.lane.b32.xlu0 %v846, 20
      %v1015 = vpop.permute.xlu0 %1014
      %1016 = vrot.lane.b32.xlu0 %v769, 20
      %v1017 = vpop.permute.xlu0 %1016
      %1018 = vrot.lane.b32.xlu0 %v771, 20
      %v1019 = vpop.permute.xlu0 %1018
      %1020 = vrot.lane.b32.xlu0 %v773, 20
      %v1021 = vpop.permute.xlu0 %1020
      %1022 = vrot.lane.b32.xlu0 %v775, 20
      %v1023 = vpop.permute.xlu0 %1022
      %1024 = vrot.lane.b32.xlu0 %v777, 20
      %v1025 = vpop.permute.xlu0 %1024
      %1026 = vrot.lane.b32.xlu0 %v779, 20
      %v1027 = vpop.permute.xlu0 %1026
      %1028 = vrot.lane.b32.xlu0 %v781, 20
      %v1029 = vpop.permute.xlu0 %1028
      %1030 = vrot.lane.b32.xlu0 %v783, 20
      %v1031 = vpop.permute.xlu0 %1030
      %1032 = vrot.lane.b32.xlu0 %v785, 20
      %v1033 = vpop.permute.xlu0 %1032
      %1034 = vrot.lane.b32.xlu0 %v787, 20
      %v1035 = vpop.permute.xlu0 %1034
      %1036 = vrot.lane.b32.xlu0 %v789, 20
      %v1037 = vpop.permute.xlu0 %1036
      %1038 = vrot.lane.b32.xlu0 %v791, 20
      %v1039 = vpop.permute.xlu0 %1038
      %1040 = vrot.lane.b32.xlu0 %v793, 20
      %v1041 = vpop.permute.xlu0 %1040
      %1042 = vrot.lane.b32.xlu0 %v795, 20
      %v1043 = vpop.permute.xlu0 %1042
      %1044 = vrot.lane.b32.xlu0 %v797, 20
      %v1045 = vpop.permute.xlu0 %1044
      %1046 = vrot.lane.b32.xlu0 %v799, 20
      %v1047 = vpop.permute.xlu0 %1046
      %1048 = vrot.lane.b32.xlu0 %v801, 20
      %v1049 = vpop.permute.xlu0 %1048
      %1050 = vrot.lane.b32.xlu0 %v803, 20
      %v1051 = vpop.permute.xlu0 %1050
      %1052 = vrot.lane.b32.xlu0 %v805, 20
      %v1053 = vpop.permute.xlu0 %1052
      %1054 = vrot.lane.b32.xlu0 %v807, 20
      %v1055 = vpop.permute.xlu0 %1054
      %1056 = vrot.lane.b32.xlu0 %v809, 20
      %v1057 = vpop.permute.xlu0 %1056
      %1058 = vrot.lane.b32.xlu0 %v811, 20
      %v1059 = vpop.permute.xlu0 %1058
      %1060 = vrot.lane.b32.xlu0 %v813, 20
      %v1061 = vpop.permute.xlu0 %1060
      %1062 = vrot.lane.b32.xlu0 %v815, 20
      %v1063 = vpop.permute.xlu0 %1062
      %1064 = vrot.lane.b32.xlu0 %v817, 20
      %v1065 = vpop.permute.xlu0 %1064
      %1066 = vrot.lane.b32.xlu0 %v819, 20
      %v1067 = vpop.permute.xlu0 %1066
      %1068 = vrot.lane.b32.xlu0 %v821, 20
      %v1069 = vpop.permute.xlu0 %1068
      %1070 = vrot.lane.b32.xlu0 %v823, 20
      %v1071 = vpop.permute.xlu0 %1070
      %1072 = vrot.lane.b32.xlu0 %v825, 20
      %v1073 = vpop.permute.xlu0 %1072
      %1074 = vrot.lane.b32.xlu0 %v827, 20
      %v1075 = vpop.permute.xlu0 %1074
      %1076 = vrot.lane.b32.xlu0 %v829, 20
      %v1077 = vpop.permute.xlu0 %1076
      %1078 = vrot.lane.b32.xlu0 %v831, 20
      %v1079 = vpop.permute.xlu0 %1078
      %1080 = vrot.lane.b32.xlu0 %v833, 20
      %v1081 = vpop.permute.xlu0 %1080
      %1082 = vrot.lane.b32.xlu0 %v835, 20
      %v1083 = vpop.permute.xlu0 %1082
      %1084 = vrot.lane.b32.xlu0 %v837, 20
      %v1085 = vpop.permute.xlu0 %1084
      %1086 = vrot.lane.b32.xlu0 %v839, 20
      %v1087 = vpop.permute.xlu0 %1086
      %1088 = vrot.lane.b32.xlu0 %v841, 20
      %v1089 = vpop.permute.xlu0 %1088
      %1090 = vrot.lane.b32.xlu0 %v843, 20
      %v1091 = vpop.permute.xlu0 %1090
      %1092 = vrot.lane.b32.xlu0 %v844, 20
      %v1093 = vpop.permute.xlu0 %1092
      %1134 = vrot.lane.b32.xlu0 %v260, 40
      %v1135 = vpop.permute.xlu0 %1134
      %1136 = vrot.lane.b32.xlu0 %v261, 40
      %v1137 = vpop.permute.xlu0 %1136
      %1138 = vrot.lane.b32.xlu0 %v262, 40
      %v1139 = vpop.permute.xlu0 %1138
      %1140 = vrot.lane.b32.xlu0 %v263, 40
      %v1141 = vpop.permute.xlu0 %1140
      %1142 = vrot.lane.b32.xlu0 %v264, 40
      %v1143 = vpop.permute.xlu0 %1142
      %1144 = vrot.lane.b32.xlu0 %v265, 40
      %v1145 = vpop.permute.xlu0 %1144
      %1146 = vrot.lane.b32.xlu0 %v266, 40
      %v1147 = vpop.permute.xlu0 %1146
      %1148 = vrot.lane.b32.xlu0 %v267, 40
      %v1149 = vpop.permute.xlu0 %1148
      %1150 = vrot.lane.b32.xlu0 %v268, 40
      %v1151 = vpop.permute.xlu0 %1150
      %1152 = vrot.lane.b32.xlu0 %v269, 40
      %v1153 = vpop.permute.xlu0 %1152
      %1154 = vrot.lane.b32.xlu0 %v270, 40
      %v1155 = vpop.permute.xlu0 %1154
      %1156 = vrot.lane.b32.xlu0 %v271, 40
      %v1157 = vpop.permute.xlu0 %1156
      %1158 = vrot.lane.b32.xlu0 %v272, 40
      %v1159 = vpop.permute.xlu0 %1158
      %1160 = vrot.lane.b32.xlu0 %v273, 40
      %v1161 = vpop.permute.xlu0 %1160
      %1162 = vrot.lane.b32.xlu0 %v274, 40
      %v1163 = vpop.permute.xlu0 %1162
      %1164 = vrot.lane.b32.xlu0 %v275, 40
      %v1165 = vpop.permute.xlu0 %1164
      %1166 = vrot.lane.b32.xlu0 %v276, 40
      %v1167 = vpop.permute.xlu0 %1166
      %1168 = vrot.lane.b32.xlu0 %v277, 40
      %v1169 = vpop.permute.xlu0 %1168
      %1170 = vrot.lane.b32.xlu0 %v278, 40
      %v1171 = vpop.permute.xlu0 %1170
      %1172 = vrot.lane.b32.xlu0 %v279, 40
      %v1173 = vpop.permute.xlu0 %1172
      %1174 = vrot.lane.b32.xlu0 %v280, 40
      %v1175 = vpop.permute.xlu0 %1174
      %1176 = vrot.lane.b32.xlu0 %v281, 40
      %v1177 = vpop.permute.xlu0 %1176
      %1178 = vrot.lane.b32.xlu0 %v282, 40
      %v1179 = vpop.permute.xlu0 %1178
      %1180 = vrot.lane.b32.xlu0 %v283, 40
      %v1181 = vpop.permute.xlu0 %1180
      %1182 = vrot.lane.b32.xlu0 %v284, 40
      %v1183 = vpop.permute.xlu0 %1182
      %1184 = vrot.lane.b32.xlu0 %v285, 40
      %v1185 = vpop.permute.xlu0 %1184
      %1186 = vrot.lane.b32.xlu0 %v286, 40
      %v1187 = vpop.permute.xlu0 %1186
      %1188 = vrot.lane.b32.xlu0 %v287, 40
      %v1189 = vpop.permute.xlu0 %1188
      %1190 = vrot.lane.b32.xlu0 %v288, 40
      %v1191 = vpop.permute.xlu0 %1190
      %1192 = vrot.lane.b32.xlu0 %v289, 40
      %v1193 = vpop.permute.xlu0 %1192
      %1194 = vrot.lane.b32.xlu0 %v290, 40
      %v1195 = vpop.permute.xlu0 %1194
      %1196 = vrot.lane.b32.xlu0 %v291, 40
      %v1197 = vpop.permute.xlu0 %1196
      %1198 = vrot.lane.b32.xlu0 %v292, 40
      %v1199 = vpop.permute.xlu0 %1198
      %1200 = vrot.lane.b32.xlu0 %v293, 40
      %v1201 = vpop.permute.xlu0 %1200
      %1202 = vrot.lane.b32.xlu0 %v294, 40
      %v1203 = vpop.permute.xlu0 %1202
      %1204 = vrot.lane.b32.xlu0 %v295, 40
      %v1205 = vpop.permute.xlu0 %1204
      %1206 = vrot.lane.b32.xlu0 %v296, 40
      %v1207 = vpop.permute.xlu0 %1206
      %1208 = vrot.lane.b32.xlu0 %v297, 40
      %v1209 = vpop.permute.xlu0 %1208
      %1210 = vrot.lane.b32.xlu0 %v298, 40
      %v1211 = vpop.permute.xlu0 %1210
      %1212 = vrot.lane.b32.xlu0 %v299, 40
      %v1213 = vpop.permute.xlu0 %1212
      %1255 = vrot.lane.b32.xlu0 %v850, 60
      %v1256 = vpop.permute.xlu0 %1255
      %1257 = vrot.lane.b32.xlu0 %v852, 60
      %v1258 = vpop.permute.xlu0 %1257
      %1259 = vrot.lane.b32.xlu0 %v854, 60
      %v1260 = vpop.permute.xlu0 %1259
      %1261 = vrot.lane.b32.xlu0 %v856, 60
      %v1262 = vpop.permute.xlu0 %1261
      %1263 = vrot.lane.b32.xlu0 %v858, 60
      %v1264 = vpop.permute.xlu0 %1263
      %1265 = vrot.lane.b32.xlu0 %v860, 60
      %v1266 = vpop.permute.xlu0 %1265
      %1267 = vrot.lane.b32.xlu0 %v862, 60
      %v1268 = vpop.permute.xlu0 %1267
      %1269 = vrot.lane.b32.xlu0 %v864, 60
      %v1270 = vpop.permute.xlu0 %1269
      %1271 = vrot.lane.b32.xlu0 %v866, 60
      %v1272 = vpop.permute.xlu0 %1271
      %1273 = vrot.lane.b32.xlu0 %v868, 60
      %v1274 = vpop.permute.xlu0 %1273
      %1275 = vrot.lane.b32.xlu0 %v870, 60
      %v1276 = vpop.permute.xlu0 %1275
      %1277 = vrot.lane.b32.xlu0 %v872, 60
      %v1278 = vpop.permute.xlu0 %1277
      %1279 = vrot.lane.b32.xlu0 %v874, 60
      %v1280 = vpop.permute.xlu0 %1279
      %1281 = vrot.lane.b32.xlu0 %v876, 60
      %v1282 = vpop.permute.xlu0 %1281
      %1283 = vrot.lane.b32.xlu0 %v878, 60
      %v1284 = vpop.permute.xlu0 %1283
      %1285 = vrot.lane.b32.xlu0 %v880, 60
      %v1286 = vpop.permute.xlu0 %1285
      %1287 = vrot.lane.b32.xlu0 %v882, 60
      %v1288 = vpop.permute.xlu0 %1287
      %1289 = vrot.lane.b32.xlu0 %v884, 60
      %v1290 = vpop.permute.xlu0 %1289
      %1291 = vrot.lane.b32.xlu0 %v886, 60
      %v1292 = vpop.permute.xlu0 %1291
      %1293 = vrot.lane.b32.xlu0 %v888, 60
      %v1294 = vpop.permute.xlu0 %1293
      %1295 = vrot.lane.b32.xlu0 %v890, 60
      %v1296 = vpop.permute.xlu0 %1295
      %1297 = vrot.lane.b32.xlu0 %v892, 60
      %v1298 = vpop.permute.xlu0 %1297
      %1299 = vrot.lane.b32.xlu0 %v894, 60
      %v1300 = vpop.permute.xlu0 %1299
      %1301 = vrot.lane.b32.xlu0 %v896, 60
      %v1302 = vpop.permute.xlu0 %1301
      %1303 = vrot.lane.b32.xlu0 %v898, 60
      %v1304 = vpop.permute.xlu0 %1303
      %1305 = vrot.lane.b32.xlu0 %v900, 60
      %v1306 = vpop.permute.xlu0 %1305
      %1307 = vrot.lane.b32.xlu0 %v902, 60
      %v1308 = vpop.permute.xlu0 %1307
      %1309 = vrot.lane.b32.xlu0 %v904, 60
      %v1310 = vpop.permute.xlu0 %1309
      %1311 = vrot.lane.b32.xlu0 %v906, 60
      %v1312 = vpop.permute.xlu0 %1311
      %1313 = vrot.lane.b32.xlu0 %v908, 60
      %v1314 = vpop.permute.xlu0 %1313
      %1315 = vrot.lane.b32.xlu0 %v910, 60
      %v1316 = vpop.permute.xlu0 %1315
      %1317 = vrot.lane.b32.xlu0 %v912, 60
      %v1318 = vpop.permute.xlu0 %1317
      %1319 = vrot.lane.b32.xlu0 %v914, 60
      %v1320 = vpop.permute.xlu0 %1319
      %1321 = vrot.lane.b32.xlu0 %v916, 60
      %v1322 = vpop.permute.xlu0 %1321
      %1323 = vrot.lane.b32.xlu0 %v918, 60
      %v1324 = vpop.permute.xlu0 %1323
      %1325 = vrot.lane.b32.xlu0 %v920, 60
      %v1326 = vpop.permute.xlu0 %1325
      %1327 = vrot.lane.b32.xlu0 %v922, 60
      %v1328 = vpop.permute.xlu0 %1327
      %1329 = vrot.lane.b32.xlu0 %v924, 60
      %v1330 = vpop.permute.xlu0 %1329
      %1331 = vrot.lane.b32.xlu0 %v926, 60
      %v1332 = vpop.permute.xlu0 %1331
      %1333 = vrot.lane.b32.xlu0 %v929, 60
      %v1334 = vpop.permute.xlu0 %1333
      %1376 = vrot.lane.b32.xlu0 %v933, 80
      %v1377 = vpop.permute.xlu0 %1376
      %1378 = vrot.lane.b32.xlu0 %v935, 80
      %v1379 = vpop.permute.xlu0 %1378
      %1380 = vrot.lane.b32.xlu0 %v937, 80
      %v1381 = vpop.permute.xlu0 %1380
      %1382 = vrot.lane.b32.xlu0 %v939, 80
      %v1383 = vpop.permute.xlu0 %1382
      %1384 = vrot.lane.b32.xlu0 %v941, 80
      %v1385 = vpop.permute.xlu0 %1384
      %1386 = vrot.lane.b32.xlu0 %v943, 80
      %v1387 = vpop.permute.xlu0 %1386
      %1388 = vrot.lane.b32.xlu0 %v945, 80
      %v1389 = vpop.permute.xlu0 %1388
      %1390 = vrot.lane.b32.xlu0 %v947, 80
      %v1391 = vpop.permute.xlu0 %1390
      %1392 = vrot.lane.b32.xlu0 %v949, 80
      %v1393 = vpop.permute.xlu0 %1392
      %1394 = vrot.lane.b32.xlu0 %v951, 80
      %v1395 = vpop.permute.xlu0 %1394
      %1396 = vrot.lane.b32.xlu0 %v953, 80
      %v1397 = vpop.permute.xlu0 %1396
      %1398 = vrot.lane.b32.xlu0 %v955, 80
      %v1399 = vpop.permute.xlu0 %1398
      %1400 = vrot.lane.b32.xlu0 %v957, 80
      %v1401 = vpop.permute.xlu0 %1400
      %1402 = vrot.lane.b32.xlu0 %v959, 80
      %v1403 = vpop.permute.xlu0 %1402
      %1404 = vrot.lane.b32.xlu0 %v961, 80
      %v1405 = vpop.permute.xlu0 %1404
      %1406 = vrot.lane.b32.xlu0 %v963, 80
      %v1407 = vpop.permute.xlu0 %1406
      %1408 = vrot.lane.b32.xlu0 %v965, 80
      %v1409 = vpop.permute.xlu0 %1408
      %1410 = vrot.lane.b32.xlu0 %v967, 80
      %v1411 = vpop.permute.xlu0 %1410
      %1412 = vrot.lane.b32.xlu0 %v969, 80
      %v1413 = vpop.permute.xlu0 %1412
      %1414 = vrot.lane.b32.xlu0 %v971, 80
      %v1415 = vpop.permute.xlu0 %1414
      %1416 = vrot.lane.b32.xlu0 %v973, 80
      %v1417 = vpop.permute.xlu0 %1416
      %1418 = vrot.lane.b32.xlu0 %v975, 80
      %v1419 = vpop.permute.xlu0 %1418
      %1420 = vrot.lane.b32.xlu0 %v977, 80
      %v1421 = vpop.permute.xlu0 %1420
      %1422 = vrot.lane.b32.xlu0 %v979, 80
      %v1423 = vpop.permute.xlu0 %1422
      %1424 = vrot.lane.b32.xlu0 %v981, 80
      %v1425 = vpop.permute.xlu0 %1424
      %1426 = vrot.lane.b32.xlu0 %v983, 80
      %v1427 = vpop.permute.xlu0 %1426
      %1428 = vrot.lane.b32.xlu0 %v985, 80
      %v1429 = vpop.permute.xlu0 %1428
      %1430 = vrot.lane.b32.xlu0 %v987, 80
      %v1431 = vpop.permute.xlu0 %1430
      %1432 = vrot.lane.b32.xlu0 %v989, 80
      %v1433 = vpop.permute.xlu0 %1432
      %1434 = vrot.lane.b32.xlu0 %v991, 80
      %v1435 = vpop.permute.xlu0 %1434
      %1436 = vrot.lane.b32.xlu0 %v993, 80
      %v1437 = vpop.permute.xlu0 %1436
      %1438 = vrot.lane.b32.xlu0 %v995, 80
      %v1439 = vpop.permute.xlu0 %1438
      %1440 = vrot.lane.b32.xlu0 %v997, 80
      %v1441 = vpop.permute.xlu0 %1440
      %1442 = vrot.lane.b32.xlu0 %v999, 80
      %v1443 = vpop.permute.xlu0 %1442
      %1444 = vrot.lane.b32.xlu0 %v1001, 80
      %v1445 = vpop.permute.xlu0 %1444
      %1446 = vrot.lane.b32.xlu0 %v1003, 80
      %v1447 = vpop.permute.xlu0 %1446
      %1448 = vrot.lane.b32.xlu0 %v1005, 80
      %v1449 = vpop.permute.xlu0 %1448
      %1450 = vrot.lane.b32.xlu0 %v1007, 80
      %v1451 = vpop.permute.xlu0 %1450
      %1452 = vrot.lane.b32.xlu0 %v1009, 80
      %v1453 = vpop.permute.xlu0 %1452
      %1454 = vrot.lane.b32.xlu0 %v1012, 80
      %v1455 = vpop.permute.xlu0 %1454
      %vm1496 = vcmask 162816
      %v1497 = vsel %vm1496, %v763, %v1015
      %v1498 = vsel %vm1496, %v647, %v1017
      %v1499 = vsel %vm1496, %v649, %v1019
      %v1500 = vsel %vm1496, %v651, %v1021
      %v1501 = vsel %vm1496, %v653, %v1023
      %v1502 = vsel %vm1496, %v655, %v1025
      %v1503 = vsel %vm1496, %v657, %v1027
      %v1504 = vsel %vm1496, %v659, %v1029
      %v1505 = vsel %vm1496, %v661, %v1031
      %v1506 = vsel %vm1496, %v663, %v1033
      %v1507 = vsel %vm1496, %v665, %v1035
      %v1508 = vsel %vm1496, %v667, %v1037
      %v1509 = vsel %vm1496, %v669, %v1039
      %v1510 = vsel %vm1496, %v671, %v1041
      %v1511 = vsel %vm1496, %v673, %v1043
      %v1512 = vsel %vm1496, %v675, %v1045
      %v1513 = vsel %vm1496, %v677, %v1047
      %v1514 = vsel %vm1496, %v679, %v1049
      %v1515 = vsel %vm1496, %v681, %v1051
      %v1516 = vsel %vm1496, %v683, %v1053
      %v1517 = vsel %vm1496, %v685, %v1055
      %v1518 = vsel %vm1496, %v687, %v1057
      %v1519 = vsel %vm1496, %v689, %v1059
      %v1520 = vsel %vm1496, %v691, %v1061
      %v1521 = vsel %vm1496, %v693, %v1063
      %v1522 = vsel %vm1496, %v695, %v1065
      %v1523 = vsel %vm1496, %v697, %v1067
      %v1524 = vsel %vm1496, %v699, %v1069
      %v1525 = vsel %vm1496, %v701, %v1071
      %v1526 = vsel %vm1496, %v703, %v1073
      %v1527 = vsel %vm1496, %v705, %v1075
      %v1528 = vsel %vm1496, %v707, %v1077
      %v1529 = vsel %vm1496, %v709, %v1079
      %v1530 = vsel %vm1496, %v711, %v1081
      %v1531 = vsel %vm1496, %v713, %v1083
      %v1532 = vsel %vm1496, %v715, %v1085
      %v1533 = vsel %vm1496, %v717, %v1087
      %v1534 = vsel %vm1496, %v719, %v1089
      %v1535 = vsel %vm1496, %v721, %v1091
      %v1536 = vsel %vm1496, %v722, %v1093
      %vm1537 = vcmask 326656
      %v1538 = vsel %vm1537, %v1497, %v1135
      %v1539 = vsel %vm1537, %v1498, %v1137
      %v1540 = vsel %vm1537, %v1499, %v1139
      %v1541 = vsel %vm1537, %v1500, %v1141
      %v1542 = vsel %vm1537, %v1501, %v1143
      %v1543 = vsel %vm1537, %v1502, %v1145
      %v1544 = vsel %vm1537, %v1503, %v1147
      %v1545 = vsel %vm1537, %v1504, %v1149
      %v1546 = vsel %vm1537, %v1505, %v1151
      %v1547 = vsel %vm1537, %v1506, %v1153
      %v1548 = vsel %vm1537, %v1507, %v1155
      %v1549 = vsel %vm1537, %v1508, %v1157
      %v1550 = vsel %vm1537, %v1509, %v1159
      %v1551 = vsel %vm1537, %v1510, %v1161
      %v1552 = vsel %vm1537, %v1511, %v1163
      %v1553 = vsel %vm1537, %v1512, %v1165
      %v1554 = vsel %vm1537, %v1513, %v1167
      %v1555 = vsel %vm1537, %v1514, %v1169
      %v1556 = vsel %vm1537, %v1515, %v1171
      %v1557 = vsel %vm1537, %v1516, %v1173
      %v1558 = vsel %vm1537, %v1517, %v1175
      %v1559 = vsel %vm1537, %v1518, %v1177
      %v1560 = vsel %vm1537, %v1519, %v1179
      %v1561 = vsel %vm1537, %v1520, %v1181
      %v1562 = vsel %vm1537, %v1521, %v1183
      %v1563 = vsel %vm1537, %v1522, %v1185
      %v1564 = vsel %vm1537, %v1523, %v1187
      %v1565 = vsel %vm1537, %v1524, %v1189
      %v1566 = vsel %vm1537, %v1525, %v1191
      %v1567 = vsel %vm1537, %v1526, %v1193
      %v1568 = vsel %vm1537, %v1527, %v1195
      %v1569 = vsel %vm1537, %v1528, %v1197
      %v1570 = vsel %vm1537, %v1529, %v1199
      %v1571 = vsel %vm1537, %v1530, %v1201
      %v1572 = vsel %vm1537, %v1531, %v1203
      %v1573 = vsel %vm1537, %v1532, %v1205
      %v1574 = vsel %vm1537, %v1533, %v1207
      %v1575 = vsel %vm1537, %v1534, %v1209
      %v1576 = vsel %vm1537, %v1535, %v1211
      %v1577 = vsel %vm1537, %v1536, %v1213
      %vm1578 = vcmask 490496
      %v1579 = vsel %vm1578, %v1538, %v1256
      %v1580 = vsel %vm1578, %v1539, %v1258
      %v1581 = vsel %vm1578, %v1540, %v1260
      %v1582 = vsel %vm1578, %v1541, %v1262
      %v1583 = vsel %vm1578, %v1542, %v1264
      %v1584 = vsel %vm1578, %v1543, %v1266
      %v1585 = vsel %vm1578, %v1544, %v1268
      %v1586 = vsel %vm1578, %v1545, %v1270
      %v1587 = vsel %vm1578, %v1546, %v1272
      %v1588 = vsel %vm1578, %v1547, %v1274
      %v1589 = vsel %vm1578, %v1548, %v1276
      %v1590 = vsel %vm1578, %v1549, %v1278
      %v1591 = vsel %vm1578, %v1550, %v1280
      %v1592 = vsel %vm1578, %v1551, %v1282
      %v1593 = vsel %vm1578, %v1552, %v1284
      %v1594 = vsel %vm1578, %v1553, %v1286
      %v1595 = vsel %vm1578, %v1554, %v1288
      %v1596 = vsel %vm1578, %v1555, %v1290
      %v1597 = vsel %vm1578, %v1556, %v1292
      %v1598 = vsel %vm1578, %v1557, %v1294
      %v1599 = vsel %vm1578, %v1558, %v1296
      %v1600 = vsel %vm1578, %v1559, %v1298
      %v1601 = vsel %vm1578, %v1560, %v1300
      %v1602 = vsel %vm1578, %v1561, %v1302
      %v1603 = vsel %vm1578, %v1562, %v1304
      %v1604 = vsel %vm1578, %v1563, %v1306
      %v1605 = vsel %vm1578, %v1564, %v1308
      %v1606 = vsel %vm1578, %v1565, %v1310
      %v1607 = vsel %vm1578, %v1566, %v1312
      %v1608 = vsel %vm1578, %v1567, %v1314
      %v1609 = vsel %vm1578, %v1568, %v1316
      %v1610 = vsel %vm1578, %v1569, %v1318
      %v1611 = vsel %vm1578, %v1570, %v1320
      %v1612 = vsel %vm1578, %v1571, %v1322
      %v1613 = vsel %vm1578, %v1572, %v1324
      %v1614 = vsel %vm1578, %v1573, %v1326
      %v1615 = vsel %vm1578, %v1574, %v1328
      %v1616 = vsel %vm1578, %v1575, %v1330
      %v1617 = vsel %vm1578, %v1576, %v1332
      %v1618 = vsel %vm1578, %v1577, %v1334
      %vm1619 = vcmask 654336
      %v1620 = vsel %vm1619, %v1579, %v1377
      %v1621 = vsel %vm1619, %v1580, %v1379
      %v1622 = vsel %vm1619, %v1581, %v1381
      %v1623 = vsel %vm1619, %v1582, %v1383
      %v1624 = vsel %vm1619, %v1583, %v1385
      %v1625 = vsel %vm1619, %v1584, %v1387
      %v1626 = vsel %vm1619, %v1585, %v1389
      %v1627 = vsel %vm1619, %v1586, %v1391
      %v1628 = vsel %vm1619, %v1587, %v1393
      %v1629 = vsel %vm1619, %v1588, %v1395
      %v1630 = vsel %vm1619, %v1589, %v1397
      %v1631 = vsel %vm1619, %v1590, %v1399
      %v1632 = vsel %vm1619, %v1591, %v1401
      %v1633 = vsel %vm1619, %v1592, %v1403
      %v1634 = vsel %vm1619, %v1593, %v1405
      %v1635 = vsel %vm1619, %v1594, %v1407
      %v1636 = vsel %vm1619, %v1595, %v1409
      %v1637 = vsel %vm1619, %v1596, %v1411
      %v1638 = vsel %vm1619, %v1597, %v1413
      %v1639 = vsel %vm1619, %v1598, %v1415
      %v1640 = vsel %vm1619, %v1599, %v1417
      %v1641 = vsel %vm1619, %v1600, %v1419
      %v1642 = vsel %vm1619, %v1601, %v1421
      %v1643 = vsel %vm1619, %v1602, %v1423
      %v1644 = vsel %vm1619, %v1603, %v1425
      %v1645 = vsel %vm1619, %v1604, %v1427
      %v1646 = vsel %vm1619, %v1605, %v1429
      %v1647 = vsel %vm1619, %v1606, %v1431
      %v1648 = vsel %vm1619, %v1607, %v1433
      %v1649 = vsel %vm1619, %v1608, %v1435
      %v1650 = vsel %vm1619, %v1609, %v1437
      %v1651 = vsel %vm1619, %v1610, %v1439
      %v1652 = vsel %vm1619, %v1611, %v1441
      %v1653 = vsel %vm1619, %v1612, %v1443
      %v1654 = vsel %vm1619, %v1613, %v1445
      %v1655 = vsel %vm1619, %v1614, %v1447
      %v1656 = vsel %vm1619, %v1615, %v1449
      %v1657 = vsel %vm1619, %v1616, %v1451
      %v1658 = vsel %vm1619, %v1617, %v1453
      %v1659 = vsel %vm1619, %v1618, %v1455
      %v1660 = vpack.c.bf16 %v1621, %v1620
      %v1661 = vpack.c.bf16 %v1623, %v1622
      %v1662 = vpack.c.bf16 %v1625, %v1624
      %v1663 = vpack.c.bf16 %v1627, %v1626
      %v1664 = vpack.c.bf16 %v1629, %v1628
      %v1665 = vpack.c.bf16 %v1631, %v1630
      %v1666 = vpack.c.bf16 %v1633, %v1632
      %v1667 = vpack.c.bf16 %v1635, %v1634
      %v1668 = vpack.c.bf16 %v1637, %v1636
      %v1669 = vpack.c.bf16 %v1639, %v1638
      %v1670 = vpack.c.bf16 %v1641, %v1640
      %v1671 = vpack.c.bf16 %v1643, %v1642
      %v1672 = vpack.c.bf16 %v1645, %v1644
      %v1673 = vpack.c.bf16 %v1647, %v1646
      %v1674 = vpack.c.bf16 %v1649, %v1648
      %v1675 = vpack.c.bf16 %v1651, %v1650
      %v1676 = vpack.c.bf16 %v1653, %v1652
      %v1677 = vpack.c.bf16 %v1655, %v1654
      %v1678 = vpack.c.bf16 %v1657, %v1656
      %v1679 = vpack.c.bf16 %v1659, %v1658
      %v1680 = vperm.slane %v300, 0
      %v1694 = vunpack.c.l.b16 %v589
      %v1695 = vunpack.c.l.b16 %v590
      %v1696 = vunpack.c.l.b16 %v591
      %v1697 = vunpack.c.l.b16 %v592
      %v1698 = vunpack.c.l.b16 %v593
      %v1699 = vunpack.c.l.b16 %v594
      %v1700 = vunpack.c.l.b16 %v595
      %v1701 = vunpack.c.l.b16 %v596
      %v1702 = vunpack.c.l.b16 %v597
      %v1703 = vunpack.c.l.b16 %v598
      %v1704 = vunpack.c.l.b16 %v599
      %v1705 = vunpack.c.l.b16 %v600
      %v1706 = vunpack.c.l.b16 %v601
      %v1707 = vpack.c.b16 %v1695, %v1694
      %v1708 = vpack.c.b16 %v1697, %v1696
      %v1709 = vpack.c.b16 %v1699, %v1698
      %v1710 = vpack.c.b16 %v1701, %v1700
      %v1711 = vpack.c.b16 %v1703, %v1702
      %v1712 = vpack.c.b16 %v1705, %v1704
      %v1713 = vpack.c.b16 %v1706, %v1706
      %vm1720 = vcmask 818176
      %v1722 = vsel %vm1720, %v1660, 0
      %v1725 = vsel %vm1720, %v1661, 0
      %v1728 = vsel %vm1720, %v1662, 0
      %v1731 = vsel %vm1720, %v1663, 0
      %v1734 = vsel %vm1720, %v1664, 0
      %v1737 = vsel %vm1720, %v1665, 0
      %v1740 = vsel %vm1720, %v1666, 0
      %v1743 = vsel %vm1720, %v1667, 0
      %v1746 = vsel %vm1720, %v1668, 0
      %v1749 = vsel %vm1720, %v1669, 0
      %v1752 = vsel %vm1720, %v1670, 0
      %v1755 = vsel %vm1720, %v1671, 0
      %v1758 = vsel %vm1720, %v1672, 0
      %v1761 = vsel %vm1720, %v1673, 0
      %v1764 = vsel %vm1720, %v1674, 0
      %v1767 = vsel %vm1720, %v1675, 0
      %v1770 = vsel %vm1720, %v1676, 0
      %v1773 = vsel %vm1720, %v1677, 0
      %v1776 = vsel %vm1720, %v1678, 0
      %v1779 = vsel %vm1720, %v1679, 0
      %v1782 = vsel %vm644, %v1713, 0
      %1784 = vmatpush.bf16.msra.mxu0 0
      %1785 = vmatpush.bf16.msra.mxu0 %v1782
      %1786 = vmatpush.bf16.msra.mxu0 %v1712
      %1787 = vmatpush.bf16.msra.mxu0 %v1711
      %1788 = vmatpush.bf16.msra.mxu0 %v1710
      %1789 = vmatpush.bf16.msra.mxu0 %v1709
      %1790 = vmatpush.bf16.msra.mxu0 %v1708
      %1791 = vmatpush.bf16.msra.mxu0 %v1707
      %1792 = vmatmul.bf16.gmra.mxu0 %v1722
      %v1793 = vpop.f32.mrf.mxu0
      %v1794 = vadd.f32 %v1680, %v1793
      %v1795 = vpop.f32.mrf.mxu0
      %v1796 = vadd.f32 %v1680, %v1795
      %1797 = vmatmul.bf16.gmra.mxu0 %v1725
      %v1798 = vpop.f32.mrf.mxu0
      %v1799 = vadd.f32 %v1680, %v1798
      %v1800 = vpop.f32.mrf.mxu0
      %v1801 = vadd.f32 %v1680, %v1800
      %1802 = vmatmul.bf16.gmra.mxu0 %v1728
      %v1803 = vpop.f32.mrf.mxu0
      %v1804 = vadd.f32 %v1680, %v1803
      %v1805 = vpop.f32.mrf.mxu0
      %v1806 = vadd.f32 %v1680, %v1805
      %1807 = vmatmul.bf16.gmra.mxu0 %v1731
      %v1808 = vpop.f32.mrf.mxu0
      %v1809 = vadd.f32 %v1680, %v1808
      %v1810 = vpop.f32.mrf.mxu0
      %v1811 = vadd.f32 %v1680, %v1810
      %1812 = vmatmul.bf16.gmra.mxu0 %v1734
      %v1813 = vpop.f32.mrf.mxu0
      %v1814 = vadd.f32 %v1680, %v1813
      %v1815 = vpop.f32.mrf.mxu0
      %v1816 = vadd.f32 %v1680, %v1815
      %1817 = vmatmul.bf16.gmra.mxu0 %v1737
      %v1818 = vpop.f32.mrf.mxu0
      %v1819 = vadd.f32 %v1680, %v1818
      %v1820 = vpop.f32.mrf.mxu0
      %v1821 = vadd.f32 %v1680, %v1820
      %1822 = vmatmul.bf16.gmra.mxu0 %v1740
      %v1823 = vpop.f32.mrf.mxu0
      %v1824 = vadd.f32 %v1680, %v1823
      %v1825 = vpop.f32.mrf.mxu0
      %v1826 = vadd.f32 %v1680, %v1825
      %1827 = vmatmul.bf16.gmra.mxu0 %v1743
      %v1828 = vpop.f32.mrf.mxu0
      %v1829 = vadd.f32 %v1680, %v1828
      %v1830 = vpop.f32.mrf.mxu0
      %v1831 = vadd.f32 %v1680, %v1830
      %1832 = vmatmul.bf16.gmra.mxu0 %v1746
      %v1833 = vpop.f32.mrf.mxu0
      %v1834 = vadd.f32 %v1680, %v1833
      %v1835 = vpop.f32.mrf.mxu0
      %v1836 = vadd.f32 %v1680, %v1835
      %1837 = vmatmul.bf16.gmra.mxu0 %v1749
      %v1838 = vpop.f32.mrf.mxu0
      %v1839 = vadd.f32 %v1680, %v1838
      %v1840 = vpop.f32.mrf.mxu0
      %v1841 = vadd.f32 %v1680, %v1840
      %1842 = vmatmul.bf16.gmra.mxu0 %v1752
      %v1843 = vpop.f32.mrf.mxu0
      %v1844 = vadd.f32 %v1680, %v1843
      %v1845 = vpop.f32.mrf.mxu0
      %v1846 = vadd.f32 %v1680, %v1845
      %1847 = vmatmul.bf16.gmra.mxu0 %v1755
      %v1848 = vpop.f32.mrf.mxu0
      %v1849 = vadd.f32 %v1680, %v1848
      %v1850 = vpop.f32.mrf.mxu0
      %v1851 = vadd.f32 %v1680, %v1850
      %1852 = vmatmul.bf16.gmra.mxu0 %v1758
      %v1853 = vpop.f32.mrf.mxu0
      %v1854 = vadd.f32 %v1680, %v1853
      %v1855 = vpop.f32.mrf.mxu0
      %v1856 = vadd.f32 %v1680, %v1855
      %1857 = vmatmul.bf16.gmra.mxu0 %v1761
      %v1858 = vpop.f32.mrf.mxu0
      %v1859 = vadd.f32 %v1680, %v1858
      %v1860 = vpop.f32.mrf.mxu0
      %v1861 = vadd.f32 %v1680, %v1860
      %1862 = vmatmul.bf16.gmra.mxu0 %v1764
      %v1863 = vpop.f32.mrf.mxu0
      %v1864 = vadd.f32 %v1680, %v1863
      %v1865 = vpop.f32.mrf.mxu0
      %v1866 = vadd.f32 %v1680, %v1865
      %1867 = vmatmul.bf16.gmra.mxu0 %v1767
      %v1868 = vpop.f32.mrf.mxu0
      %v1869 = vadd.f32 %v1680, %v1868
      %v1870 = vpop.f32.mrf.mxu0
      %v1871 = vadd.f32 %v1680, %v1870
      %1872 = vmatmul.bf16.gmra.mxu0 %v1770
      %v1873 = vpop.f32.mrf.mxu0
      %v1874 = vadd.f32 %v1680, %v1873
      %v1875 = vpop.f32.mrf.mxu0
      %v1876 = vadd.f32 %v1680, %v1875
      %1877 = vmatmul.bf16.gmra.mxu0 %v1773
      %v1878 = vpop.f32.mrf.mxu0
      %v1879 = vadd.f32 %v1680, %v1878
      %v1880 = vpop.f32.mrf.mxu0
      %v1881 = vadd.f32 %v1680, %v1880
      %1882 = vmatmul.bf16.gmra.mxu0 %v1776
      %v1883 = vpop.f32.mrf.mxu0
      %v1884 = vadd.f32 %v1680, %v1883
      %v1885 = vpop.f32.mrf.mxu0
      %v1886 = vadd.f32 %v1680, %v1885
      %1887 = vmatmul.bf16.gmra.mxu0 %v1779
      %v1888 = vpop.f32.mrf.mxu0
      %v1889 = vadd.f32 %v1680, %v1888
      %v1890 = vpop.f32.mrf.mxu0
      %v1891 = vadd.f32 %v1680, %v1890
      %1892 = vdwg.mxu0
      %v1893 = vmul.f32 %v1794, %v1794
      %v1894 = vmul.f32 %v1796, %v1796
      %v1895 = vmul.f32 %v1799, %v1799
      %v1896 = vmul.f32 %v1801, %v1801
      %v1897 = vmul.f32 %v1804, %v1804
      %v1898 = vmul.f32 %v1806, %v1806
      %v1899 = vmul.f32 %v1809, %v1809
      %v1900 = vmul.f32 %v1811, %v1811
      %v1901 = vmul.f32 %v1814, %v1814
      %v1902 = vmul.f32 %v1816, %v1816
      %v1903 = vmul.f32 %v1819, %v1819
      %v1904 = vmul.f32 %v1821, %v1821
      %v1905 = vmul.f32 %v1824, %v1824
      %v1906 = vmul.f32 %v1826, %v1826
      %v1907 = vmul.f32 %v1829, %v1829
      %v1908 = vmul.f32 %v1831, %v1831
      %v1909 = vmul.f32 %v1834, %v1834
      %v1910 = vmul.f32 %v1836, %v1836
      %v1911 = vmul.f32 %v1839, %v1839
      %v1912 = vmul.f32 %v1841, %v1841
      %v1913 = vmul.f32 %v1844, %v1844
      %v1914 = vmul.f32 %v1846, %v1846
      %v1915 = vmul.f32 %v1849, %v1849
      %v1916 = vmul.f32 %v1851, %v1851
      %v1917 = vmul.f32 %v1854, %v1854
      %v1918 = vmul.f32 %v1856, %v1856
      %v1919 = vmul.f32 %v1859, %v1859
      %v1920 = vmul.f32 %v1861, %v1861
      %v1921 = vmul.f32 %v1864, %v1864
      %v1922 = vmul.f32 %v1866, %v1866
      %v1923 = vmul.f32 %v1869, %v1869
      %v1924 = vmul.f32 %v1871, %v1871
      %v1925 = vmul.f32 %v1874, %v1874
      %v1926 = vmul.f32 %v1876, %v1876
      %v1927 = vmul.f32 %v1879, %v1879
      %v1928 = vmul.f32 %v1881, %v1881
      %v1929 = vmul.f32 %v1884, %v1884
      %v1930 = vmul.f32 %v1886, %v1886
      %v1931 = vmul.f32 %v1889, %v1889
      %v1932 = vmul.f32 %v1891, %v1891
      %1973 = vrot.lane.b32.xlu0 %v1893, 20
      %v1974 = vpop.permute.xlu0 %1973
      %1975 = vrot.lane.b32.xlu0 %v1894, 20
      %v1976 = vpop.permute.xlu0 %1975
      %1977 = vrot.lane.b32.xlu0 %v1895, 20
      %v1978 = vpop.permute.xlu0 %1977
      %1979 = vrot.lane.b32.xlu0 %v1896, 20
      %v1980 = vpop.permute.xlu0 %1979
      %1981 = vrot.lane.b32.xlu0 %v1897, 20
      %v1982 = vpop.permute.xlu0 %1981
      %1983 = vrot.lane.b32.xlu0 %v1898, 20
      %v1984 = vpop.permute.xlu0 %1983
      %1985 = vrot.lane.b32.xlu0 %v1899, 20
      %v1986 = vpop.permute.xlu0 %1985
      %1987 = vrot.lane.b32.xlu0 %v1900, 20
      %v1988 = vpop.permute.xlu0 %1987
      %1989 = vrot.lane.b32.xlu0 %v1901, 20
      %v1990 = vpop.permute.xlu0 %1989
      %1991 = vrot.lane.b32.xlu0 %v1902, 20
      %v1992 = vpop.permute.xlu0 %1991
      %1993 = vrot.lane.b32.xlu0 %v1903, 20
      %v1994 = vpop.permute.xlu0 %1993
      %1995 = vrot.lane.b32.xlu0 %v1904, 20
      %v1996 = vpop.permute.xlu0 %1995
      %1997 = vrot.lane.b32.xlu0 %v1905, 20
      %v1998 = vpop.permute.xlu0 %1997
      %1999 = vrot.lane.b32.xlu0 %v1906, 20
      %v2000 = vpop.permute.xlu0 %1999
      %2001 = vrot.lane.b32.xlu0 %v1907, 20
      %v2002 = vpop.permute.xlu0 %2001
      %2003 = vrot.lane.b32.xlu0 %v1908, 20
      %v2004 = vpop.permute.xlu0 %2003
      %2005 = vrot.lane.b32.xlu0 %v1909, 20
      %v2006 = vpop.permute.xlu0 %2005
      %2007 = vrot.lane.b32.xlu0 %v1910, 20
      %v2008 = vpop.permute.xlu0 %2007
      %2009 = vrot.lane.b32.xlu0 %v1911, 20
      %v2010 = vpop.permute.xlu0 %2009
      %2011 = vrot.lane.b32.xlu0 %v1912, 20
      %v2012 = vpop.permute.xlu0 %2011
      %2013 = vrot.lane.b32.xlu0 %v1913, 20
      %v2014 = vpop.permute.xlu0 %2013
      %2015 = vrot.lane.b32.xlu0 %v1914, 20
      %v2016 = vpop.permute.xlu0 %2015
      %2017 = vrot.lane.b32.xlu0 %v1915, 20
      %v2018 = vpop.permute.xlu0 %2017
      %2019 = vrot.lane.b32.xlu0 %v1916, 20
      %v2020 = vpop.permute.xlu0 %2019
      %2021 = vrot.lane.b32.xlu0 %v1917, 20
      %v2022 = vpop.permute.xlu0 %2021
      %2023 = vrot.lane.b32.xlu0 %v1918, 20
      %v2024 = vpop.permute.xlu0 %2023
      %2025 = vrot.lane.b32.xlu0 %v1919, 20
      %v2026 = vpop.permute.xlu0 %2025
      %2027 = vrot.lane.b32.xlu0 %v1920, 20
      %v2028 = vpop.permute.xlu0 %2027
      %2029 = vrot.lane.b32.xlu0 %v1921, 20
      %v2030 = vpop.permute.xlu0 %2029
      %2031 = vrot.lane.b32.xlu0 %v1922, 20
      %v2032 = vpop.permute.xlu0 %2031
      %2033 = vrot.lane.b32.xlu0 %v1923, 20
      %v2034 = vpop.permute.xlu0 %2033
      %2035 = vrot.lane.b32.xlu0 %v1924, 20
      %v2036 = vpop.permute.xlu0 %2035
      %2037 = vrot.lane.b32.xlu0 %v1925, 20
      %v2038 = vpop.permute.xlu0 %2037
      %2039 = vrot.lane.b32.xlu0 %v1926, 20
      %v2040 = vpop.permute.xlu0 %2039
      %2041 = vrot.lane.b32.xlu0 %v1927, 20
      %v2042 = vpop.permute.xlu0 %2041
      %2043 = vrot.lane.b32.xlu0 %v1928, 20
      %v2044 = vpop.permute.xlu0 %2043
      %2045 = vrot.lane.b32.xlu0 %v1929, 20
      %v2046 = vpop.permute.xlu0 %2045
      %2047 = vrot.lane.b32.xlu0 %v1930, 20
      %v2048 = vpop.permute.xlu0 %2047
      %2049 = vrot.lane.b32.xlu0 %v1931, 20
      %v2050 = vpop.permute.xlu0 %2049
      %2051 = vrot.lane.b32.xlu0 %v1932, 20
      %v2052 = vpop.permute.xlu0 %2051
      %v2093 = vsel %vm1496, %v1794, %v1974
      %v2094 = vsel %vm1496, %v1796, %v1976
      %v2095 = vsel %vm1496, %v1799, %v1978
      %v2096 = vsel %vm1496, %v1801, %v1980
      %v2097 = vsel %vm1496, %v1804, %v1982
      %v2098 = vsel %vm1496, %v1806, %v1984
      %v2099 = vsel %vm1496, %v1809, %v1986
      %v2100 = vsel %vm1496, %v1811, %v1988
      %v2101 = vsel %vm1496, %v1814, %v1990
      %v2102 = vsel %vm1496, %v1816, %v1992
      %v2103 = vsel %vm1496, %v1819, %v1994
      %v2104 = vsel %vm1496, %v1821, %v1996
      %v2105 = vsel %vm1496, %v1824, %v1998
      %v2106 = vsel %vm1496, %v1826, %v2000
      %v2107 = vsel %vm1496, %v1829, %v2002
      %v2108 = vsel %vm1496, %v1831, %v2004
      %v2109 = vsel %vm1496, %v1834, %v2006
      %v2110 = vsel %vm1496, %v1836, %v2008
      %v2111 = vsel %vm1496, %v1839, %v2010
      %v2112 = vsel %vm1496, %v1841, %v2012
      %v2113 = vsel %vm1496, %v1844, %v2014
      %v2114 = vsel %vm1496, %v1846, %v2016
      %v2115 = vsel %vm1496, %v1849, %v2018
      %v2116 = vsel %vm1496, %v1851, %v2020
      %v2117 = vsel %vm1496, %v1854, %v2022
      %v2118 = vsel %vm1496, %v1856, %v2024
      %v2119 = vsel %vm1496, %v1859, %v2026
      %v2120 = vsel %vm1496, %v1861, %v2028
      %v2121 = vsel %vm1496, %v1864, %v2030
      %v2122 = vsel %vm1496, %v1866, %v2032
      %v2123 = vsel %vm1496, %v1869, %v2034
      %v2124 = vsel %vm1496, %v1871, %v2036
      %v2125 = vsel %vm1496, %v1874, %v2038
      %v2126 = vsel %vm1496, %v1876, %v2040
      %v2127 = vsel %vm1496, %v1879, %v2042
      %v2128 = vsel %vm1496, %v1881, %v2044
      %v2129 = vsel %vm1496, %v1884, %v2046
      %v2130 = vsel %vm1496, %v1886, %v2048
      %v2131 = vsel %vm1496, %v1889, %v2050
      %v2132 = vsel %vm1496, %v1891, %v2052
      %vm2133 = vcmask 523264
      %v2135 = vsel %vm2133, %v344, 0
      %v2138 = vsel %vm2133, %v347, 0
      %2140 = vmatpush.msra.mxu0 %v2108
      %2141 = vmatpush.msra.mxu0 %v2107
      %2142 = vmatpush.msra.mxu0 %v2106
      %2143 = vmatpush.msra.mxu0 %v2105
      %2144 = vmatpush.msra.mxu0 %v2104
      %2145 = vmatpush.msra.mxu0 %v2103
      %2146 = vmatpush.msra.mxu0 %v2102
      %2147 = vmatpush.msra.mxu0 %v2101
      %2148 = vmatpush.msra.mxu0 %v2100
      %2149 = vmatpush.msra.mxu0 %v2099
      %2150 = vmatpush.msra.mxu0 %v2098
      %2151 = vmatpush.msra.mxu0 %v2097
      %2152 = vmatpush.msra.mxu0 %v2096
      %2153 = vmatpush.msra.mxu0 %v2095
      %2154 = vmatpush.msra.mxu0 %v2094
      %2155 = vmatpush.msra.mxu0 %v2093
      %2156 = vmatmul.f32.gmra.mxu0 %v342
      %v2157 = vpop.f32.mrf.mxu0
      %v2158 = vadd.f32 0.0, %v2157
      %2159 = vmatmul.f32.gmra.mxu0 %v345
      %v2160 = vpop.f32.mrf.mxu0
      %v2161 = vadd.f32 0.0, %v2160
      %2162 = vdwg.mxu0
      %2163 = vmatpush.msra.mxu0 %v2124
      %2164 = vmatpush.msra.mxu0 %v2123
      %2165 = vmatpush.msra.mxu0 %v2122
      %2166 = vmatpush.msra.mxu0 %v2121
      %2167 = vmatpush.msra.mxu0 %v2120
      %2168 = vmatpush.msra.mxu0 %v2119
      %2169 = vmatpush.msra.mxu0 %v2118
      %2170 = vmatpush.msra.mxu0 %v2117
      %2171 = vmatpush.msra.mxu0 %v2116
      %2172 = vmatpush.msra.mxu0 %v2115
      %2173 = vmatpush.msra.mxu0 %v2114
      %2174 = vmatpush.msra.mxu0 %v2113
      %2175 = vmatpush.msra.mxu0 %v2112
      %2176 = vmatpush.msra.mxu0 %v2111
      %2177 = vmatpush.msra.mxu0 %v2110
      %2178 = vmatpush.msra.mxu0 %v2109
      %2179 = vmatmul.f32.gmra.mxu0 %v343
      %v2180 = vpop.f32.mrf.mxu0
      %v2181 = vadd.f32 %v2158, %v2180
      %2182 = vmatmul.f32.gmra.mxu0 %v346
      %v2183 = vpop.f32.mrf.mxu0
      %v2184 = vadd.f32 %v2161, %v2183
      %2185 = vdwg.mxu0
      %2186 = vmatpush.msra.mxu0 0.0
      %2187 = vmatpush.msra.mxu0 0.0
      %2188 = vmatpush.msra.mxu0 0.0
      %2189 = vmatpush.msra.mxu0 0.0
      %2190 = vmatpush.msra.mxu0 0.0
      %2191 = vmatpush.msra.mxu0 0.0
      %2192 = vmatpush.msra.mxu0 0.0
      %2193 = vmatpush.msra.mxu0 0.0
      %2194 = vmatpush.msra.mxu0 %v2132
      %2195 = vmatpush.msra.mxu0 %v2131
      %2196 = vmatpush.msra.mxu0 %v2130
      %2197 = vmatpush.msra.mxu0 %v2129
      %2198 = vmatpush.msra.mxu0 %v2128
      %2199 = vmatpush.msra.mxu0 %v2127
      %2200 = vmatpush.msra.mxu0 %v2126
      %2201 = vmatpush.msra.mxu0 %v2125
      %2202 = vmatmul.f32.gmra.mxu0 %v2135
      %v2203 = vpop.f32.mrf.mxu0
      %v2204 = vadd.f32 %v2181, %v2203
      %2205 = vmatmul.f32.gmra.mxu0 %v2138
      %v2206 = vpop.f32.mrf.mxu0
      %v2207 = vadd.f32 %v2184, %v2206
      %2208 = vdwg.mxu0
      %v2210 = vsel %vm1496, %v2204, 0
      %v2213 = vsel %vm1496, %v2207, 0
      %vm2215 = vcmask 1043456
      %v2217 = vsel %vm2215, %v304, 0
      %2219 = vmatpush.msra.mxu0 0.0
      %2220 = vmatpush.msra.mxu0 0.0
      %2221 = vmatpush.msra.mxu0 0.0
      %2222 = vmatpush.msra.mxu0 0.0
      %2223 = vmatpush.msra.mxu0 0.0
      %2224 = vmatpush.msra.mxu0 0.0
      %2225 = vmatpush.msra.mxu0 0.0
      %2226 = vmatpush.msra.mxu0 0.0
      %2227 = vmatpush.msra.mxu0 0.0
      %2228 = vmatpush.msra.mxu0 0.0
      %2229 = vmatpush.msra.mxu0 0.0
      %2230 = vmatpush.msra.mxu0 0.0
      %2231 = vmatpush.msra.mxu0 0.0
      %2232 = vmatpush.msra.mxu0 %v2217
      %2233 = vmatpush.msra.mxu0 %v303
      %2234 = vmatpush.msra.mxu0 %v302
      %2235 = vmatmul.f32.gmra.mxu0 %v2210
      %v2236 = vpop.f32.mrf.mxu0
      %v2237 = vadd.f32 0.0, %v2236
      %2238 = vmatmul.f32.gmra.mxu0 %v2213
      %v2239 = vpop.f32.mrf.mxu0
      %v2240 = vadd.f32 0.0, %v2239
      %2241 = vdwg.mxu0
      %2242 = vrot.lane.b32.xlu0 %v2204, 108
      %v2243 = vpop.permute.xlu0 %2242
      %2244 = vrot.lane.b32.xlu0 %v2207, 108
      %v2245 = vpop.permute.xlu0 %2244
      %v2246 = vsel %vm1496, %v2243, 0
      %v2248 = vsel %vm1496, %v2245, 0
      %2250 = vmatpush.msra.mxu0 0.0
      %2251 = vmatpush.msra.mxu0 0.0
      %2252 = vmatpush.msra.mxu0 0.0
      %2253 = vmatpush.msra.mxu0 0.0
      %2254 = vmatpush.msra.mxu0 0.0
      %2255 = vmatpush.msra.mxu0 0.0
      %2256 = vmatpush.msra.mxu0 0.0
      %2257 = vmatpush.msra.mxu0 0.0
      %2258 = vmatpush.msra.mxu0 0.0
      %2259 = vmatpush.msra.mxu0 0.0
      %2260 = vmatpush.msra.mxu0 0.0
      %2261 = vmatpush.msra.mxu0 0.0
      %2262 = vmatpush.msra.mxu0 0.0
      %2263 = vmatpush.msra.mxu0 %v2217
      %2264 = vmatpush.msra.mxu0 %v303
      %2265 = vmatpush.msra.mxu0 %v302
      %2266 = vmatmul.f32.gmra.mxu0 %v2246
      %v2267 = vpop.f32.mrf.mxu0
      %v2268 = vadd.f32 0.0, %v2267
      %2269 = vmatmul.f32.gmra.mxu0 %v2248
      %v2270 = vpop.f32.mrf.mxu0
      %v2271 = vadd.f32 0.0, %v2270
      %2272 = vdwg.mxu0
      %v2273 = vmul.f32 %v2237, %v2237
      %v2274 = vmul.f32 %v2240, %v2240
      %v2275 = vsub.f32 %v2268, %v2273
      %v2276 = vsub.f32 %v2271, %v2274
      %v2277 = vadd.f32 %v2275, 1e-05
      %v2278 = vadd.f32 %v2276, 1e-05
      %v2279 = vrsqrt.pop %v2277
      %v2280 = vmul.f32 %v2279, %v2277
      %v2281 = vmul.f32 %v2280, %v2279
      %v2282 = vmul.f32 0.5, %v2281
      %v2283 = vsub.f32 1.5, %v2282
      %v2284 = vmul.f32 %v2279, %v2283
      %vm2285 = vweird.f32 %v2277
      %vm2286 = vweird.f32 %v2279
      %vm2287 = vmor %vm2285, %vm2286
      %v2288 = vsel %vm2287, %v2279, %v2284
      %v2289 = vrsqrt.pop %v2278
      %v2290 = vmul.f32 %v2289, %v2278
      %v2291 = vmul.f32 %v2290, %v2289
      %v2292 = vmul.f32 0.5, %v2291
      %v2293 = vsub.f32 1.5, %v2292
      %v2294 = vmul.f32 %v2289, %v2293
      %vm2295 = vweird.f32 %v2278
      %vm2296 = vweird.f32 %v2289
      %vm2297 = vmor %vm2295, %vm2296
      %v2298 = vsel %vm2297, %v2289, %v2294
      %v2299 = vperm.slane %v300, 1
      %v2300 = vmul.f32 %v2288, %v2299
      %v2301 = vmul.f32 %v2298, %v2299
      %v2302 = vmul.f32 %v2237, %v2300
      %v2303 = vmul.f32 %v2240, %v2301
      %v2304 = vperm.slane %v300, 2
      %v2305 = vsub.f32 %v2304, %v2302
      %v2306 = vsub.f32 %v2304, %v2303
      %2309 = vrot.lane.b32.xlu0 %v2305, 20
      %v2310 = vpop.permute.xlu0 %2309
      %2311 = vrot.lane.b32.xlu0 %v2306, 20
      %v2312 = vpop.permute.xlu0 %2311
      %v2315 = vsel %vm1496, %v2300, %v2310
      %v2316 = vsel %vm1496, %v2301, %v2312
      %vm2317 = vcmask 130048
      %v2319 = vsel %vm2317, %v549, 0
      %v2322 = vsel %vm2317, %v550, 0
      %v2325 = vsel %vm2317, %v551, 0
      %v2328 = vsel %vm2317, %v552, 0
      %v2331 = vsel %vm2317, %v553, 0
      %v2334 = vsel %vm2317, %v554, 0
      %v2337 = vsel %vm2317, %v555, 0
      %v2340 = vsel %vm2317, %v556, 0
      %v2343 = vsel %vm2317, %v557, 0
      %v2346 = vsel %vm2317, %v558, 0
      %v2349 = vsel %vm2317, %v559, 0
      %v2352 = vsel %vm2317, %v560, 0
      %v2355 = vsel %vm2317, %v561, 0
      %v2358 = vsel %vm2317, %v562, 0
      %v2361 = vsel %vm2317, %v563, 0
      %v2364 = vsel %vm2317, %v564, 0
      %v2367 = vsel %vm2317, %v565, 0
      %v2370 = vsel %vm2317, %v566, 0
      %v2373 = vsel %vm2317, %v567, 0
      %v2376 = vsel %vm2317, %v568, 0
      %v2379 = vsel %vm2317, %v569, 0
      %v2382 = vsel %vm2317, %v570, 0
      %v2385 = vsel %vm2317, %v571, 0
      %v2388 = vsel %vm2317, %v572, 0
      %v2391 = vsel %vm2317, %v573, 0
      %v2394 = vsel %vm2317, %v574, 0
      %v2397 = vsel %vm2317, %v575, 0
      %v2400 = vsel %vm2317, %v576, 0
      %v2403 = vsel %vm2317, %v577, 0
      %v2406 = vsel %vm2317, %v578, 0
      %v2409 = vsel %vm2317, %v579, 0
      %v2412 = vsel %vm2317, %v580, 0
      %v2415 = vsel %vm2317, %v581, 0
      %v2418 = vsel %vm2317, %v582, 0
      %v2421 = vsel %vm2317, %v583, 0
      %v2424 = vsel %vm2317, %v584, 0
      %v2427 = vsel %vm2317, %v585, 0
      %v2430 = vsel %vm2317, %v586, 0
      %v2433 = vsel %vm2317, %v587, 0
      %v2436 = vsel %vm2317, %v588, 0
      %2438 = vmatpush.msra.mxu0 0.0
      %2439 = vmatpush.msra.mxu0 0.0
      %2440 = vmatpush.msra.mxu0 0.0
      %2441 = vmatpush.msra.mxu0 0.0
      %2442 = vmatpush.msra.mxu0 0.0
      %2443 = vmatpush.msra.mxu0 0.0
      %2444 = vmatpush.msra.mxu0 0.0
      %2445 = vmatpush.msra.mxu0 0.0
      %2446 = vmatpush.msra.mxu0 0.0
      %2447 = vmatpush.msra.mxu0 0.0
      %2448 = vmatpush.msra.mxu0 0.0
      %2449 = vmatpush.msra.mxu0 0.0
      %2450 = vmatpush.msra.mxu0 0.0
      %2451 = vmatpush.msra.mxu0 0.0
      %2452 = vmatpush.msra.mxu0 %v2316
      %2453 = vmatpush.msra.mxu0 %v2315
      %2454 = vmatmul.f32.gmra.mxu0 %v2319
      %v2455 = vpop.f32.mrf.mxu0
      %v2456 = vadd.f32 0.0, %v2455
      %2457 = vmatmul.f32.gmra.mxu0 %v2322
      %v2458 = vpop.f32.mrf.mxu0
      %v2459 = vadd.f32 0.0, %v2458
      %2460 = vmatmul.f32.gmra.mxu0 %v2325
      %v2461 = vpop.f32.mrf.mxu0
      %v2462 = vadd.f32 0.0, %v2461
      %2463 = vmatmul.f32.gmra.mxu0 %v2328
      %v2464 = vpop.f32.mrf.mxu0
      %v2465 = vadd.f32 0.0, %v2464
      %2466 = vmatmul.f32.gmra.mxu0 %v2331
      %v2467 = vpop.f32.mrf.mxu0
      %v2468 = vadd.f32 0.0, %v2467
      %2469 = vmatmul.f32.gmra.mxu0 %v2334
      %v2470 = vpop.f32.mrf.mxu0
      %v2471 = vadd.f32 0.0, %v2470
      %2472 = vmatmul.f32.gmra.mxu0 %v2337
      %v2473 = vpop.f32.mrf.mxu0
      %v2474 = vadd.f32 0.0, %v2473
      %2475 = vmatmul.f32.gmra.mxu0 %v2340
      %v2476 = vpop.f32.mrf.mxu0
      %v2477 = vadd.f32 0.0, %v2476
      %2478 = vmatmul.f32.gmra.mxu0 %v2343
      %v2479 = vpop.f32.mrf.mxu0
      %v2480 = vadd.f32 0.0, %v2479
      %2481 = vmatmul.f32.gmra.mxu0 %v2346
      %v2482 = vpop.f32.mrf.mxu0
      %v2483 = vadd.f32 0.0, %v2482
      %2484 = vmatmul.f32.gmra.mxu0 %v2349
      %v2485 = vpop.f32.mrf.mxu0
      %v2486 = vadd.f32 0.0, %v2485
      %2487 = vmatmul.f32.gmra.mxu0 %v2352
      %v2488 = vpop.f32.mrf.mxu0
      %v2489 = vadd.f32 0.0, %v2488
      %2490 = vmatmul.f32.gmra.mxu0 %v2355
      %v2491 = vpop.f32.mrf.mxu0
      %v2492 = vadd.f32 0.0, %v2491
      %2493 = vmatmul.f32.gmra.mxu0 %v2358
      %v2494 = vpop.f32.mrf.mxu0
      %v2495 = vadd.f32 0.0, %v2494
      %2496 = vmatmul.f32.gmra.mxu0 %v2361
      %v2497 = vpop.f32.mrf.mxu0
      %v2498 = vadd.f32 0.0, %v2497
      %2499 = vmatmul.f32.gmra.mxu0 %v2364
      %v2500 = vpop.f32.mrf.mxu0
      %v2501 = vadd.f32 0.0, %v2500
      %2502 = vmatmul.f32.gmra.mxu0 %v2367
      %v2503 = vpop.f32.mrf.mxu0
      %v2504 = vadd.f32 0.0, %v2503
      %2505 = vmatmul.f32.gmra.mxu0 %v2370
      %v2506 = vpop.f32.mrf.mxu0
      %v2507 = vadd.f32 0.0, %v2506
      %2508 = vmatmul.f32.gmra.mxu0 %v2373
      %v2509 = vpop.f32.mrf.mxu0
      %v2510 = vadd.f32 0.0, %v2509
      %2511 = vmatmul.f32.gmra.mxu0 %v2376
      %v2512 = vpop.f32.mrf.mxu0
      %v2513 = vadd.f32 0.0, %v2512
      %2514 = vmatmul.f32.gmra.mxu0 %v2379
      %v2515 = vpop.f32.mrf.mxu0
      %v2516 = vadd.f32 0.0, %v2515
      %2517 = vmatmul.f32.gmra.mxu0 %v2382
      %v2518 = vpop.f32.mrf.mxu0
      %v2519 = vadd.f32 0.0, %v2518
      %2520 = vmatmul.f32.gmra.mxu0 %v2385
      %v2521 = vpop.f32.mrf.mxu0
      %v2522 = vadd.f32 0.0, %v2521
      %2523 = vmatmul.f32.gmra.mxu0 %v2388
      %v2524 = vpop.f32.mrf.mxu0
      %v2525 = vadd.f32 0.0, %v2524
      %2526 = vmatmul.f32.gmra.mxu0 %v2391
      %v2527 = vpop.f32.mrf.mxu0
      %v2528 = vadd.f32 0.0, %v2527
      %2529 = vmatmul.f32.gmra.mxu0 %v2394
      %v2530 = vpop.f32.mrf.mxu0
      %v2531 = vadd.f32 0.0, %v2530
      %2532 = vmatmul.f32.gmra.mxu0 %v2397
      %v2533 = vpop.f32.mrf.mxu0
      %v2534 = vadd.f32 0.0, %v2533
      %2535 = vmatmul.f32.gmra.mxu0 %v2400
      %v2536 = vpop.f32.mrf.mxu0
      %v2537 = vadd.f32 0.0, %v2536
      %2538 = vmatmul.f32.gmra.mxu0 %v2403
      %v2539 = vpop.f32.mrf.mxu0
      %v2540 = vadd.f32 0.0, %v2539
      %2541 = vmatmul.f32.gmra.mxu0 %v2406
      %v2542 = vpop.f32.mrf.mxu0
      %v2543 = vadd.f32 0.0, %v2542
      %2544 = vmatmul.f32.gmra.mxu0 %v2409
      %v2545 = vpop.f32.mrf.mxu0
      %v2546 = vadd.f32 0.0, %v2545
      %2547 = vmatmul.f32.gmra.mxu0 %v2412
      %v2548 = vpop.f32.mrf.mxu0
      %v2549 = vadd.f32 0.0, %v2548
      %2550 = vmatmul.f32.gmra.mxu0 %v2415
      %v2551 = vpop.f32.mrf.mxu0
      %v2552 = vadd.f32 0.0, %v2551
      %2553 = vmatmul.f32.gmra.mxu0 %v2418
      %v2554 = vpop.f32.mrf.mxu0
      %v2555 = vadd.f32 0.0, %v2554
      %2556 = vmatmul.f32.gmra.mxu0 %v2421
      %v2557 = vpop.f32.mrf.mxu0
      %v2558 = vadd.f32 0.0, %v2557
      %2559 = vmatmul.f32.gmra.mxu0 %v2424
      %v2560 = vpop.f32.mrf.mxu0
      %v2561 = vadd.f32 0.0, %v2560
      %2562 = vmatmul.f32.gmra.mxu0 %v2427
      %v2563 = vpop.f32.mrf.mxu0
      %v2564 = vadd.f32 0.0, %v2563
      %2565 = vmatmul.f32.gmra.mxu0 %v2430
      %v2566 = vpop.f32.mrf.mxu0
      %v2567 = vadd.f32 0.0, %v2566
      %2568 = vmatmul.f32.gmra.mxu0 %v2433
      %v2569 = vpop.f32.mrf.mxu0
      %v2570 = vadd.f32 0.0, %v2569
      %2571 = vmatmul.f32.gmra.mxu0 %v2436
      %v2572 = vpop.f32.mrf.mxu0
      %v2573 = vadd.f32 0.0, %v2572
      %2574 = vdwg.mxu0
      %v2575 = vmul.f32 %v1794, %v2456
      %v2576 = vmul.f32 %v1796, %v2459
      %v2577 = vmul.f32 %v1799, %v2462
      %v2578 = vmul.f32 %v1801, %v2465
      %v2579 = vmul.f32 %v1804, %v2468
      %v2580 = vmul.f32 %v1806, %v2471
      %v2581 = vmul.f32 %v1809, %v2474
      %v2582 = vmul.f32 %v1811, %v2477
      %v2583 = vmul.f32 %v1814, %v2480
      %v2584 = vmul.f32 %v1816, %v2483
      %v2585 = vmul.f32 %v1819, %v2486
      %v2586 = vmul.f32 %v1821, %v2489
      %v2587 = vmul.f32 %v1824, %v2492
      %v2588 = vmul.f32 %v1826, %v2495
      %v2589 = vmul.f32 %v1829, %v2498
      %v2590 = vmul.f32 %v1831, %v2501
      %v2591 = vmul.f32 %v1834, %v2504
      %v2592 = vmul.f32 %v1836, %v2507
      %v2593 = vmul.f32 %v1839, %v2510
      %v2594 = vmul.f32 %v1841, %v2513
      %v2595 = vmul.f32 %v1844, %v2516
      %v2596 = vmul.f32 %v1846, %v2519
      %v2597 = vmul.f32 %v1849, %v2522
      %v2598 = vmul.f32 %v1851, %v2525
      %v2599 = vmul.f32 %v1854, %v2528
      %v2600 = vmul.f32 %v1856, %v2531
      %v2601 = vmul.f32 %v1859, %v2534
      %v2602 = vmul.f32 %v1861, %v2537
      %v2603 = vmul.f32 %v1864, %v2540
      %v2604 = vmul.f32 %v1866, %v2543
      %v2605 = vmul.f32 %v1869, %v2546
      %v2606 = vmul.f32 %v1871, %v2549
      %v2607 = vmul.f32 %v1874, %v2552
      %v2608 = vmul.f32 %v1876, %v2555
      %v2609 = vmul.f32 %v1879, %v2558
      %v2610 = vmul.f32 %v1881, %v2561
      %v2611 = vmul.f32 %v1884, %v2564
      %v2612 = vmul.f32 %v1886, %v2567
      %v2613 = vmul.f32 %v1889, %v2570
      %v2614 = vmul.f32 %v1891, %v2573
      %2655 = vrot.lane.b32.xlu0 %v2456, 108
      %v2656 = vpop.permute.xlu0 %2655
      %2657 = vrot.lane.b32.xlu0 %v2459, 108
      %v2658 = vpop.permute.xlu0 %2657
      %2659 = vrot.lane.b32.xlu0 %v2462, 108
      %v2660 = vpop.permute.xlu0 %2659
      %2661 = vrot.lane.b32.xlu0 %v2465, 108
      %v2662 = vpop.permute.xlu0 %2661
      %2663 = vrot.lane.b32.xlu0 %v2468, 108
      %v2664 = vpop.permute.xlu0 %2663
      %2665 = vrot.lane.b32.xlu0 %v2471, 108
      %v2666 = vpop.permute.xlu0 %2665
      %2667 = vrot.lane.b32.xlu0 %v2474, 108
      %v2668 = vpop.permute.xlu0 %2667
      %2669 = vrot.lane.b32.xlu0 %v2477, 108
      %v2670 = vpop.permute.xlu0 %2669
      %2671 = vrot.lane.b32.xlu0 %v2480, 108
      %v2672 = vpop.permute.xlu0 %2671
      %2673 = vrot.lane.b32.xlu0 %v2483, 108
      %v2674 = vpop.permute.xlu0 %2673
      %2675 = vrot.lane.b32.xlu0 %v2486, 108
      %v2676 = vpop.permute.xlu0 %2675
      %2677 = vrot.lane.b32.xlu0 %v2489, 108
      %v2678 = vpop.permute.xlu0 %2677
      %2679 = vrot.lane.b32.xlu0 %v2492, 108
      %v2680 = vpop.permute.xlu0 %2679
      %2681 = vrot.lane.b32.xlu0 %v2495, 108
      %v2682 = vpop.permute.xlu0 %2681
      %2683 = vrot.lane.b32.xlu0 %v2498, 108
      %v2684 = vpop.permute.xlu0 %2683
      %2685 = vrot.lane.b32.xlu0 %v2501, 108
      %v2686 = vpop.permute.xlu0 %2685
      %2687 = vrot.lane.b32.xlu0 %v2504, 108
      %v2688 = vpop.permute.xlu0 %2687
      %2689 = vrot.lane.b32.xlu0 %v2507, 108
      %v2690 = vpop.permute.xlu0 %2689
      %2691 = vrot.lane.b32.xlu0 %v2510, 108
      %v2692 = vpop.permute.xlu0 %2691
      %2693 = vrot.lane.b32.xlu0 %v2513, 108
      %v2694 = vpop.permute.xlu0 %2693
      %2695 = vrot.lane.b32.xlu0 %v2516, 108
      %v2696 = vpop.permute.xlu0 %2695
      %2697 = vrot.lane.b32.xlu0 %v2519, 108
      %v2698 = vpop.permute.xlu0 %2697
      %2699 = vrot.lane.b32.xlu0 %v2522, 108
      %v2700 = vpop.permute.xlu0 %2699
      %2701 = vrot.lane.b32.xlu0 %v2525, 108
      %v2702 = vpop.permute.xlu0 %2701
      %2703 = vrot.lane.b32.xlu0 %v2528, 108
      %v2704 = vpop.permute.xlu0 %2703
      %2705 = vrot.lane.b32.xlu0 %v2531, 108
      %v2706 = vpop.permute.xlu0 %2705
      %2707 = vrot.lane.b32.xlu0 %v2534, 108
      %v2708 = vpop.permute.xlu0 %2707
      %2709 = vrot.lane.b32.xlu0 %v2537, 108
      %v2710 = vpop.permute.xlu0 %2709
      %2711 = vrot.lane.b32.xlu0 %v2540, 108
      %v2712 = vpop.permute.xlu0 %2711
      %2713 = vrot.lane.b32.xlu0 %v2543, 108
      %v2714 = vpop.permute.xlu0 %2713
      %2715 = vrot.lane.b32.xlu0 %v2546, 108
      %v2716 = vpop.permute.xlu0 %2715
      %2717 = vrot.lane.b32.xlu0 %v2549, 108
      %v2718 = vpop.permute.xlu0 %2717
      %2719 = vrot.lane.b32.xlu0 %v2552, 108
      %v2720 = vpop.permute.xlu0 %2719
      %2721 = vrot.lane.b32.xlu0 %v2555, 108
      %v2722 = vpop.permute.xlu0 %2721
      %2723 = vrot.lane.b32.xlu0 %v2558, 108
      %v2724 = vpop.permute.xlu0 %2723
      %2725 = vrot.lane.b32.xlu0 %v2561, 108
      %v2726 = vpop.permute.xlu0 %2725
      %2727 = vrot.lane.b32.xlu0 %v2564, 108
      %v2728 = vpop.permute.xlu0 %2727
      %2729 = vrot.lane.b32.xlu0 %v2567, 108
      %v2730 = vpop.permute.xlu0 %2729
      %2731 = vrot.lane.b32.xlu0 %v2570, 108
      %v2732 = vpop.permute.xlu0 %2731
      %2733 = vrot.lane.b32.xlu0 %v2573, 108
      %v2734 = vpop.permute.xlu0 %2733
      %v2775 = vadd.f32 %v2575, %v2656
      %v2776 = vadd.f32 %v2576, %v2658
      %v2777 = vadd.f32 %v2577, %v2660
      %v2778 = vadd.f32 %v2578, %v2662
      %v2779 = vadd.f32 %v2579, %v2664
      %v2780 = vadd.f32 %v2580, %v2666
      %v2781 = vadd.f32 %v2581, %v2668
      %v2782 = vadd.f32 %v2582, %v2670
      %v2783 = vadd.f32 %v2583, %v2672
      %v2784 = vadd.f32 %v2584, %v2674
      %v2785 = vadd.f32 %v2585, %v2676
      %v2786 = vadd.f32 %v2586, %v2678
      %v2787 = vadd.f32 %v2587, %v2680
      %v2788 = vadd.f32 %v2588, %v2682
      %v2789 = vadd.f32 %v2589, %v2684
      %v2790 = vadd.f32 %v2590, %v2686
      %v2791 = vadd.f32 %v2591, %v2688
      %v2792 = vadd.f32 %v2592, %v2690
      %v2793 = vadd.f32 %v2593, %v2692
      %v2794 = vadd.f32 %v2594, %v2694
      %v2795 = vadd.f32 %v2595, %v2696
      %v2796 = vadd.f32 %v2596, %v2698
      %v2797 = vadd.f32 %v2597, %v2700
      %v2798 = vadd.f32 %v2598, %v2702
      %v2799 = vadd.f32 %v2599, %v2704
      %v2800 = vadd.f32 %v2600, %v2706
      %v2801 = vadd.f32 %v2601, %v2708
      %v2802 = vadd.f32 %v2602, %v2710
      %v2803 = vadd.f32 %v2603, %v2712
      %v2804 = vadd.f32 %v2604, %v2714
      %v2805 = vadd.f32 %v2605, %v2716
      %v2806 = vadd.f32 %v2606, %v2718
      %v2807 = vadd.f32 %v2607, %v2720
      %v2808 = vadd.f32 %v2608, %v2722
      %v2809 = vadd.f32 %v2609, %v2724
      %v2810 = vadd.f32 %v2610, %v2726
      %v2811 = vadd.f32 %v2611, %v2728
      %v2812 = vadd.f32 %v2612, %v2730
      %v2813 = vadd.f32 %v2613, %v2732
      %v2814 = vadd.f32 %v2614, %v2734
      %v2815 = vmax.f32 %v2775, 0.0
      %v2816 = vmax.f32 %v2776, 0.0
      %v2817 = vmax.f32 %v2777, 0.0
      %v2818 = vmax.f32 %v2778, 0.0
      %v2819 = vmax.f32 %v2779, 0.0
      %v2820 = vmax.f32 %v2780, 0.0
      %v2821 = vmax.f32 %v2781, 0.0
      %v2822 = vmax.f32 %v2782, 0.0
      %v2823 = vmax.f32 %v2783, 0.0
      %v2824 = vmax.f32 %v2784, 0.0
      %v2825 = vmax.f32 %v2785, 0.0
      %v2826 = vmax.f32 %v2786, 0.0
      %v2827 = vmax.f32 %v2787, 0.0
      %v2828 = vmax.f32 %v2788, 0.0
      %v2829 = vmax.f32 %v2789, 0.0
      %v2830 = vmax.f32 %v2790, 0.0
      %v2831 = vmax.f32 %v2791, 0.0
      %v2832 = vmax.f32 %v2792, 0.0
      %v2833 = vmax.f32 %v2793, 0.0
      %v2834 = vmax.f32 %v2794, 0.0
      %v2835 = vmax.f32 %v2795, 0.0
      %v2836 = vmax.f32 %v2796, 0.0
      %v2837 = vmax.f32 %v2797, 0.0
      %v2838 = vmax.f32 %v2798, 0.0
      %v2839 = vmax.f32 %v2799, 0.0
      %v2840 = vmax.f32 %v2800, 0.0
      %v2841 = vmax.f32 %v2801, 0.0
      %v2842 = vmax.f32 %v2802, 0.0
      %v2843 = vmax.f32 %v2803, 0.0
      %v2844 = vmax.f32 %v2804, 0.0
      %v2845 = vmax.f32 %v2805, 0.0
      %v2846 = vmax.f32 %v2806, 0.0
      %v2847 = vmax.f32 %v2807, 0.0
      %v2848 = vmax.f32 %v2808, 0.0
      %v2849 = vmax.f32 %v2809, 0.0
      %v2850 = vmax.f32 %v2810, 0.0
      %v2851 = vmax.f32 %v2811, 0.0
      %v2852 = vmax.f32 %v2812, 0.0
      %v2853 = vmax.f32 %v2813, 0.0
      %v2854 = vmax.f32 %v2814, 0.0
      %s2855 = scalar_lea.vmem %s1, 52
      %v2856 = vld [vmem:[%s2855] sm:$0xf]
      %v2857 = vld [vmem:[%s2855 + $0x4] sm:$0xf]
      %v2858 = vld [vmem:[%s2855 + $0x8] sm:$0xf]
      %v2859 = vld [vmem:[%s2855 + $0xc] sm:$0xf]
      %v2860 = vld [vmem:[%s2855 + $0x10] sm:$0xf]
      %v2861 = vld [vmem:[%s2855 + $0x14] sm:$0xf]
      %v2862 = vld [vmem:[%s2855 + $0x18] sm:$0xf]
      %v2863 = vld [vmem:[%s2855 + $0x1c] sm:$0xf]
      %v2864 = vld [vmem:[%s2855 + $0x20] sm:$0xf]
      %v2865 = vld [vmem:[%s2855 + $0x24] sm:$0xf]
      %v2866 = vld [vmem:[%s2855 + $0x28] sm:$0xf]
      %v2867 = vld [vmem:[%s2855 + $0x2c] sm:$0xf]
      %v2868 = vld [vmem:[%s2855 + $0x30] sm:$0x3]
      %v2870 = vrot.slane %v2854, 6
      %v2911 = vrot.slane %v2815, 6
      %v2912 = vrot.slane %v2816, 6
      %v2913 = vsel %vm644, %v2911, %v2912
      %v2914 = vrot.slane %v2817, 6
      %v2915 = vsel %vm644, %v2912, %v2914
      %v2916 = vrot.slane %v2818, 6
      %v2917 = vsel %vm644, %v2914, %v2916
      %v2918 = vrot.slane %v2819, 6
      %v2919 = vsel %vm644, %v2916, %v2918
      %v2920 = vrot.slane %v2820, 6
      %v2921 = vsel %vm644, %v2918, %v2920
      %v2922 = vrot.slane %v2821, 6
      %v2923 = vsel %vm644, %v2920, %v2922
      %v2924 = vrot.slane %v2822, 6
      %v2925 = vsel %vm644, %v2922, %v2924
      %v2926 = vrot.slane %v2823, 6
      %v2927 = vsel %vm644, %v2924, %v2926
      %v2928 = vrot.slane %v2824, 6
      %v2929 = vsel %vm644, %v2926, %v2928
      %v2930 = vrot.slane %v2825, 6
      %v2931 = vsel %vm644, %v2928, %v2930
      %v2932 = vrot.slane %v2826, 6
      %v2933 = vsel %vm644, %v2930, %v2932
      %v2934 = vrot.slane %v2827, 6
      %v2935 = vsel %vm644, %v2932, %v2934
      %v2936 = vrot.slane %v2828, 6
      %v2937 = vsel %vm644, %v2934, %v2936
      %v2938 = vrot.slane %v2829, 6
      %v2939 = vsel %vm644, %v2936, %v2938
      %v2940 = vrot.slane %v2830, 6
      %v2941 = vsel %vm644, %v2938, %v2940
      %v2942 = vrot.slane %v2831, 6
      %v2943 = vsel %vm644, %v2940, %v2942
      %v2944 = vrot.slane %v2832, 6
      %v2945 = vsel %vm644, %v2942, %v2944
      %v2946 = vrot.slane %v2833, 6
      %v2947 = vsel %vm644, %v2944, %v2946
      %v2948 = vrot.slane %v2834, 6
      %v2949 = vsel %vm644, %v2946, %v2948
      %v2950 = vrot.slane %v2835, 6
      %v2951 = vsel %vm644, %v2948, %v2950
      %v2952 = vrot.slane %v2836, 6
      %v2953 = vsel %vm644, %v2950, %v2952
      %v2954 = vrot.slane %v2837, 6
      %v2955 = vsel %vm644, %v2952, %v2954
      %v2956 = vrot.slane %v2838, 6
      %v2957 = vsel %vm644, %v2954, %v2956
      %v2958 = vrot.slane %v2839, 6
      %v2959 = vsel %vm644, %v2956, %v2958
      %v2960 = vrot.slane %v2840, 6
      %v2961 = vsel %vm644, %v2958, %v2960
      %v2962 = vrot.slane %v2841, 6
      %v2963 = vsel %vm644, %v2960, %v2962
      %v2964 = vrot.slane %v2842, 6
      %v2965 = vsel %vm644, %v2962, %v2964
      %v2966 = vrot.slane %v2843, 6
      %v2967 = vsel %vm644, %v2964, %v2966
      %v2968 = vrot.slane %v2844, 6
      %v2969 = vsel %vm644, %v2966, %v2968
      %v2970 = vrot.slane %v2845, 6
      %v2971 = vsel %vm644, %v2968, %v2970
      %v2972 = vrot.slane %v2846, 6
      %v2973 = vsel %vm644, %v2970, %v2972
      %v2974 = vrot.slane %v2847, 6
      %v2975 = vsel %vm644, %v2972, %v2974
      %v2976 = vrot.slane %v2848, 6
      %v2977 = vsel %vm644, %v2974, %v2976
      %v2978 = vrot.slane %v2849, 6
      %v2979 = vsel %vm644, %v2976, %v2978
      %v2980 = vrot.slane %v2850, 6
      %v2981 = vsel %vm644, %v2978, %v2980
      %v2982 = vrot.slane %v2851, 6
      %v2983 = vsel %vm644, %v2980, %v2982
      %v2984 = vrot.slane %v2852, 6
      %v2985 = vsel %vm644, %v2982, %v2984
      %v2986 = vrot.slane %v2853, 6
      %v2987 = vsel %vm644, %v2984, %v2986
      %v2988 = vsel %vm644, %v2986, %v2870
      %v3029 = vsel %vm644, %v2870, %v2911
      %v3030 = vrot.slane %v2854, 7
      %v3032 = vrot.slane %v2815, 7
      %v3033 = vrot.slane %v2816, 7
      %v3034 = vsel %vm766, %v3032, %v3033
      %v3035 = vrot.slane %v2817, 7
      %v3036 = vsel %vm766, %v3033, %v3035
      %v3037 = vrot.slane %v2818, 7
      %v3038 = vsel %vm766, %v3035, %v3037
      %v3039 = vrot.slane %v2819, 7
      %v3040 = vsel %vm766, %v3037, %v3039
      %v3041 = vrot.slane %v2820, 7
      %v3042 = vsel %vm766, %v3039, %v3041
      %v3043 = vrot.slane %v2821, 7
      %v3044 = vsel %vm766, %v3041, %v3043
      %v3045 = vrot.slane %v2822, 7
      %v3046 = vsel %vm766, %v3043, %v3045
      %v3047 = vrot.slane %v2823, 7
      %v3048 = vsel %vm766, %v3045, %v3047
      %v3049 = vrot.slane %v2824, 7
      %v3050 = vsel %vm766, %v3047, %v3049
      %v3051 = vrot.slane %v2825, 7
      %v3052 = vsel %vm766, %v3049, %v3051
      %v3053 = vrot.slane %v2826, 7
      %v3054 = vsel %vm766, %v3051, %v3053
      %v3055 = vrot.slane %v2827, 7
      %v3056 = vsel %vm766, %v3053, %v3055
      %v3057 = vrot.slane %v2828, 7
      %v3058 = vsel %vm766, %v3055, %v3057
      %v3059 = vrot.slane %v2829, 7
      %v3060 = vsel %vm766, %v3057, %v3059
      %v3061 = vrot.slane %v2830, 7
      %v3062 = vsel %vm766, %v3059, %v3061
      %v3063 = vrot.slane %v2831, 7
      %v3064 = vsel %vm766, %v3061, %v3063
      %v3065 = vrot.slane %v2832, 7
      %v3066 = vsel %vm766, %v3063, %v3065
      %v3067 = vrot.slane %v2833, 7
      %v3068 = vsel %vm766, %v3065, %v3067
      %v3069 = vrot.slane %v2834, 7
      %v3070 = vsel %vm766, %v3067, %v3069
      %v3071 = vrot.slane %v2835, 7
      %v3072 = vsel %vm766, %v3069, %v3071
      %v3073 = vrot.slane %v2836, 7
      %v3074 = vsel %vm766, %v3071, %v3073
      %v3075 = vrot.slane %v2837, 7
      %v3076 = vsel %vm766, %v3073, %v3075
      %v3077 = vrot.slane %v2838, 7
      %v3078 = vsel %vm766, %v3075, %v3077
      %v3079 = vrot.slane %v2839, 7
      %v3080 = vsel %vm766, %v3077, %v3079
      %v3081 = vrot.slane %v2840, 7
      %v3082 = vsel %vm766, %v3079, %v3081
      %v3083 = vrot.slane %v2841, 7
      %v3084 = vsel %vm766, %v3081, %v3083
      %v3085 = vrot.slane %v2842, 7
      %v3086 = vsel %vm766, %v3083, %v3085
      %v3087 = vrot.slane %v2843, 7
      %v3088 = vsel %vm766, %v3085, %v3087
      %v3089 = vrot.slane %v2844, 7
      %v3090 = vsel %vm766, %v3087, %v3089
      %v3091 = vrot.slane %v2845, 7
      %v3092 = vsel %vm766, %v3089, %v3091
      %v3093 = vrot.slane %v2846, 7
      %v3094 = vsel %vm766, %v3091, %v3093
      %v3095 = vrot.slane %v2847, 7
      %v3096 = vsel %vm766, %v3093, %v3095
      %v3097 = vrot.slane %v2848, 7
      %v3098 = vsel %vm766, %v3095, %v3097
      %v3099 = vrot.slane %v2849, 7
      %v3100 = vsel %vm766, %v3097, %v3099
      %v3101 = vrot.slane %v2850, 7
      %v3102 = vsel %vm766, %v3099, %v3101
      %v3103 = vrot.slane %v2851, 7
      %v3104 = vsel %vm766, %v3101, %v3103
      %v3105 = vrot.slane %v2852, 7
      %v3106 = vsel %vm766, %v3103, %v3105
      %v3107 = vrot.slane %v2853, 7
      %v3108 = vsel %vm766, %v3105, %v3107
      %v3109 = vsel %vm766, %v3107, %v3030
      %v3111 = vsel %vm766, %v3030, %v3032
      %v3112 = vrot.slane %v2815, 1
      %v3113 = vrot.slane %v2816, 1
      %v3114 = vsel %vm847, %v3112, %v3113
      %v3115 = vrot.slane %v2817, 1
      %v3116 = vsel %vm847, %v3113, %v3115
      %v3117 = vrot.slane %v2818, 1
      %v3118 = vsel %vm847, %v3115, %v3117
      %v3119 = vrot.slane %v2819, 1
      %v3120 = vsel %vm847, %v3117, %v3119
      %v3121 = vrot.slane %v2820, 1
      %v3122 = vsel %vm847, %v3119, %v3121
      %v3123 = vrot.slane %v2821, 1
      %v3124 = vsel %vm847, %v3121, %v3123
      %v3125 = vrot.slane %v2822, 1
      %v3126 = vsel %vm847, %v3123, %v3125
      %v3127 = vrot.slane %v2823, 1
      %v3128 = vsel %vm847, %v3125, %v3127
      %v3129 = vrot.slane %v2824, 1
      %v3130 = vsel %vm847, %v3127, %v3129
      %v3131 = vrot.slane %v2825, 1
      %v3132 = vsel %vm847, %v3129, %v3131
      %v3133 = vrot.slane %v2826, 1
      %v3134 = vsel %vm847, %v3131, %v3133
      %v3135 = vrot.slane %v2827, 1
      %v3136 = vsel %vm847, %v3133, %v3135
      %v3137 = vrot.slane %v2828, 1
      %v3138 = vsel %vm847, %v3135, %v3137
      %v3139 = vrot.slane %v2829, 1
      %v3140 = vsel %vm847, %v3137, %v3139
      %v3141 = vrot.slane %v2830, 1
      %v3142 = vsel %vm847, %v3139, %v3141
      %v3143 = vrot.slane %v2831, 1
      %v3144 = vsel %vm847, %v3141, %v3143
      %v3145 = vrot.slane %v2832, 1
      %v3146 = vsel %vm847, %v3143, %v3145
      %v3147 = vrot.slane %v2833, 1
      %v3148 = vsel %vm847, %v3145, %v3147
      %v3149 = vrot.slane %v2834, 1
      %v3150 = vsel %vm847, %v3147, %v3149
      %v3151 = vrot.slane %v2835, 1
      %v3152 = vsel %vm847, %v3149, %v3151
      %v3153 = vrot.slane %v2836, 1
      %v3154 = vsel %vm847, %v3151, %v3153
      %v3155 = vrot.slane %v2837, 1
      %v3156 = vsel %vm847, %v3153, %v3155
      %v3157 = vrot.slane %v2838, 1
      %v3158 = vsel %vm847, %v3155, %v3157
      %v3159 = vrot.slane %v2839, 1
      %v3160 = vsel %vm847, %v3157, %v3159
      %v3161 = vrot.slane %v2840, 1
      %v3162 = vsel %vm847, %v3159, %v3161
      %v3163 = vrot.slane %v2841, 1
      %v3164 = vsel %vm847, %v3161, %v3163
      %v3165 = vrot.slane %v2842, 1
      %v3166 = vsel %vm847, %v3163, %v3165
      %v3167 = vrot.slane %v2843, 1
      %v3168 = vsel %vm847, %v3165, %v3167
      %v3169 = vrot.slane %v2844, 1
      %v3170 = vsel %vm847, %v3167, %v3169
      %v3171 = vrot.slane %v2845, 1
      %v3172 = vsel %vm847, %v3169, %v3171
      %v3173 = vrot.slane %v2846, 1
      %v3174 = vsel %vm847, %v3171, %v3173
      %v3175 = vrot.slane %v2847, 1
      %v3176 = vsel %vm847, %v3173, %v3175
      %v3177 = vrot.slane %v2848, 1
      %v3178 = vsel %vm847, %v3175, %v3177
      %v3179 = vrot.slane %v2849, 1
      %v3180 = vsel %vm847, %v3177, %v3179
      %v3181 = vrot.slane %v2850, 1
      %v3182 = vsel %vm847, %v3179, %v3181
      %v3183 = vrot.slane %v2851, 1
      %v3184 = vsel %vm847, %v3181, %v3183
      %v3185 = vrot.slane %v2852, 1
      %v3186 = vsel %vm847, %v3183, %v3185
      %v3187 = vrot.slane %v2853, 1
      %v3188 = vsel %vm847, %v3185, %v3187
      %v3189 = vrot.slane %v2854, 1
      %v3190 = vsel %vm847, %v3187, %v3189
      %v3193 = vsel %vm847, %v3189, %v3112
      %v3194 = vrot.slane %v2815, 2
      %v3195 = vrot.slane %v2816, 2
      %v3196 = vsel %vm930, %v3194, %v3195
      %v3197 = vrot.slane %v2817, 2
      %v3198 = vsel %vm930, %v3195, %v3197
      %v3199 = vrot.slane %v2818, 2
      %v3200 = vsel %vm930, %v3197, %v3199
      %v3201 = vrot.slane %v2819, 2
      %v3202 = vsel %vm930, %v3199, %v3201
      %v3203 = vrot.slane %v2820, 2
      %v3204 = vsel %vm930, %v3201, %v3203
      %v3205 = vrot.slane %v2821, 2
      %v3206 = vsel %vm930, %v3203, %v3205
      %v3207 = vrot.slane %v2822, 2
      %v3208 = vsel %vm930, %v3205, %v3207
      %v3209 = vrot.slane %v2823, 2
      %v3210 = vsel %vm930, %v3207, %v3209
      %v3211 = vrot.slane %v2824, 2
      %v3212 = vsel %vm930, %v3209, %v3211
      %v3213 = vrot.slane %v2825, 2
      %v3214 = vsel %vm930, %v3211, %v3213
      %v3215 = vrot.slane %v2826, 2
      %v3216 = vsel %vm930, %v3213, %v3215
      %v3217 = vrot.slane %v2827, 2
      %v3218 = vsel %vm930, %v3215, %v3217
      %v3219 = vrot.slane %v2828, 2
      %v3220 = vsel %vm930, %v3217, %v3219
      %v3221 = vrot.slane %v2829, 2
      %v3222 = vsel %vm930, %v3219, %v3221
      %v3223 = vrot.slane %v2830, 2
      %v3224 = vsel %vm930, %v3221, %v3223
      %v3225 = vrot.slane %v2831, 2
      %v3226 = vsel %vm930, %v3223, %v3225
      %v3227 = vrot.slane %v2832, 2
      %v3228 = vsel %vm930, %v3225, %v3227
      %v3229 = vrot.slane %v2833, 2
      %v3230 = vsel %vm930, %v3227, %v3229
      %v3231 = vrot.slane %v2834, 2
      %v3232 = vsel %vm930, %v3229, %v3231
      %v3233 = vrot.slane %v2835, 2
      %v3234 = vsel %vm930, %v3231, %v3233
      %v3235 = vrot.slane %v2836, 2
      %v3236 = vsel %vm930, %v3233, %v3235
      %v3237 = vrot.slane %v2837, 2
      %v3238 = vsel %vm930, %v3235, %v3237
      %v3239 = vrot.slane %v2838, 2
      %v3240 = vsel %vm930, %v3237, %v3239
      %v3241 = vrot.slane %v2839, 2
      %v3242 = vsel %vm930, %v3239, %v3241
      %v3243 = vrot.slane %v2840, 2
      %v3244 = vsel %vm930, %v3241, %v3243
      %v3245 = vrot.slane %v2841, 2
      %v3246 = vsel %vm930, %v3243, %v3245
      %v3247 = vrot.slane %v2842, 2
      %v3248 = vsel %vm930, %v3245, %v3247
      %v3249 = vrot.slane %v2843, 2
      %v3250 = vsel %vm930, %v3247, %v3249
      %v3251 = vrot.slane %v2844, 2
      %v3252 = vsel %vm930, %v3249, %v3251
      %v3253 = vrot.slane %v2845, 2
      %v3254 = vsel %vm930, %v3251, %v3253
      %v3255 = vrot.slane %v2846, 2
      %v3256 = vsel %vm930, %v3253, %v3255
      %v3257 = vrot.slane %v2847, 2
      %v3258 = vsel %vm930, %v3255, %v3257
      %v3259 = vrot.slane %v2848, 2
      %v3260 = vsel %vm930, %v3257, %v3259
      %v3261 = vrot.slane %v2849, 2
      %v3262 = vsel %vm930, %v3259, %v3261
      %v3263 = vrot.slane %v2850, 2
      %v3264 = vsel %vm930, %v3261, %v3263
      %v3265 = vrot.slane %v2851, 2
      %v3266 = vsel %vm930, %v3263, %v3265
      %v3267 = vrot.slane %v2852, 2
      %v3268 = vsel %vm930, %v3265, %v3267
      %v3269 = vrot.slane %v2853, 2
      %v3270 = vsel %vm930, %v3267, %v3269
      %v3271 = vrot.slane %v2854, 2
      %v3272 = vsel %vm930, %v3269, %v3271
      %v3275 = vsel %vm930, %v3271, %v3194
      %3277 = vrot.lane.b32.xlu0 %v3111, 20
      %v3278 = vpop.permute.xlu0 %3277
      %3279 = vrot.lane.b32.xlu0 %v3034, 20
      %v3280 = vpop.permute.xlu0 %3279
      %3281 = vrot.lane.b32.xlu0 %v3036, 20
      %v3282 = vpop.permute.xlu0 %3281
      %3283 = vrot.lane.b32.xlu0 %v3038, 20
      %v3284 = vpop.permute.xlu0 %3283
      %3285 = vrot.lane.b32.xlu0 %v3040, 20
      %v3286 = vpop.permute.xlu0 %3285
      %3287 = vrot.lane.b32.xlu0 %v3042, 20
      %v3288 = vpop.permute.xlu0 %3287
      %3289 = vrot.lane.b32.xlu0 %v3044, 20
      %v3290 = vpop.permute.xlu0 %3289
      %3291 = vrot.lane.b32.xlu0 %v3046, 20
      %v3292 = vpop.permute.xlu0 %3291
      %3293 = vrot.lane.b32.xlu0 %v3048, 20
      %v3294 = vpop.permute.xlu0 %3293
      %3295 = vrot.lane.b32.xlu0 %v3050, 20
      %v3296 = vpop.permute.xlu0 %3295
      %3297 = vrot.lane.b32.xlu0 %v3052, 20
      %v3298 = vpop.permute.xlu0 %3297
      %3299 = vrot.lane.b32.xlu0 %v3054, 20
      %v3300 = vpop.permute.xlu0 %3299
      %3301 = vrot.lane.b32.xlu0 %v3056, 20
      %v3302 = vpop.permute.xlu0 %3301
      %3303 = vrot.lane.b32.xlu0 %v3058, 20
      %v3304 = vpop.permute.xlu0 %3303
      %3305 = vrot.lane.b32.xlu0 %v3060, 20
      %v3306 = vpop.permute.xlu0 %3305
      %3307 = vrot.lane.b32.xlu0 %v3062, 20
      %v3308 = vpop.permute.xlu0 %3307
      %3309 = vrot.lane.b32.xlu0 %v3064, 20
      %v3310 = vpop.permute.xlu0 %3309
      %3311 = vrot.lane.b32.xlu0 %v3066, 20
      %v3312 = vpop.permute.xlu0 %3311
      %3313 = vrot.lane.b32.xlu0 %v3068, 20
      %v3314 = vpop.permute.xlu0 %3313
      %3315 = vrot.lane.b32.xlu0 %v3070, 20
      %v3316 = vpop.permute.xlu0 %3315
      %3317 = vrot.lane.b32.xlu0 %v3072, 20
      %v3318 = vpop.permute.xlu0 %3317
      %3319 = vrot.lane.b32.xlu0 %v3074, 20
      %v3320 = vpop.permute.xlu0 %3319
      %3321 = vrot.lane.b32.xlu0 %v3076, 20
      %v3322 = vpop.permute.xlu0 %3321
      %3323 = vrot.lane.b32.xlu0 %v3078, 20
      %v3324 = vpop.permute.xlu0 %3323
      %3325 = vrot.lane.b32.xlu0 %v3080, 20
      %v3326 = vpop.permute.xlu0 %3325
      %3327 = vrot.lane.b32.xlu0 %v3082, 20
      %v3328 = vpop.permute.xlu0 %3327
      %3329 = vrot.lane.b32.xlu0 %v3084, 20
      %v3330 = vpop.permute.xlu0 %3329
      %3331 = vrot.lane.b32.xlu0 %v3086, 20
      %v3332 = vpop.permute.xlu0 %3331
      %3333 = vrot.lane.b32.xlu0 %v3088, 20
      %v3334 = vpop.permute.xlu0 %3333
      %3335 = vrot.lane.b32.xlu0 %v3090, 20
      %v3336 = vpop.permute.xlu0 %3335
      %3337 = vrot.lane.b32.xlu0 %v3092, 20
      %v3338 = vpop.permute.xlu0 %3337
      %3339 = vrot.lane.b32.xlu0 %v3094, 20
      %v3340 = vpop.permute.xlu0 %3339
      %3341 = vrot.lane.b32.xlu0 %v3096, 20
      %v3342 = vpop.permute.xlu0 %3341
      %3343 = vrot.lane.b32.xlu0 %v3098, 20
      %v3344 = vpop.permute.xlu0 %3343
      %3345 = vrot.lane.b32.xlu0 %v3100, 20
      %v3346 = vpop.permute.xlu0 %3345
      %3347 = vrot.lane.b32.xlu0 %v3102, 20
      %v3348 = vpop.permute.xlu0 %3347
      %3349 = vrot.lane.b32.xlu0 %v3104, 20
      %v3350 = vpop.permute.xlu0 %3349
      %3351 = vrot.lane.b32.xlu0 %v3106, 20
      %v3352 = vpop.permute.xlu0 %3351
      %3353 = vrot.lane.b32.xlu0 %v3108, 20
      %v3354 = vpop.permute.xlu0 %3353
      %3355 = vrot.lane.b32.xlu0 %v3109, 20
      %v3356 = vpop.permute.xlu0 %3355
      %3397 = vrot.lane.b32.xlu0 %v2815, 40
      %v3398 = vpop.permute.xlu0 %3397
      %3399 = vrot.lane.b32.xlu0 %v2816, 40
      %v3400 = vpop.permute.xlu0 %3399
      %3401 = vrot.lane.b32.xlu0 %v2817, 40
      %v3402 = vpop.permute.xlu0 %3401
      %3403 = vrot.lane.b32.xlu0 %v2818, 40
      %v3404 = vpop.permute.xlu0 %3403
      %3405 = vrot.lane.b32.xlu0 %v2819, 40
      %v3406 = vpop.permute.xlu0 %3405
      %3407 = vrot.lane.b32.xlu0 %v2820, 40
      %v3408 = vpop.permute.xlu0 %3407
      %3409 = vrot.lane.b32.xlu0 %v2821, 40
      %v3410 = vpop.permute.xlu0 %3409
      %3411 = vrot.lane.b32.xlu0 %v2822, 40
      %v3412 = vpop.permute.xlu0 %3411
      %3413 = vrot.lane.b32.xlu0 %v2823, 40
      %v3414 = vpop.permute.xlu0 %3413
      %3415 = vrot.lane.b32.xlu0 %v2824, 40
      %v3416 = vpop.permute.xlu0 %3415
      %3417 = vrot.lane.b32.xlu0 %v2825, 40
      %v3418 = vpop.permute.xlu0 %3417
      %3419 = vrot.lane.b32.xlu0 %v2826, 40
      %v3420 = vpop.permute.xlu0 %3419
      %3421 = vrot.lane.b32.xlu0 %v2827, 40
      %v3422 = vpop.permute.xlu0 %3421
      %3423 = vrot.lane.b32.xlu0 %v2828, 40
      %v3424 = vpop.permute.xlu0 %3423
      %3425 = vrot.lane.b32.xlu0 %v2829, 40
      %v3426 = vpop.permute.xlu0 %3425
      %3427 = vrot.lane.b32.xlu0 %v2830, 40
      %v3428 = vpop.permute.xlu0 %3427
      %3429 = vrot.lane.b32.xlu0 %v2831, 40
      %v3430 = vpop.permute.xlu0 %3429
      %3431 = vrot.lane.b32.xlu0 %v2832, 40
      %v3432 = vpop.permute.xlu0 %3431
      %3433 = vrot.lane.b32.xlu0 %v2833, 40
      %v3434 = vpop.permute.xlu0 %3433
      %3435 = vrot.lane.b32.xlu0 %v2834, 40
      %v3436 = vpop.permute.xlu0 %3435
      %3437 = vrot.lane.b32.xlu0 %v2835, 40
      %v3438 = vpop.permute.xlu0 %3437
      %3439 = vrot.lane.b32.xlu0 %v2836, 40
      %v3440 = vpop.permute.xlu0 %3439
      %3441 = vrot.lane.b32.xlu0 %v2837, 40
      %v3442 = vpop.permute.xlu0 %3441
      %3443 = vrot.lane.b32.xlu0 %v2838, 40
      %v3444 = vpop.permute.xlu0 %3443
      %3445 = vrot.lane.b32.xlu0 %v2839, 40
      %v3446 = vpop.permute.xlu0 %3445
      %3447 = vrot.lane.b32.xlu0 %v2840, 40
      %v3448 = vpop.permute.xlu0 %3447
      %3449 = vrot.lane.b32.xlu0 %v2841, 40
      %v3450 = vpop.permute.xlu0 %3449
      %3451 = vrot.lane.b32.xlu0 %v2842, 40
      %v3452 = vpop.permute.xlu0 %3451
      %3453 = vrot.lane.b32.xlu0 %v2843, 40
      %v3454 = vpop.permute.xlu0 %3453
      %3455 = vrot.lane.b32.xlu0 %v2844, 40
      %v3456 = vpop.permute.xlu0 %3455
      %3457 = vrot.lane.b32.xlu0 %v2845, 40
      %v3458 = vpop.permute.xlu0 %3457
      %3459 = vrot.lane.b32.xlu0 %v2846, 40
      %v3460 = vpop.permute.xlu0 %3459
      %3461 = vrot.lane.b32.xlu0 %v2847, 40
      %v3462 = vpop.permute.xlu0 %3461
      %3463 = vrot.lane.b32.xlu0 %v2848, 40
      %v3464 = vpop.permute.xlu0 %3463
      %3465 = vrot.lane.b32.xlu0 %v2849, 40
      %v3466 = vpop.permute.xlu0 %3465
      %3467 = vrot.lane.b32.xlu0 %v2850, 40
      %v3468 = vpop.permute.xlu0 %3467
      %3469 = vrot.lane.b32.xlu0 %v2851, 40
      %v3470 = vpop.permute.xlu0 %3469
      %3471 = vrot.lane.b32.xlu0 %v2852, 40
      %v3472 = vpop.permute.xlu0 %3471
      %3473 = vrot.lane.b32.xlu0 %v2853, 40
      %v3474 = vpop.permute.xlu0 %3473
      %3475 = vrot.lane.b32.xlu0 %v2854, 40
      %v3476 = vpop.permute.xlu0 %3475
      %3518 = vrot.lane.b32.xlu0 %v3114, 60
      %v3519 = vpop.permute.xlu0 %3518
      %3520 = vrot.lane.b32.xlu0 %v3116, 60
      %v3521 = vpop.permute.xlu0 %3520
      %3522 = vrot.lane.b32.xlu0 %v3118, 60
      %v3523 = vpop.permute.xlu0 %3522
      %3524 = vrot.lane.b32.xlu0 %v3120, 60
      %v3525 = vpop.permute.xlu0 %3524
      %3526 = vrot.lane.b32.xlu0 %v3122, 60
      %v3527 = vpop.permute.xlu0 %3526
      %3528 = vrot.lane.b32.xlu0 %v3124, 60
      %v3529 = vpop.permute.xlu0 %3528
      %3530 = vrot.lane.b32.xlu0 %v3126, 60
      %v3531 = vpop.permute.xlu0 %3530
      %3532 = vrot.lane.b32.xlu0 %v3128, 60
      %v3533 = vpop.permute.xlu0 %3532
      %3534 = vrot.lane.b32.xlu0 %v3130, 60
      %v3535 = vpop.permute.xlu0 %3534
      %3536 = vrot.lane.b32.xlu0 %v3132, 60
      %v3537 = vpop.permute.xlu0 %3536
      %3538 = vrot.lane.b32.xlu0 %v3134, 60
      %v3539 = vpop.permute.xlu0 %3538
      %3540 = vrot.lane.b32.xlu0 %v3136, 60
      %v3541 = vpop.permute.xlu0 %3540
      %3542 = vrot.lane.b32.xlu0 %v3138, 60
      %v3543 = vpop.permute.xlu0 %3542
      %3544 = vrot.lane.b32.xlu0 %v3140, 60
      %v3545 = vpop.permute.xlu0 %3544
      %3546 = vrot.lane.b32.xlu0 %v3142, 60
      %v3547 = vpop.permute.xlu0 %3546
      %3548 = vrot.lane.b32.xlu0 %v3144, 60
      %v3549 = vpop.permute.xlu0 %3548
      %3550 = vrot.lane.b32.xlu0 %v3146, 60
      %v3551 = vpop.permute.xlu0 %3550
      %3552 = vrot.lane.b32.xlu0 %v3148, 60
      %v3553 = vpop.permute.xlu0 %3552
      %3554 = vrot.lane.b32.xlu0 %v3150, 60
      %v3555 = vpop.permute.xlu0 %3554
      %3556 = vrot.lane.b32.xlu0 %v3152, 60
      %v3557 = vpop.permute.xlu0 %3556
      %3558 = vrot.lane.b32.xlu0 %v3154, 60
      %v3559 = vpop.permute.xlu0 %3558
      %3560 = vrot.lane.b32.xlu0 %v3156, 60
      %v3561 = vpop.permute.xlu0 %3560
      %3562 = vrot.lane.b32.xlu0 %v3158, 60
      %v3563 = vpop.permute.xlu0 %3562
      %3564 = vrot.lane.b32.xlu0 %v3160, 60
      %v3565 = vpop.permute.xlu0 %3564
      %3566 = vrot.lane.b32.xlu0 %v3162, 60
      %v3567 = vpop.permute.xlu0 %3566
      %3568 = vrot.lane.b32.xlu0 %v3164, 60
      %v3569 = vpop.permute.xlu0 %3568
      %3570 = vrot.lane.b32.xlu0 %v3166, 60
      %v3571 = vpop.permute.xlu0 %3570
      %3572 = vrot.lane.b32.xlu0 %v3168, 60
      %v3573 = vpop.permute.xlu0 %3572
      %3574 = vrot.lane.b32.xlu0 %v3170, 60
      %v3575 = vpop.permute.xlu0 %3574
      %3576 = vrot.lane.b32.xlu0 %v3172, 60
      %v3577 = vpop.permute.xlu0 %3576
      %3578 = vrot.lane.b32.xlu0 %v3174, 60
      %v3579 = vpop.permute.xlu0 %3578
      %3580 = vrot.lane.b32.xlu0 %v3176, 60
      %v3581 = vpop.permute.xlu0 %3580
      %3582 = vrot.lane.b32.xlu0 %v3178, 60
      %v3583 = vpop.permute.xlu0 %3582
      %3584 = vrot.lane.b32.xlu0 %v3180, 60
      %v3585 = vpop.permute.xlu0 %3584
      %3586 = vrot.lane.b32.xlu0 %v3182, 60
      %v3587 = vpop.permute.xlu0 %3586
      %3588 = vrot.lane.b32.xlu0 %v3184, 60
      %v3589 = vpop.permute.xlu0 %3588
      %3590 = vrot.lane.b32.xlu0 %v3186, 60
      %v3591 = vpop.permute.xlu0 %3590
      %3592 = vrot.lane.b32.xlu0 %v3188, 60
      %v3593 = vpop.permute.xlu0 %3592
      %3594 = vrot.lane.b32.xlu0 %v3190, 60
      %v3595 = vpop.permute.xlu0 %3594
      %3596 = vrot.lane.b32.xlu0 %v3193, 60
      %v3597 = vpop.permute.xlu0 %3596
      %3639 = vrot.lane.b32.xlu0 %v3196, 80
      %v3640 = vpop.permute.xlu0 %3639
      %3641 = vrot.lane.b32.xlu0 %v3198, 80
      %v3642 = vpop.permute.xlu0 %3641
      %3643 = vrot.lane.b32.xlu0 %v3200, 80
      %v3644 = vpop.permute.xlu0 %3643
      %3645 = vrot.lane.b32.xlu0 %v3202, 80
      %v3646 = vpop.permute.xlu0 %3645
      %3647 = vrot.lane.b32.xlu0 %v3204, 80
      %v3648 = vpop.permute.xlu0 %3647
      %3649 = vrot.lane.b32.xlu0 %v3206, 80
      %v3650 = vpop.permute.xlu0 %3649
      %3651 = vrot.lane.b32.xlu0 %v3208, 80
      %v3652 = vpop.permute.xlu0 %3651
      %3653 = vrot.lane.b32.xlu0 %v3210, 80
      %v3654 = vpop.permute.xlu0 %3653
      %3655 = vrot.lane.b32.xlu0 %v3212, 80
      %v3656 = vpop.permute.xlu0 %3655
      %3657 = vrot.lane.b32.xlu0 %v3214, 80
      %v3658 = vpop.permute.xlu0 %3657
      %3659 = vrot.lane.b32.xlu0 %v3216, 80
      %v3660 = vpop.permute.xlu0 %3659
      %3661 = vrot.lane.b32.xlu0 %v3218, 80
      %v3662 = vpop.permute.xlu0 %3661
      %3663 = vrot.lane.b32.xlu0 %v3220, 80
      %v3664 = vpop.permute.xlu0 %3663
      %3665 = vrot.lane.b32.xlu0 %v3222, 80
      %v3666 = vpop.permute.xlu0 %3665
      %3667 = vrot.lane.b32.xlu0 %v3224, 80
      %v3668 = vpop.permute.xlu0 %3667
      %3669 = vrot.lane.b32.xlu0 %v3226, 80
      %v3670 = vpop.permute.xlu0 %3669
      %3671 = vrot.lane.b32.xlu0 %v3228, 80
      %v3672 = vpop.permute.xlu0 %3671
      %3673 = vrot.lane.b32.xlu0 %v3230, 80
      %v3674 = vpop.permute.xlu0 %3673
      %3675 = vrot.lane.b32.xlu0 %v3232, 80
      %v3676 = vpop.permute.xlu0 %3675
      %3677 = vrot.lane.b32.xlu0 %v3234, 80
      %v3678 = vpop.permute.xlu0 %3677
      %3679 = vrot.lane.b32.xlu0 %v3236, 80
      %v3680 = vpop.permute.xlu0 %3679
      %3681 = vrot.lane.b32.xlu0 %v3238, 80
      %v3682 = vpop.permute.xlu0 %3681
      %3683 = vrot.lane.b32.xlu0 %v3240, 80
      %v3684 = vpop.permute.xlu0 %3683
      %3685 = vrot.lane.b32.xlu0 %v3242, 80
      %v3686 = vpop.permute.xlu0 %3685
      %3687 = vrot.lane.b32.xlu0 %v3244, 80
      %v3688 = vpop.permute.xlu0 %3687
      %3689 = vrot.lane.b32.xlu0 %v3246, 80
      %v3690 = vpop.permute.xlu0 %3689
      %3691 = vrot.lane.b32.xlu0 %v3248, 80
      %v3692 = vpop.permute.xlu0 %3691
      %3693 = vrot.lane.b32.xlu0 %v3250, 80
      %v3694 = vpop.permute.xlu0 %3693
      %3695 = vrot.lane.b32.xlu0 %v3252, 80
      %v3696 = vpop.permute.xlu0 %3695
      %3697 = vrot.lane.b32.xlu0 %v3254, 80
      %v3698 = vpop.permute.xlu0 %3697
      %3699 = vrot.lane.b32.xlu0 %v3256, 80
      %v3700 = vpop.permute.xlu0 %3699
      %3701 = vrot.lane.b32.xlu0 %v3258, 80
      %v3702 = vpop.permute.xlu0 %3701
      %3703 = vrot.lane.b32.xlu0 %v3260, 80
      %v3704 = vpop.permute.xlu0 %3703
      %3705 = vrot.lane.b32.xlu0 %v3262, 80
      %v3706 = vpop.permute.xlu0 %3705
      %3707 = vrot.lane.b32.xlu0 %v3264, 80
      %v3708 = vpop.permute.xlu0 %3707
      %3709 = vrot.lane.b32.xlu0 %v3266, 80
      %v3710 = vpop.permute.xlu0 %3709
      %3711 = vrot.lane.b32.xlu0 %v3268, 80
      %v3712 = vpop.permute.xlu0 %3711
      %3713 = vrot.lane.b32.xlu0 %v3270, 80
      %v3714 = vpop.permute.xlu0 %3713
      %3715 = vrot.lane.b32.xlu0 %v3272, 80
      %v3716 = vpop.permute.xlu0 %3715
      %3717 = vrot.lane.b32.xlu0 %v3275, 80
      %v3718 = vpop.permute.xlu0 %3717
      %v3759 = vsel %vm1496, %v3029, %v3278
      %v3760 = vsel %vm1496, %v2913, %v3280
      %v3761 = vsel %vm1496, %v2915, %v3282
      %v3762 = vsel %vm1496, %v2917, %v3284
      %v3763 = vsel %vm1496, %v2919, %v3286
      %v3764 = vsel %vm1496, %v2921, %v3288
      %v3765 = vsel %vm1496, %v2923, %v3290
      %v3766 = vsel %vm1496, %v2925, %v3292
      %v3767 = vsel %vm1496, %v2927, %v3294
      %v3768 = vsel %vm1496, %v2929, %v3296
      %v3769 = vsel %vm1496, %v2931, %v3298
      %v3770 = vsel %vm1496, %v2933, %v3300
      %v3771 = vsel %vm1496, %v2935, %v3302
      %v3772 = vsel %vm1496, %v2937, %v3304
      %v3773 = vsel %vm1496, %v2939, %v3306
      %v3774 = vsel %vm1496, %v2941, %v3308
      %v3775 = vsel %vm1496, %v2943, %v3310
      %v3776 = vsel %vm1496, %v2945, %v3312
      %v3777 = vsel %vm1496, %v2947, %v3314
      %v3778 = vsel %vm1496, %v2949, %v3316
      %v3779 = vsel %vm1496, %v2951, %v3318
      %v3780 = vsel %vm1496, %v2953, %v3320
      %v3781 = vsel %vm1496, %v2955, %v3322
      %v3782 = vsel %vm1496, %v2957, %v3324
      %v3783 = vsel %vm1496, %v2959, %v3326
      %v3784 = vsel %vm1496, %v2961, %v3328
      %v3785 = vsel %vm1496, %v2963, %v3330
      %v3786 = vsel %vm1496, %v2965, %v3332
      %v3787 = vsel %vm1496, %v2967, %v3334
      %v3788 = vsel %vm1496, %v2969, %v3336
      %v3789 = vsel %vm1496, %v2971, %v3338
      %v3790 = vsel %vm1496, %v2973, %v3340
      %v3791 = vsel %vm1496, %v2975, %v3342
      %v3792 = vsel %vm1496, %v2977, %v3344
      %v3793 = vsel %vm1496, %v2979, %v3346
      %v3794 = vsel %vm1496, %v2981, %v3348
      %v3795 = vsel %vm1496, %v2983, %v3350
      %v3796 = vsel %vm1496, %v2985, %v3352
      %v3797 = vsel %vm1496, %v2987, %v3354
      %v3798 = vsel %vm1496, %v2988, %v3356
      %v3799 = vsel %vm1537, %v3759, %v3398
      %v3800 = vsel %vm1537, %v3760, %v3400
      %v3801 = vsel %vm1537, %v3761, %v3402
      %v3802 = vsel %vm1537, %v3762, %v3404
      %v3803 = vsel %vm1537, %v3763, %v3406
      %v3804 = vsel %vm1537, %v3764, %v3408
      %v3805 = vsel %vm1537, %v3765, %v3410
      %v3806 = vsel %vm1537, %v3766, %v3412
      %v3807 = vsel %vm1537, %v3767, %v3414
      %v3808 = vsel %vm1537, %v3768, %v3416
      %v3809 = vsel %vm1537, %v3769, %v3418
      %v3810 = vsel %vm1537, %v3770, %v3420
      %v3811 = vsel %vm1537, %v3771, %v3422
      %v3812 = vsel %vm1537, %v3772, %v3424
      %v3813 = vsel %vm1537, %v3773, %v3426
      %v3814 = vsel %vm1537, %v3774, %v3428
      %v3815 = vsel %vm1537, %v3775, %v3430
      %v3816 = vsel %vm1537, %v3776, %v3432
      %v3817 = vsel %vm1537, %v3777, %v3434
      %v3818 = vsel %vm1537, %v3778, %v3436
      %v3819 = vsel %vm1537, %v3779, %v3438
      %v3820 = vsel %vm1537, %v3780, %v3440
      %v3821 = vsel %vm1537, %v3781, %v3442
      %v3822 = vsel %vm1537, %v3782, %v3444
      %v3823 = vsel %vm1537, %v3783, %v3446
      %v3824 = vsel %vm1537, %v3784, %v3448
      %v3825 = vsel %vm1537, %v3785, %v3450
      %v3826 = vsel %vm1537, %v3786, %v3452
      %v3827 = vsel %vm1537, %v3787, %v3454
      %v3828 = vsel %vm1537, %v3788, %v3456
      %v3829 = vsel %vm1537, %v3789, %v3458
      %v3830 = vsel %vm1537, %v3790, %v3460
      %v3831 = vsel %vm1537, %v3791, %v3462
      %v3832 = vsel %vm1537, %v3792, %v3464
      %v3833 = vsel %vm1537, %v3793, %v3466
      %v3834 = vsel %vm1537, %v3794, %v3468
      %v3835 = vsel %vm1537, %v3795, %v3470
      %v3836 = vsel %vm1537, %v3796, %v3472
      %v3837 = vsel %vm1537, %v3797, %v3474
      %v3838 = vsel %vm1537, %v3798, %v3476
      %v3839 = vsel %vm1578, %v3799, %v3519
      %v3840 = vsel %vm1578, %v3800, %v3521
      %v3841 = vsel %vm1578, %v3801, %v3523
      %v3842 = vsel %vm1578, %v3802, %v3525
      %v3843 = vsel %vm1578, %v3803, %v3527
      %v3844 = vsel %vm1578, %v3804, %v3529
      %v3845 = vsel %vm1578, %v3805, %v3531
      %v3846 = vsel %vm1578, %v3806, %v3533
      %v3847 = vsel %vm1578, %v3807, %v3535
      %v3848 = vsel %vm1578, %v3808, %v3537
      %v3849 = vsel %vm1578, %v3809, %v3539
      %v3850 = vsel %vm1578, %v3810, %v3541
      %v3851 = vsel %vm1578, %v3811, %v3543
      %v3852 = vsel %vm1578, %v3812, %v3545
      %v3853 = vsel %vm1578, %v3813, %v3547
      %v3854 = vsel %vm1578, %v3814, %v3549
      %v3855 = vsel %vm1578, %v3815, %v3551
      %v3856 = vsel %vm1578, %v3816, %v3553
      %v3857 = vsel %vm1578, %v3817, %v3555
      %v3858 = vsel %vm1578, %v3818, %v3557
      %v3859 = vsel %vm1578, %v3819, %v3559
      %v3860 = vsel %vm1578, %v3820, %v3561
      %v3861 = vsel %vm1578, %v3821, %v3563
      %v3862 = vsel %vm1578, %v3822, %v3565
      %v3863 = vsel %vm1578, %v3823, %v3567
      %v3864 = vsel %vm1578, %v3824, %v3569
      %v3865 = vsel %vm1578, %v3825, %v3571
      %v3866 = vsel %vm1578, %v3826, %v3573
      %v3867 = vsel %vm1578, %v3827, %v3575
      %v3868 = vsel %vm1578, %v3828, %v3577
      %v3869 = vsel %vm1578, %v3829, %v3579
      %v3870 = vsel %vm1578, %v3830, %v3581
      %v3871 = vsel %vm1578, %v3831, %v3583
      %v3872 = vsel %vm1578, %v3832, %v3585
      %v3873 = vsel %vm1578, %v3833, %v3587
      %v3874 = vsel %vm1578, %v3834, %v3589
      %v3875 = vsel %vm1578, %v3835, %v3591
      %v3876 = vsel %vm1578, %v3836, %v3593
      %v3877 = vsel %vm1578, %v3837, %v3595
      %v3878 = vsel %vm1578, %v3838, %v3597
      %v3879 = vsel %vm1619, %v3839, %v3640
      %v3880 = vsel %vm1619, %v3840, %v3642
      %v3881 = vsel %vm1619, %v3841, %v3644
      %v3882 = vsel %vm1619, %v3842, %v3646
      %v3883 = vsel %vm1619, %v3843, %v3648
      %v3884 = vsel %vm1619, %v3844, %v3650
      %v3885 = vsel %vm1619, %v3845, %v3652
      %v3886 = vsel %vm1619, %v3846, %v3654
      %v3887 = vsel %vm1619, %v3847, %v3656
      %v3888 = vsel %vm1619, %v3848, %v3658
      %v3889 = vsel %vm1619, %v3849, %v3660
      %v3890 = vsel %vm1619, %v3850, %v3662
      %v3891 = vsel %vm1619, %v3851, %v3664
      %v3892 = vsel %vm1619, %v3852, %v3666
      %v3893 = vsel %vm1619, %v3853, %v3668
      %v3894 = vsel %vm1619, %v3854, %v3670
      %v3895 = vsel %vm1619, %v3855, %v3672
      %v3896 = vsel %vm1619, %v3856, %v3674
      %v3897 = vsel %vm1619, %v3857, %v3676
      %v3898 = vsel %vm1619, %v3858, %v3678
      %v3899 = vsel %vm1619, %v3859, %v3680
      %v3900 = vsel %vm1619, %v3860, %v3682
      %v3901 = vsel %vm1619, %v3861, %v3684
      %v3902 = vsel %vm1619, %v3862, %v3686
      %v3903 = vsel %vm1619, %v3863, %v3688
      %v3904 = vsel %vm1619, %v3864, %v3690
      %v3905 = vsel %vm1619, %v3865, %v3692
      %v3906 = vsel %vm1619, %v3866, %v3694
      %v3907 = vsel %vm1619, %v3867, %v3696
      %v3908 = vsel %vm1619, %v3868, %v3698
      %v3909 = vsel %vm1619, %v3869, %v3700
      %v3910 = vsel %vm1619, %v3870, %v3702
      %v3911 = vsel %vm1619, %v3871, %v3704
      %v3912 = vsel %vm1619, %v3872, %v3706
      %v3913 = vsel %vm1619, %v3873, %v3708
      %v3914 = vsel %vm1619, %v3874, %v3710
      %v3915 = vsel %vm1619, %v3875, %v3712
      %v3916 = vsel %vm1619, %v3876, %v3714
      %v3917 = vsel %vm1619, %v3877, %v3716
      %v3918 = vsel %vm1619, %v3878, %v3718
      %v3919 = vpack.c.bf16 %v3880, %v3879
      %v3920 = vpack.c.bf16 %v3882, %v3881
      %v3921 = vpack.c.bf16 %v3884, %v3883
      %v3922 = vpack.c.bf16 %v3886, %v3885
      %v3923 = vpack.c.bf16 %v3888, %v3887
      %v3924 = vpack.c.bf16 %v3890, %v3889
      %v3925 = vpack.c.bf16 %v3892, %v3891
      %v3926 = vpack.c.bf16 %v3894, %v3893
      %v3927 = vpack.c.bf16 %v3896, %v3895
      %v3928 = vpack.c.bf16 %v3898, %v3897
      %v3929 = vpack.c.bf16 %v3900, %v3899
      %v3930 = vpack.c.bf16 %v3902, %v3901
      %v3931 = vpack.c.bf16 %v3904, %v3903
      %v3932 = vpack.c.bf16 %v3906, %v3905
      %v3933 = vpack.c.bf16 %v3908, %v3907
      %v3934 = vpack.c.bf16 %v3910, %v3909
      %v3935 = vpack.c.bf16 %v3912, %v3911
      %v3936 = vpack.c.bf16 %v3914, %v3913
      %v3937 = vpack.c.bf16 %v3916, %v3915
      %v3938 = vpack.c.bf16 %v3918, %v3917
      %v3939 = vperm.slane %v300, 3
      %v3953 = vunpack.c.l.b16 %v2856
      %v3954 = vunpack.c.l.b16 %v2857
      %v3955 = vunpack.c.l.b16 %v2858
      %v3956 = vunpack.c.l.b16 %v2859
      %v3957 = vunpack.c.l.b16 %v2860
      %v3958 = vunpack.c.l.b16 %v2861
      %v3959 = vunpack.c.l.b16 %v2862
      %v3960 = vunpack.c.l.b16 %v2863
      %v3961 = vunpack.c.l.b16 %v2864
      %v3962 = vunpack.c.l.b16 %v2865
      %v3963 = vunpack.c.l.b16 %v2866
      %v3964 = vunpack.c.l.b16 %v2867
      %v3965 = vunpack.c.l.b16 %v2868
      %v3966 = vpack.c.b16 %v3954, %v3953
      %v3967 = vpack.c.b16 %v3956, %v3955
      %v3968 = vpack.c.b16 %v3958, %v3957
      %v3969 = vpack.c.b16 %v3960, %v3959
      %v3970 = vpack.c.b16 %v3962, %v3961
      %v3971 = vpack.c.b16 %v3964, %v3963
      %v3972 = vpack.c.b16 %v3965, %v3965
      %v3980 = vsel %vm1720, %v3919, 0
      %v3983 = vsel %vm1720, %v3920, 0
      %v3986 = vsel %vm1720, %v3921, 0
      %v3989 = vsel %vm1720, %v3922, 0
      %v3992 = vsel %vm1720, %v3923, 0
      %v3995 = vsel %vm1720, %v3924, 0
      %v3998 = vsel %vm1720, %v3925, 0
      %v4001 = vsel %vm1720, %v3926, 0
      %v4004 = vsel %vm1720, %v3927, 0
      %v4007 = vsel %vm1720, %v3928, 0
      %v4010 = vsel %vm1720, %v3929, 0
      %v4013 = vsel %vm1720, %v3930, 0
      %v4016 = vsel %vm1720, %v3931, 0
      %v4019 = vsel %vm1720, %v3932, 0
      %v4022 = vsel %vm1720, %v3933, 0
      %v4025 = vsel %vm1720, %v3934, 0
      %v4028 = vsel %vm1720, %v3935, 0
      %v4031 = vsel %vm1720, %v3936, 0
      %v4034 = vsel %vm1720, %v3937, 0
      %v4037 = vsel %vm1720, %v3938, 0
      %v4040 = vsel %vm644, %v3972, 0
      %4042 = vmatpush.bf16.msra.mxu0 0
      %4043 = vmatpush.bf16.msra.mxu0 %v4040
      %4044 = vmatpush.bf16.msra.mxu0 %v3971
      %4045 = vmatpush.bf16.msra.mxu0 %v3970
      %4046 = vmatpush.bf16.msra.mxu0 %v3969
      %4047 = vmatpush.bf16.msra.mxu0 %v3968
      %4048 = vmatpush.bf16.msra.mxu0 %v3967
      %4049 = vmatpush.bf16.msra.mxu0 %v3966
      %4050 = vmatmul.bf16.gmra.mxu0 %v3980
      %v4051 = vpop.f32.mrf.mxu0
      %v4052 = vadd.f32 %v3939, %v4051
      %v4053 = vpop.f32.mrf.mxu0
      %v4054 = vadd.f32 %v3939, %v4053
      %4055 = vmatmul.bf16.gmra.mxu0 %v3983
      %v4056 = vpop.f32.mrf.mxu0
      %v4057 = vadd.f32 %v3939, %v4056
      %v4058 = vpop.f32.mrf.mxu0
      %v4059 = vadd.f32 %v3939, %v4058
      %4060 = vmatmul.bf16.gmra.mxu0 %v3986
      %v4061 = vpop.f32.mrf.mxu0
      %v4062 = vadd.f32 %v3939, %v4061
      %v4063 = vpop.f32.mrf.mxu0
      %v4064 = vadd.f32 %v3939, %v4063
      %4065 = vmatmul.bf16.gmra.mxu0 %v3989
      %v4066 = vpop.f32.mrf.mxu0
      %v4067 = vadd.f32 %v3939, %v4066
      %v4068 = vpop.f32.mrf.mxu0
      %v4069 = vadd.f32 %v3939, %v4068
      %4070 = vmatmul.bf16.gmra.mxu0 %v3992
      %v4071 = vpop.f32.mrf.mxu0
      %v4072 = vadd.f32 %v3939, %v4071
      %v4073 = vpop.f32.mrf.mxu0
      %v4074 = vadd.f32 %v3939, %v4073
      %4075 = vmatmul.bf16.gmra.mxu0 %v3995
      %v4076 = vpop.f32.mrf.mxu0
      %v4077 = vadd.f32 %v3939, %v4076
      %v4078 = vpop.f32.mrf.mxu0
      %v4079 = vadd.f32 %v3939, %v4078
      %4080 = vmatmul.bf16.gmra.mxu0 %v3998
      %v4081 = vpop.f32.mrf.mxu0
      %v4082 = vadd.f32 %v3939, %v4081
      %v4083 = vpop.f32.mrf.mxu0
      %v4084 = vadd.f32 %v3939, %v4083
      %4085 = vmatmul.bf16.gmra.mxu0 %v4001
      %v4086 = vpop.f32.mrf.mxu0
      %v4087 = vadd.f32 %v3939, %v4086
      %v4088 = vpop.f32.mrf.mxu0
      %v4089 = vadd.f32 %v3939, %v4088
      %4090 = vmatmul.bf16.gmra.mxu0 %v4004
      %v4091 = vpop.f32.mrf.mxu0
      %v4092 = vadd.f32 %v3939, %v4091
      %v4093 = vpop.f32.mrf.mxu0
      %v4094 = vadd.f32 %v3939, %v4093
      %4095 = vmatmul.bf16.gmra.mxu0 %v4007
      %v4096 = vpop.f32.mrf.mxu0
      %v4097 = vadd.f32 %v3939, %v4096
      %v4098 = vpop.f32.mrf.mxu0
      %v4099 = vadd.f32 %v3939, %v4098
      %4100 = vmatmul.bf16.gmra.mxu0 %v4010
      %v4101 = vpop.f32.mrf.mxu0
      %v4102 = vadd.f32 %v3939, %v4101
      %v4103 = vpop.f32.mrf.mxu0
      %v4104 = vadd.f32 %v3939, %v4103
      %4105 = vmatmul.bf16.gmra.mxu0 %v4013
      %v4106 = vpop.f32.mrf.mxu0
      %v4107 = vadd.f32 %v3939, %v4106
      %v4108 = vpop.f32.mrf.mxu0
      %v4109 = vadd.f32 %v3939, %v4108
      %4110 = vmatmul.bf16.gmra.mxu0 %v4016
      %v4111 = vpop.f32.mrf.mxu0
      %v4112 = vadd.f32 %v3939, %v4111
      %v4113 = vpop.f32.mrf.mxu0
      %v4114 = vadd.f32 %v3939, %v4113
      %4115 = vmatmul.bf16.gmra.mxu0 %v4019
      %v4116 = vpop.f32.mrf.mxu0
      %v4117 = vadd.f32 %v3939, %v4116
      %v4118 = vpop.f32.mrf.mxu0
      %v4119 = vadd.f32 %v3939, %v4118
      %4120 = vmatmul.bf16.gmra.mxu0 %v4022
      %v4121 = vpop.f32.mrf.mxu0
      %v4122 = vadd.f32 %v3939, %v4121
      %v4123 = vpop.f32.mrf.mxu0
      %v4124 = vadd.f32 %v3939, %v4123
      %4125 = vmatmul.bf16.gmra.mxu0 %v4025
      %v4126 = vpop.f32.mrf.mxu0
      %v4127 = vadd.f32 %v3939, %v4126
      %v4128 = vpop.f32.mrf.mxu0
      %v4129 = vadd.f32 %v3939, %v4128
      %4130 = vmatmul.bf16.gmra.mxu0 %v4028
      %v4131 = vpop.f32.mrf.mxu0
      %v4132 = vadd.f32 %v3939, %v4131
      %v4133 = vpop.f32.mrf.mxu0
      %v4134 = vadd.f32 %v3939, %v4133
      %4135 = vmatmul.bf16.gmra.mxu0 %v4031
      %v4136 = vpop.f32.mrf.mxu0
      %v4137 = vadd.f32 %v3939, %v4136
      %v4138 = vpop.f32.mrf.mxu0
      %v4139 = vadd.f32 %v3939, %v4138
      %4140 = vmatmul.bf16.gmra.mxu0 %v4034
      %v4141 = vpop.f32.mrf.mxu0
      %v4142 = vadd.f32 %v3939, %v4141
      %v4143 = vpop.f32.mrf.mxu0
      %v4144 = vadd.f32 %v3939, %v4143
      %4145 = vmatmul.bf16.gmra.mxu0 %v4037
      %v4146 = vpop.f32.mrf.mxu0
      %v4147 = vadd.f32 %v3939, %v4146
      %v4148 = vpop.f32.mrf.mxu0
      %v4149 = vadd.f32 %v3939, %v4148
      %4150 = vdwg.mxu0
      %v4151 = vadd.f32 %v4052, %v260
      %v4152 = vadd.f32 %v4054, %v261
      %v4153 = vadd.f32 %v4057, %v262
      %v4154 = vadd.f32 %v4059, %v263
      %v4155 = vadd.f32 %v4062, %v264
      %v4156 = vadd.f32 %v4064, %v265
      %v4157 = vadd.f32 %v4067, %v266
      %v4158 = vadd.f32 %v4069, %v267
      %v4159 = vadd.f32 %v4072, %v268
      %v4160 = vadd.f32 %v4074, %v269
      %v4161 = vadd.f32 %v4077, %v270
      %v4162 = vadd.f32 %v4079, %v271
      %v4163 = vadd.f32 %v4082, %v272
      %v4164 = vadd.f32 %v4084, %v273
      %v4165 = vadd.f32 %v4087, %v274
      %v4166 = vadd.f32 %v4089, %v275
      %v4167 = vadd.f32 %v4092, %v276
      %v4168 = vadd.f32 %v4094, %v277
      %v4169 = vadd.f32 %v4097, %v278
      %v4170 = vadd.f32 %v4099, %v279
      %v4171 = vadd.f32 %v4102, %v280
      %v4172 = vadd.f32 %v4104, %v281
      %v4173 = vadd.f32 %v4107, %v282
      %v4174 = vadd.f32 %v4109, %v283
      %v4175 = vadd.f32 %v4112, %v284
      %v4176 = vadd.f32 %v4114, %v285
      %v4177 = vadd.f32 %v4117, %v286
      %v4178 = vadd.f32 %v4119, %v287
      %v4179 = vadd.f32 %v4122, %v288
      %v4180 = vadd.f32 %v4124, %v289
      %v4181 = vadd.f32 %v4127, %v290
      %v4182 = vadd.f32 %v4129, %v291
      %v4183 = vadd.f32 %v4132, %v292
      %v4184 = vadd.f32 %v4134, %v293
      %v4185 = vadd.f32 %v4137, %v294
      %v4186 = vadd.f32 %v4139, %v295
      %v4187 = vadd.f32 %v4142, %v296
      %v4188 = vadd.f32 %v4144, %v297
      %v4189 = vadd.f32 %v4147, %v298
      %v4190 = vadd.f32 %v4149, %v299
      %4191 = vmatpush.msra.mxu0 %v4166
      %4192 = vmatpush.msra.mxu0 %v4165
      %4193 = vmatpush.msra.mxu0 %v4164
      %4194 = vmatpush.msra.mxu0 %v4163
      %4195 = vmatpush.msra.mxu0 %v4162
      %4196 = vmatpush.msra.mxu0 %v4161
      %4197 = vmatpush.msra.mxu0 %v4160
      %4198 = vmatpush.msra.mxu0 %v4159
      %4199 = vmatpush.msra.mxu0 %v4158
      %4200 = vmatpush.msra.mxu0 %v4157
      %4201 = vmatpush.msra.mxu0 %v4156
      %4202 = vmatpush.msra.mxu0 %v4155
      %4203 = vmatpush.msra.mxu0 %v4154
      %4204 = vmatpush.msra.mxu0 %v4153
      %4205 = vmatpush.msra.mxu0 %v4152
      %4206 = vmatpush.msra.mxu0 %v4151
      %4207 = vmatmul.f32.gmra.mxu0 %v342
      %v4208 = vpop.f32.mrf.mxu0
      %v4209 = vadd.f32 0.0, %v4208
      %4210 = vmatmul.f32.gmra.mxu0 %v345
      %v4211 = vpop.f32.mrf.mxu0
      %v4212 = vadd.f32 0.0, %v4211
      %4213 = vdwg.mxu0
      %4214 = vmatpush.msra.mxu0 %v4182
      %4215 = vmatpush.msra.mxu0 %v4181
      %4216 = vmatpush.msra.mxu0 %v4180
      %4217 = vmatpush.msra.mxu0 %v4179
      %4218 = vmatpush.msra.mxu0 %v4178
      %4219 = vmatpush.msra.mxu0 %v4177
      %4220 = vmatpush.msra.mxu0 %v4176
      %4221 = vmatpush.msra.mxu0 %v4175
      %4222 = vmatpush.msra.mxu0 %v4174
      %4223 = vmatpush.msra.mxu0 %v4173
      %4224 = vmatpush.msra.mxu0 %v4172
      %4225 = vmatpush.msra.mxu0 %v4171
      %4226 = vmatpush.msra.mxu0 %v4170
      %4227 = vmatpush.msra.mxu0 %v4169
      %4228 = vmatpush.msra.mxu0 %v4168
      %4229 = vmatpush.msra.mxu0 %v4167
      %4230 = vmatmul.f32.gmra.mxu0 %v343
      %v4231 = vpop.f32.mrf.mxu0
      %v4232 = vadd.f32 %v4209, %v4231
      %4233 = vmatmul.f32.gmra.mxu0 %v346
      %v4234 = vpop.f32.mrf.mxu0
      %v4235 = vadd.f32 %v4212, %v4234
      %4236 = vdwg.mxu0
      %4237 = vmatpush.msra.mxu0 0.0
      %4238 = vmatpush.msra.mxu0 0.0
      %4239 = vmatpush.msra.mxu0 0.0
      %4240 = vmatpush.msra.mxu0 0.0
      %4241 = vmatpush.msra.mxu0 0.0
      %4242 = vmatpush.msra.mxu0 0.0
      %4243 = vmatpush.msra.mxu0 0.0
      %4244 = vmatpush.msra.mxu0 0.0
      %4245 = vmatpush.msra.mxu0 %v4190
      %4246 = vmatpush.msra.mxu0 %v4189
      %4247 = vmatpush.msra.mxu0 %v4188
      %4248 = vmatpush.msra.mxu0 %v4187
      %4249 = vmatpush.msra.mxu0 %v4186
      %4250 = vmatpush.msra.mxu0 %v4185
      %4251 = vmatpush.msra.mxu0 %v4184
      %4252 = vmatpush.msra.mxu0 %v4183
      %4253 = vmatmul.f32.gmra.mxu0 %v2135
      %v4254 = vpop.f32.mrf.mxu0
      %v4255 = vadd.f32 %v4232, %v4254
      %4256 = vmatmul.f32.gmra.mxu0 %v2138
      %v4257 = vpop.f32.mrf.mxu0
      %v4258 = vadd.f32 %v4235, %v4257
      %4259 = vdwg.mxu0
      %v4260 = vmul.f32 %v4255, 0.0625
      %v4261 = vmul.f32 %v4258, 0.0625
      %v4262 = vpack.c.bf16 %v4261, %v4260
      %s4263 = scalar_lea.vmem %s2, 12
      %v4264 = vld [vmem:[%s4263] sm:$0xf]
      %v4265 = vld [vmem:[%s4263 + $0x4] sm:$0xf]
      %v4266 = vld [vmem:[%s4263 + $0x8] sm:$0x3]
      %v4267 = vperm.slane %v300, 6
      %v4271 = vunpack.c.l.b16 %v4264
      %v4272 = vunpack.c.l.b16 %v4265
      %v4273 = vunpack.c.l.b16 %v4266
      %v4274 = vpack.c.b16 %v4272, %v4271
      %v4275 = vpack.c.b16 %v4273, %v4273
      %v4278 = vsel %vm1496, %v4262, 0
      %v4281 = vsel %vm644, %v4275, 0
      %4283 = vmatpush.bf16.msra.mxu0 0
      %4284 = vmatpush.bf16.msra.mxu0 0
      %4285 = vmatpush.bf16.msra.mxu0 0
      %4286 = vmatpush.bf16.msra.mxu0 0
      %4287 = vmatpush.bf16.msra.mxu0 0
      %4288 = vmatpush.bf16.msra.mxu0 0
      %4289 = vmatpush.bf16.msra.mxu0 %v4281
      %4290 = vmatpush.bf16.msra.mxu0 %v4274
      %4291 = vmatmul.bf16.gmra.mxu0 %v4278
      %v4292 = vpop.f32.mrf.mxu0
      %v4293 = vadd.f32 %v4267, %v4292
      %v4294 = vpop.f32.mrf.mxu0
      %v4295 = vadd.f32 %v4267, %v4294
      %4296 = vdwg.mxu0
      %v4297 = vmax.f32 %v4293, 0.0
      %v4298 = vmax.f32 %v4295, 0.0
      %4300 = vset.pattern.permute.xlu0 1
      %4301 = vperm.xlu0 %4300, %v301
      %v4302 = vpop.permute.xlu0 %4301
      %v4305 = vrot.slane %v300, 7
      %v4306 = vsel %vm1496, %v4305, 0
      %v4309 = vsel %vm1496, %v4297, 0
      %v4312 = vsel %vm1496, %v4298, 0
      %4314 = vmatpush.xpose.msra.mxu0 0.0
      %4315 = vmatpush.xpose.msra.mxu0 0.0
      %4316 = vmatpush.xpose.msra.mxu0 0.0
      %4317 = vmatpush.xpose.msra.mxu0 0.0
      %4318 = vmatpush.xpose.msra.mxu0 0.0
      %4319 = vmatpush.xpose.msra.mxu0 0.0
      %4320 = vmatpush.xpose.msra.mxu0 0.0
      %4321 = vmatpush.xpose.msra.mxu0 0.0
      %4322 = vmatpush.xpose.msra.mxu0 0.0
      %4323 = vmatpush.xpose.msra.mxu0 0.0
      %4324 = vmatpush.xpose.msra.mxu0 0.0
      %4325 = vmatpush.xpose.msra.mxu0 0.0
      %4326 = vmatpush.xpose.msra.mxu0 0.0
      %4327 = vmatpush.xpose.msra.mxu0 0.0
      %4328 = vmatpush.xpose.msra.mxu0 %v4312
      %4329 = vmatpush.xpose.msra.mxu0 %v4309
      %4330 = vmatmul.f32.gmra.mxu0 %v4306
      %v4331 = vpop.f32.mrf.mxu0
      %v4332 = vadd.f32 %v4302, %v4331
      %4333 = vdwg.mxu0
      %vm4334 = vcmask 122880
      %4335 = vst.msk [vmem:[%s258] sm:$0x1] %vm4334, %v4332
      %v4336 = vpack.c.bf16 %v4152, %v4151
      %v4337 = vpack.c.bf16 %v4154, %v4153
      %v4338 = vpack.c.bf16 %v4156, %v4155
      %v4339 = vpack.c.bf16 %v4158, %v4157
      %v4340 = vpack.c.bf16 %v4160, %v4159
      %v4341 = vpack.c.bf16 %v4162, %v4161
      %v4342 = vpack.c.bf16 %v4164, %v4163
      %v4343 = vpack.c.bf16 %v4166, %v4165
      %v4344 = vpack.c.bf16 %v4168, %v4167
      %v4345 = vpack.c.bf16 %v4170, %v4169
      %v4346 = vpack.c.bf16 %v4172, %v4171
      %v4347 = vpack.c.bf16 %v4174, %v4173
      %v4348 = vpack.c.bf16 %v4176, %v4175
      %v4349 = vpack.c.bf16 %v4178, %v4177
      %v4350 = vpack.c.bf16 %v4180, %v4179
      %v4351 = vpack.c.bf16 %v4182, %v4181
      %v4352 = vpack.c.bf16 %v4184, %v4183
      %v4353 = vpack.c.bf16 %v4186, %v4185
      %v4354 = vpack.c.bf16 %v4188, %v4187
      %v4355 = vpack.c.bf16 %v4190, %v4189
      %v4356 = vld [vmem:[%s2] sm:$0xf]
      %v4357 = vld [vmem:[%s2 + $0x4] sm:$0xf]
      %v4358 = vld [vmem:[%s2 + $0x8] sm:$0x3]
      %v4359 = vperm.slane %v300, 4
      %v4363 = vunpack.c.l.b16 %v4356
      %v4364 = vunpack.c.l.b16 %v4357
      %v4365 = vunpack.c.l.b16 %v4358
      %v4366 = vpack.c.b16 %v4364, %v4363
      %v4367 = vpack.c.b16 %v4365, %v4365
      %v4370 = vsel %vm1496, %v4336, 0
      %v4373 = vsel %vm1496, %v4337, 0
      %v4376 = vsel %vm1496, %v4338, 0
      %v4379 = vsel %vm1496, %v4339, 0
      %v4382 = vsel %vm1496, %v4340, 0
      %v4385 = vsel %vm1496, %v4341, 0
      %v4388 = vsel %vm1496, %v4342, 0
      %v4391 = vsel %vm1496, %v4343, 0
      %v4394 = vsel %vm1496, %v4344, 0
      %v4397 = vsel %vm1496, %v4345, 0
      %v4400 = vsel %vm1496, %v4346, 0
      %v4403 = vsel %vm1496, %v4347, 0
      %v4406 = vsel %vm1496, %v4348, 0
      %v4409 = vsel %vm1496, %v4349, 0
      %v4412 = vsel %vm1496, %v4350, 0
      %v4415 = vsel %vm1496, %v4351, 0
      %v4418 = vsel %vm1496, %v4352, 0
      %v4421 = vsel %vm1496, %v4353, 0
      %v4424 = vsel %vm1496, %v4354, 0
      %v4427 = vsel %vm1496, %v4355, 0
      %v4430 = vsel %vm644, %v4367, 0
      %4432 = vmatpush.bf16.msra.mxu0 0
      %4433 = vmatpush.bf16.msra.mxu0 0
      %4434 = vmatpush.bf16.msra.mxu0 0
      %4435 = vmatpush.bf16.msra.mxu0 0
      %4436 = vmatpush.bf16.msra.mxu0 0
      %4437 = vmatpush.bf16.msra.mxu0 0
      %4438 = vmatpush.bf16.msra.mxu0 %v4430
      %4439 = vmatpush.bf16.msra.mxu0 %v4366
      %4440 = vmatmul.bf16.gmra.mxu0 %v4370
      %v4441 = vpop.f32.mrf.mxu0
      %v4442 = vadd.f32 %v4359, %v4441
      %v4443 = vpop.f32.mrf.mxu0
      %v4444 = vadd.f32 %v4359, %v4443
      %4445 = vmatmul.bf16.gmra.mxu0 %v4373
      %v4446 = vpop.f32.mrf.mxu0
      %v4447 = vadd.f32 %v4359, %v4446
      %v4448 = vpop.f32.mrf.mxu0
      %v4449 = vadd.f32 %v4359, %v4448
      %4450 = vmatmul.bf16.gmra.mxu0 %v4376
      %v4451 = vpop.f32.mrf.mxu0
      %v4452 = vadd.f32 %v4359, %v4451
      %v4453 = vpop.f32.mrf.mxu0
      %v4454 = vadd.f32 %v4359, %v4453
      %4455 = vmatmul.bf16.gmra.mxu0 %v4379
      %v4456 = vpop.f32.mrf.mxu0
      %v4457 = vadd.f32 %v4359, %v4456
      %v4458 = vpop.f32.mrf.mxu0
      %v4459 = vadd.f32 %v4359, %v4458
      %4460 = vmatmul.bf16.gmra.mxu0 %v4382
      %v4461 = vpop.f32.mrf.mxu0
      %v4462 = vadd.f32 %v4359, %v4461
      %v4463 = vpop.f32.mrf.mxu0
      %v4464 = vadd.f32 %v4359, %v4463
      %4465 = vmatmul.bf16.gmra.mxu0 %v4385
      %v4466 = vpop.f32.mrf.mxu0
      %v4467 = vadd.f32 %v4359, %v4466
      %v4468 = vpop.f32.mrf.mxu0
      %v4469 = vadd.f32 %v4359, %v4468
      %4470 = vmatmul.bf16.gmra.mxu0 %v4388
      %v4471 = vpop.f32.mrf.mxu0
      %v4472 = vadd.f32 %v4359, %v4471
      %v4473 = vpop.f32.mrf.mxu0
      %v4474 = vadd.f32 %v4359, %v4473
      %4475 = vmatmul.bf16.gmra.mxu0 %v4391
      %v4476 = vpop.f32.mrf.mxu0
      %v4477 = vadd.f32 %v4359, %v4476
      %v4478 = vpop.f32.mrf.mxu0
      %v4479 = vadd.f32 %v4359, %v4478
      %4480 = vmatmul.bf16.gmra.mxu0 %v4394
      %v4481 = vpop.f32.mrf.mxu0
      %v4482 = vadd.f32 %v4359, %v4481
      %v4483 = vpop.f32.mrf.mxu0
      %v4484 = vadd.f32 %v4359, %v4483
      %4485 = vmatmul.bf16.gmra.mxu0 %v4397
      %v4486 = vpop.f32.mrf.mxu0
      %v4487 = vadd.f32 %v4359, %v4486
      %v4488 = vpop.f32.mrf.mxu0
      %v4489 = vadd.f32 %v4359, %v4488
      %4490 = vmatmul.bf16.gmra.mxu0 %v4400
      %v4491 = vpop.f32.mrf.mxu0
      %v4492 = vadd.f32 %v4359, %v4491
      %v4493 = vpop.f32.mrf.mxu0
      %v4494 = vadd.f32 %v4359, %v4493
      %4495 = vmatmul.bf16.gmra.mxu0 %v4403
      %v4496 = vpop.f32.mrf.mxu0
      %v4497 = vadd.f32 %v4359, %v4496
      %v4498 = vpop.f32.mrf.mxu0
      %v4499 = vadd.f32 %v4359, %v4498
      %4500 = vmatmul.bf16.gmra.mxu0 %v4406
      %v4501 = vpop.f32.mrf.mxu0
      %v4502 = vadd.f32 %v4359, %v4501
      %v4503 = vpop.f32.mrf.mxu0
      %v4504 = vadd.f32 %v4359, %v4503
      %4505 = vmatmul.bf16.gmra.mxu0 %v4409
      %v4506 = vpop.f32.mrf.mxu0
      %v4507 = vadd.f32 %v4359, %v4506
      %v4508 = vpop.f32.mrf.mxu0
      %v4509 = vadd.f32 %v4359, %v4508
      %4510 = vmatmul.bf16.gmra.mxu0 %v4412
      %v4511 = vpop.f32.mrf.mxu0
      %v4512 = vadd.f32 %v4359, %v4511
      %v4513 = vpop.f32.mrf.mxu0
      %v4514 = vadd.f32 %v4359, %v4513
      %4515 = vmatmul.bf16.gmra.mxu0 %v4415
      %v4516 = vpop.f32.mrf.mxu0
      %v4517 = vadd.f32 %v4359, %v4516
      %v4518 = vpop.f32.mrf.mxu0
      %v4519 = vadd.f32 %v4359, %v4518
      %4520 = vmatmul.bf16.gmra.mxu0 %v4418
      %v4521 = vpop.f32.mrf.mxu0
      %v4522 = vadd.f32 %v4359, %v4521
      %v4523 = vpop.f32.mrf.mxu0
      %v4524 = vadd.f32 %v4359, %v4523
      %4525 = vmatmul.bf16.gmra.mxu0 %v4421
      %v4526 = vpop.f32.mrf.mxu0
      %v4527 = vadd.f32 %v4359, %v4526
      %v4528 = vpop.f32.mrf.mxu0
      %v4529 = vadd.f32 %v4359, %v4528
      %4530 = vmatmul.bf16.gmra.mxu0 %v4424
      %v4531 = vpop.f32.mrf.mxu0
      %v4532 = vadd.f32 %v4359, %v4531
      %v4533 = vpop.f32.mrf.mxu0
      %v4534 = vadd.f32 %v4359, %v4533
      %4535 = vmatmul.bf16.gmra.mxu0 %v4427
      %v4536 = vpop.f32.mrf.mxu0
      %v4537 = vadd.f32 %v4359, %v4536
      %v4538 = vpop.f32.mrf.mxu0
      %v4539 = vadd.f32 %v4359, %v4538
      %4540 = vdwg.mxu0
      %v4541 = vmax.f32 %v4442, 0.0
      %v4542 = vmax.f32 %v4444, 0.0
      %v4543 = vmax.f32 %v4447, 0.0
      %v4544 = vmax.f32 %v4449, 0.0
      %v4545 = vmax.f32 %v4452, 0.0
      %v4546 = vmax.f32 %v4454, 0.0
      %v4547 = vmax.f32 %v4457, 0.0
      %v4548 = vmax.f32 %v4459, 0.0
      %v4549 = vmax.f32 %v4462, 0.0
      %v4550 = vmax.f32 %v4464, 0.0
      %v4551 = vmax.f32 %v4467, 0.0
      %v4552 = vmax.f32 %v4469, 0.0
      %v4553 = vmax.f32 %v4472, 0.0
      %v4554 = vmax.f32 %v4474, 0.0
      %v4555 = vmax.f32 %v4477, 0.0
      %v4556 = vmax.f32 %v4479, 0.0
      %v4557 = vmax.f32 %v4482, 0.0
      %v4558 = vmax.f32 %v4484, 0.0
      %v4559 = vmax.f32 %v4487, 0.0
      %v4560 = vmax.f32 %v4489, 0.0
      %v4561 = vmax.f32 %v4492, 0.0
      %v4562 = vmax.f32 %v4494, 0.0
      %v4563 = vmax.f32 %v4497, 0.0
      %v4564 = vmax.f32 %v4499, 0.0
      %v4565 = vmax.f32 %v4502, 0.0
      %v4566 = vmax.f32 %v4504, 0.0
      %v4567 = vmax.f32 %v4507, 0.0
      %v4568 = vmax.f32 %v4509, 0.0
      %v4569 = vmax.f32 %v4512, 0.0
      %v4570 = vmax.f32 %v4514, 0.0
      %v4571 = vmax.f32 %v4517, 0.0
      %v4572 = vmax.f32 %v4519, 0.0
      %v4573 = vmax.f32 %v4522, 0.0
      %v4574 = vmax.f32 %v4524, 0.0
      %v4575 = vmax.f32 %v4527, 0.0
      %v4576 = vmax.f32 %v4529, 0.0
      %v4577 = vmax.f32 %v4532, 0.0
      %v4578 = vmax.f32 %v4534, 0.0
      %v4579 = vmax.f32 %v4537, 0.0
      %v4580 = vmax.f32 %v4539, 0.0
      %4581 = vset.pattern.permute.xlu0 0
      %4582 = vperm.xlu0 %4581, %v301
      %v4583 = vpop.permute.xlu0 %4582
      %v4585 = vrot.slane %v300, 5
      %v4586 = vsel %vm1496, %v4585, 0
      %v4589 = vsel %vm1496, %v4541, 0
      %v4592 = vsel %vm1496, %v4542, 0
      %v4595 = vsel %vm1496, %v4543, 0
      %v4598 = vsel %vm1496, %v4544, 0
      %v4601 = vsel %vm1496, %v4545, 0
      %v4604 = vsel %vm1496, %v4546, 0
      %v4607 = vsel %vm1496, %v4547, 0
      %v4610 = vsel %vm1496, %v4548, 0
      %v4613 = vsel %vm1496, %v4549, 0
      %v4616 = vsel %vm1496, %v4550, 0
      %v4619 = vsel %vm1496, %v4551, 0
      %v4622 = vsel %vm1496, %v4552, 0
      %v4625 = vsel %vm1496, %v4553, 0
      %v4628 = vsel %vm1496, %v4554, 0
      %v4631 = vsel %vm1496, %v4555, 0
      %v4634 = vsel %vm1496, %v4556, 0
      %v4637 = vsel %vm1496, %v4557, 0
      %v4640 = vsel %vm1496, %v4558, 0
      %v4643 = vsel %vm1496, %v4559, 0
      %v4646 = vsel %vm1496, %v4560, 0
      %v4649 = vsel %vm1496, %v4561, 0
      %v4652 = vsel %vm1496, %v4562, 0
      %v4655 = vsel %vm1496, %v4563, 0
      %v4658 = vsel %vm1496, %v4564, 0
      %v4661 = vsel %vm1496, %v4565, 0
      %v4664 = vsel %vm1496, %v4566, 0
      %v4667 = vsel %vm1496, %v4567, 0
      %v4670 = vsel %vm1496, %v4568, 0
      %v4673 = vsel %vm1496, %v4569, 0
      %v4676 = vsel %vm1496, %v4570, 0
      %v4679 = vsel %vm1496, %v4571, 0
      %v4682 = vsel %vm1496, %v4572, 0
      %v4685 = vsel %vm1496, %v4573, 0
      %v4688 = vsel %vm1496, %v4574, 0
      %v4691 = vsel %vm1496, %v4575, 0
      %v4694 = vsel %vm1496, %v4576, 0
      %v4697 = vsel %vm1496, %v4577, 0
      %v4700 = vsel %vm1496, %v4578, 0
      %v4703 = vsel %vm1496, %v4579, 0
      %v4706 = vsel %vm1496, %v4580, 0
      %4708 = vmatpush.xpose.msra.mxu0 %v4634
      %4709 = vmatpush.xpose.msra.mxu0 %v4631
      %4710 = vmatpush.xpose.msra.mxu0 %v4628
      %4711 = vmatpush.xpose.msra.mxu0 %v4625
      %4712 = vmatpush.xpose.msra.mxu0 %v4622
      %4713 = vmatpush.xpose.msra.mxu0 %v4619
      %4714 = vmatpush.xpose.msra.mxu0 %v4616
      %4715 = vmatpush.xpose.msra.mxu0 %v4613
      %4716 = vmatpush.xpose.msra.mxu0 %v4610
      %4717 = vmatpush.xpose.msra.mxu0 %v4607
      %4718 = vmatpush.xpose.msra.mxu0 %v4604
      %4719 = vmatpush.xpose.msra.mxu0 %v4601
      %4720 = vmatpush.xpose.msra.mxu0 %v4598
      %4721 = vmatpush.xpose.msra.mxu0 %v4595
      %4722 = vmatpush.xpose.msra.mxu0 %v4592
      %4723 = vmatpush.xpose.msra.mxu0 %v4589
      %4724 = vmatmul.f32.gmra.mxu0 %v4586
      %v4725 = vpop.f32.mrf.mxu0
      %v4726 = vadd.f32 %v4583, %v4725
      %4727 = vdwg.mxu0
      %4728 = vmatpush.xpose.msra.mxu0 %v4682
      %4729 = vmatpush.xpose.msra.mxu0 %v4679
      %4730 = vmatpush.xpose.msra.mxu0 %v4676
      %4731 = vmatpush.xpose.msra.mxu0 %v4673
      %4732 = vmatpush.xpose.msra.mxu0 %v4670
      %4733 = vmatpush.xpose.msra.mxu0 %v4667
      %4734 = vmatpush.xpose.msra.mxu0 %v4664
      %4735 = vmatpush.xpose.msra.mxu0 %v4661
      %4736 = vmatpush.xpose.msra.mxu0 %v4658
      %4737 = vmatpush.xpose.msra.mxu0 %v4655
      %4738 = vmatpush.xpose.msra.mxu0 %v4652
      %4739 = vmatpush.xpose.msra.mxu0 %v4649
      %4740 = vmatpush.xpose.msra.mxu0 %v4646
      %4741 = vmatpush.xpose.msra.mxu0 %v4643
      %4742 = vmatpush.xpose.msra.mxu0 %v4640
      %4743 = vmatpush.xpose.msra.mxu0 %v4637
      %4744 = vmatmul.f32.gmra.mxu0 %v4586
      %v4745 = vpop.f32.mrf.mxu0
      %v4746 = vadd.f32 %v4583, %v4745
      %4747 = vdwg.mxu0
      %4748 = vmatpush.xpose.msra.mxu0 0.0
      %4749 = vmatpush.xpose.msra.mxu0 0.0
      %4750 = vmatpush.xpose.msra.mxu0 0.0
      %4751 = vmatpush.xpose.msra.mxu0 0.0
      %4752 = vmatpush.xpose.msra.mxu0 0.0
      %4753 = vmatpush.xpose.msra.mxu0 0.0
      %4754 = vmatpush.xpose.msra.mxu0 0.0
      %4755 = vmatpush.xpose.msra.mxu0 0.0
      %4756 = vmatpush.xpose.msra.mxu0 %v4706
      %4757 = vmatpush.xpose.msra.mxu0 %v4703
      %4758 = vmatpush.xpose.msra.mxu0 %v4700
      %4759 = vmatpush.xpose.msra.mxu0 %v4697
      %4760 = vmatpush.xpose.msra.mxu0 %v4694
      %4761 = vmatpush.xpose.msra.mxu0 %v4691
      %4762 = vmatpush.xpose.msra.mxu0 %v4688
      %4763 = vmatpush.xpose.msra.mxu0 %v4685
      %4764 = vmatmul.f32.gmra.mxu0 %v4586
      %v4765 = vpop.f32.mrf.mxu0
      %v4766 = vadd.f32 %v4583, %v4765
      %4767 = vdwg.mxu0
      %v4769 = vsel %vm2133, %v4766, 0
      %4771 = vmatpush.msra.mxu0 %v564
      %4772 = vmatpush.msra.mxu0 %v563
      %4773 = vmatpush.msra.mxu0 %v562
      %4774 = vmatpush.msra.mxu0 %v561
      %4775 = vmatpush.msra.mxu0 %v560
      %4776 = vmatpush.msra.mxu0 %v559
      %4777 = vmatpush.msra.mxu0 %v558
      %4778 = vmatpush.msra.mxu0 %v557
      %4779 = vmatpush.msra.mxu0 %v556
      %4780 = vmatpush.msra.mxu0 %v555
      %4781 = vmatpush.msra.mxu0 %v554
      %4782 = vmatpush.msra.mxu0 %v553
      %4783 = vmatpush.msra.mxu0 %v552
      %4784 = vmatpush.msra.mxu0 %v551
      %4785 = vmatpush.msra.mxu0 %v550
      %4786 = vmatpush.msra.mxu0 %v549
      %4787 = vmatmul.f32.gmra.mxu0 %v4726
      %v4788 = vpop.f32.mrf.mxu0
      %v4789 = vadd.f32 0.0, %v4788
      %4790 = vdwg.mxu0
      %4791 = vmatpush.msra.mxu0 %v580
      %4792 = vmatpush.msra.mxu0 %v579
      %4793 = vmatpush.msra.mxu0 %v578
      %4794 = vmatpush.msra.mxu0 %v577
      %4795 = vmatpush.msra.mxu0 %v576
      %4796 = vmatpush.msra.mxu0 %v575
      %4797 = vmatpush.msra.mxu0 %v574
      %4798 = vmatpush.msra.mxu0 %v573
      %4799 = vmatpush.msra.mxu0 %v572
      %4800 = vmatpush.msra.mxu0 %v571
      %4801 = vmatpush.msra.mxu0 %v570
      %4802 = vmatpush.msra.mxu0 %v569
      %4803 = vmatpush.msra.mxu0 %v568
      %4804 = vmatpush.msra.mxu0 %v567
      %4805 = vmatpush.msra.mxu0 %v566
      %4806 = vmatpush.msra.mxu0 %v565
      %4807 = vmatmul.f32.gmra.mxu0 %v4746
      %v4808 = vpop.f32.mrf.mxu0
      %v4809 = vadd.f32 %v4789, %v4808
      %4810 = vdwg.mxu0
      %4811 = vmatpush.msra.mxu0 0.0
      %4812 = vmatpush.msra.mxu0 0.0
      %4813 = vmatpush.msra.mxu0 0.0
      %4814 = vmatpush.msra.mxu0 0.0
      %4815 = vmatpush.msra.mxu0 0.0
      %4816 = vmatpush.msra.mxu0 0.0
      %4817 = vmatpush.msra.mxu0 0.0
      %4818 = vmatpush.msra.mxu0 0.0
      %4819 = vmatpush.msra.mxu0 %v588
      %4820 = vmatpush.msra.mxu0 %v587
      %4821 = vmatpush.msra.mxu0 %v586
      %4822 = vmatpush.msra.mxu0 %v585
      %4823 = vmatpush.msra.mxu0 %v584
      %4824 = vmatpush.msra.mxu0 %v583
      %4825 = vmatpush.msra.mxu0 %v582
      %4826 = vmatpush.msra.mxu0 %v581
      %4827 = vmatmul.f32.gmra.mxu0 %v4769
      %v4828 = vpop.f32.mrf.mxu0
      %v4829 = vadd.f32 %v4809, %v4828
      %4830 = vdwg.mxu0
      %v4831 = vsub.f32 1.0, %v4829
      %v4832 = vmul.f32 %v4831, 0.0625
      %v4834 = vsel %vm2317, %v4832, 0
      %4836 = vmatpush.msra.mxu0 0.0
      %4837 = vmatpush.msra.mxu0 0.0
      %4838 = vmatpush.msra.mxu0 0.0
      %4839 = vmatpush.msra.mxu0 0.0
      %4840 = vmatpush.msra.mxu0 0.0
      %4841 = vmatpush.msra.mxu0 0.0
      %4842 = vmatpush.msra.mxu0 0.0
      %4843 = vmatpush.msra.mxu0 0.0
      %4844 = vmatpush.msra.mxu0 0.0
      %4845 = vmatpush.msra.mxu0 0.0
      %4846 = vmatpush.msra.mxu0 0.0
      %4847 = vmatpush.msra.mxu0 0.0
      %4848 = vmatpush.msra.mxu0 0.0
      %4849 = vmatpush.msra.mxu0 0.0
      %4850 = vmatpush.msra.mxu0 %v345
      %4851 = vmatpush.msra.mxu0 %v342
      %4852 = vmatmul.f32.gmra.mxu0 %v4834
      %v4853 = vpop.f32.mrf.mxu0
      %v4854 = vadd.f32 0.0, %v4853
      %4855 = vdwg.mxu0
      %4856 = vmatpush.msra.mxu0 0.0
      %4857 = vmatpush.msra.mxu0 0.0
      %4858 = vmatpush.msra.mxu0 0.0
      %4859 = vmatpush.msra.mxu0 0.0
      %4860 = vmatpush.msra.mxu0 0.0
      %4861 = vmatpush.msra.mxu0 0.0
      %4862 = vmatpush.msra.mxu0 0.0
      %4863 = vmatpush.msra.mxu0 0.0
      %4864 = vmatpush.msra.mxu0 0.0
      %4865 = vmatpush.msra.mxu0 0.0
      %4866 = vmatpush.msra.mxu0 0.0
      %4867 = vmatpush.msra.mxu0 0.0
      %4868 = vmatpush.msra.mxu0 0.0
      %4869 = vmatpush.msra.mxu0 0.0
      %4870 = vmatpush.msra.mxu0 %v346
      %4871 = vmatpush.msra.mxu0 %v343
      %4872 = vmatmul.f32.gmra.mxu0 %v4834
      %v4873 = vpop.f32.mrf.mxu0
      %v4874 = vadd.f32 0.0, %v4873
      %4875 = vdwg.mxu0
      %4876 = vmatpush.msra.mxu0 0.0
      %4877 = vmatpush.msra.mxu0 0.0
      %4878 = vmatpush.msra.mxu0 0.0
      %4879 = vmatpush.msra.mxu0 0.0
      %4880 = vmatpush.msra.mxu0 0.0
      %4881 = vmatpush.msra.mxu0 0.0
      %4882 = vmatpush.msra.mxu0 0.0
      %4883 = vmatpush.msra.mxu0 0.0
      %4884 = vmatpush.msra.mxu0 0.0
      %4885 = vmatpush.msra.mxu0 0.0
      %4886 = vmatpush.msra.mxu0 0.0
      %4887 = vmatpush.msra.mxu0 0.0
      %4888 = vmatpush.msra.mxu0 0.0
      %4889 = vmatpush.msra.mxu0 0.0
      %4890 = vmatpush.msra.mxu0 %v347
      %4891 = vmatpush.msra.mxu0 %v344
      %4892 = vmatmul.f32.gmra.mxu0 %v4834
      %v4893 = vpop.f32.mrf.mxu0
      %v4894 = vadd.f32 0.0, %v4893
      %4895 = vdwg.mxu0
      %v4896 = vadd.f32 %v4726, %v4854
      %v4897 = vadd.f32 %v4746, %v4874
      %v4898 = vadd.f32 %v4766, %v4894
      %v4902 = vrot.slane %v4897, 7
      %v4903 = vrot.slane %v4898, 6
      %v4904 = vsel %vm766, %v4896, %v4902
      %v4905 = vsel %vm644, %v4904, %v4903
      %v4907 = vlaneseq
      %vm4908 = vcmp.ge.s32.totalorder %v4907, 0
      %vm4909 = vcmp.lt.s32.totalorder %v4907, 320
      %vm4910 = vmand %vm4908, %vm4909
      %4911 = vst.msk [vmem:[%s255] sm:$0x7] %vm4910, %v4905
      %p4912 = scmp.lt.s32.totalorder %s18, 1
      %s4913 = scalar_select %p4912, %s18, 1
      %s4914 = smul.addr %s4913, 3
      %s4915 = scalar_lea.vmem %s5, %s4914
      %p4916 = scmp.lt.s32.totalorder %s18, 1
      %s4917 = scalar_select %p4916, %s18, 1
      %s4918 = scalar_lea.vmem %s6, %s4917
      // Predicated region
      $region41: #{alphanet_forward.1} parent=39 // pred_check
        %p4919 = pneg %p146
      $region42: #{alphanet_forward.1} parent=39 // pred_check_branch
        %4921 = sbr.rel (%p4919) target = $region44
      $region43: #{alphanet_forward.1} parent=39 // pred_region
        _
      $region44: #{alphanet_forward.1} parent=39 // pred_fallthru
        _
      // Predicated region
      $region45: #{alphanet_forward.1} parent=39 // pred_check
        %p4922 = pneg %p172
      $region46: #{alphanet_forward.1} parent=39 // pred_check_branch
        %4924 = sbr.rel (%p4922) target = $region48
      $region47: #{alphanet_forward.1} parent=39 // pred_region
        _
      $region48: #{alphanet_forward.1} parent=39 // pred_fallthru
        _
    $region40: #{alphanet_forward.1} parent=5 // pred_fallthru
      _
    %p4925 = scmp.le.s32.totalorder 2, %s13
    // Predicated region
    $region49: #{alphanet_forward.1} parent=5 // pred_check
      %p4926 = pneg %p4925
    $region50: #{alphanet_forward.1} parent=5 // pred_check_branch
      %4928 = sbr.rel (%p4926) target = $region52
    $region51: #{alphanet_forward.1} parent=5 // pred_region
      %s4929 = ssub.s32 %s13, 2
      // Predicated region
      $region53: #{alphanet_forward.1} parent=51 // pred_check
        %p4930 = pneg %p152
      $region54: #{alphanet_forward.1} parent=51 // pred_check_branch
        %4932 = sbr.rel (%p4930) target = $region56
      $region55: #{alphanet_forward.1} parent=51 // pred_region
        %p4933 = scmp.lt.s32.totalorder %s19, 1
        %s4934 = scalar_select %p4933, %s19, 1
        %s4935 = smul.addr %s4934, 3
        %s4936 = scalar_lea.vmem %s5, %s4935
      $region56: #{alphanet_forward.1} parent=51 // pred_fallthru
        _
      // Predicated region
      $region57: #{alphanet_forward.1} parent=51 // pred_check
        %p4937 = pneg %p178
      $region58: #{alphanet_forward.1} parent=51 // pred_check_branch
        %4939 = sbr.rel (%p4937) target = $region60
      $region59: #{alphanet_forward.1} parent=51 // pred_region
        %p4940 = scmp.lt.s32.totalorder %s19, 1
        %s4941 = scalar_select %p4940, %s19, 1
        %s4942 = scalar_lea.vmem %s6, %s4941
      $region60: #{alphanet_forward.1} parent=51 // pred_fallthru
        _
    $region52: #{alphanet_forward.1} parent=5 // pred_fallthru
      _
  $region6: #{alphanet_forward.1} parent=0 // loop_footer
    %s17 = sadd.s32 1, %s13
  $region7: #{alphanet_forward.1} parent=0 // loop_footer_branch
    %12 = sbr.rel target = $region3
  $region8: #{alphanet_forward.1} parent=0 // loop_exit
    _

</llo_original>
